<compile_context>
chip_gen: v6e
topology: v6e:2x2x1
jax: 0.10.0
libtpu: 0.0.40
codegen_flags: <defaults>
</compile_context>

<pallas_src>
import jax
import jax.numpy as jnp
from jax.experimental import pallas as pl
from jax.experimental.pallas import tpu as pltpu  # noqa: F401  (TPU backend)

F32 = jnp.float32
BF16 = jnp.bfloat16

CFG = dict(
    vocab_size=100,
    hidden=32,            # config.hidden_size
    num_heads=2,
    head_dim=16,
    intermediate=64,
    num_layers=2,
    max_pos=32,
    seq_len=16,
    filter_sizes=(2, 3, 4),
    filter_num=128,
    mid_size=256,
    num_classes=8,        # args.num_classes
    batch=2,
)

H = CFG["hidden"]; NH = CFG["num_heads"]; DH = CFG["head_dim"]
I = CFG["intermediate"]; L = CFG["num_layers"]
S = CFG["seq_len"]; B = CFG["batch"]; BS = B * S
V = CFG["vocab_size"]; VP = ((V + 15) // 16) * 16          # vocab rows, 16-aligned
FS = CFG["filter_sizes"]; FN = CFG["filter_num"]; KMAX = max(FS)
NF = len(FS) * FN                                           # 384
MID = CFG["mid_size"]; NC = CFG["num_classes"]
MISC_LANES = NF                                             # 384 lanes

assert S & (S - 1) == 0, "seq_len must be a power of two (shift-based batch ids)"
LOG2S = S.bit_length() - 1


# ----------------------------- packed layouts -------------------------------

def _build_misc_layout():
    rows, r = {}, 0

    def add(name, n=1):
        nonlocal r
        rows[name] = r
        r += n

    add("emb_ln_g"); add("emb_ln_b"); add("pos_type", S)
    for l in range(L):
        for nm in ("bqkv", "bo", "ln1g", "ln1b", "b1", "b2", "ln2g", "ln2b"):
            add(f"{nm}{l}")
    add("conv_b"); add("cls_b1"); add("bn_scale"); add("bn_shift"); add("cls_b2")
    return rows, r


MISC_ROWS, MISC_NROWS = _build_misc_layout()


def _build_w128_layout():
    rows, r = {}, 0

    def add(name, n):
        nonlocal r
        rows[name] = r
        r += ((n + 15) // 16) * 16          # 16-row (bf16 sublane tile) aligned

    add("word_emb", V)
    for l in range(L):
        add(f"wqkv{l}", H); add(f"wo{l}", H); add(f"w1{l}", H); add(f"w2{l}", I)
    add("cls_w2", MID)
    return rows, r


W128_ROWS, W128_NROWS = _build_w128_layout()

W384_CONV_ROWS = KMAX * H                    # 4 shift slabs of (H, 384)
W384_NROWS = W384_CONV_ROWS + NF             # + cls_w1 (384 rows, lanes 0:256)


# ------------------------- single fused Pallas kernel -----------------------

def _fused_forward_kernel(ids_ref, mask_ref, misc_ref, w128_ref, w384_ref, o_ref):
    ln_eps = jnp.float32(1e-12)
    scale = jnp.float32(1.0 / (DH ** 0.5))

    def misc_row(name, width):
        r = MISC_ROWS[name]
        return misc_ref[r:r + 1, 0:width]                      # (1, width) f32

    def layer_norm(x, g, b):
        mu = jnp.mean(x, axis=-1, keepdims=True)
        var = jnp.mean(jnp.square(x - mu), axis=-1, keepdims=True)
        return (x - mu) * jax.lax.rsqrt(var + ln_eps) * g + b

    # ---- embeddings: token gather as one-hot matmul (MXU), + pos/type, LN ---
    ids = ids_ref[...]                                         # (BS, 1) int32
    eq = jax.lax.broadcasted_iota(jnp.int32, (BS, VP), 1) == ids
    onehot = jnp.where(eq, 1.0, 0.0).astype(BF16)              # (BS, VP)
    r = W128_ROWS["word_emb"]
    wemb = w128_ref[r:r + VP, 0:H]                             # (VP, H) bf16, pad rows zero
    emb = jnp.dot(onehot, wemb, preferred_element_type=jnp.float32)   # (BS, H)
    rp = MISC_ROWS["pos_type"]
    pos_type = misc_ref[rp:rp + S, 0:H]                        # (S, H) f32
    emb = emb + jnp.concatenate([pos_type] * B, axis=0)
    h = layer_norm(emb, misc_row("emb_ln_g", H), misc_row("emb_ln_b", H))

    # ---- block-diagonal attention bias, shared by all layers/heads: (BS,BS) -
    key_keep = mask_ref[...] > 0.5                             # (1, BS) bool
    bq = jax.lax.broadcasted_iota(jnp.int32, (BS, BS), 0) >> LOG2S
    bk = jax.lax.broadcasted_iota(jnp.int32, (BS, BS), 1) >> LOG2S
    keep = jnp.logical_and(bq == bk, key_keep)
    mbias = jnp.where(keep, jnp.float32(0.0), jnp.float32(-1e9))

    # ---- transformer encoder layers (statically unrolled) -------------------
    for l in range(L):
        r = W128_ROWS[f"wqkv{l}"]
        wqkv = w128_ref[r:r + H, :]                            # (H,128) bf16, 96:128 zero
        r = W128_ROWS[f"wo{l}"]
        wo = w128_ref[r:r + H, 0:H]                            # (H, H) bf16
        r = W128_ROWS[f"w1{l}"]
        w1 = w128_ref[r:r + H, 0:I]                            # (H, I) bf16
        r = W128_ROWS[f"w2{l}"]
        w2 = w128_ref[r:r + I, 0:H]                            # (I, H) bf16

        # fused, lane-padded Q|K|V projection: (BS,H) @ (H,128)
        qkv = jnp.dot(h.astype(BF16), wqkv,
                      preferred_element_type=jnp.float32) + misc_row(f"bqkv{l}", 128)

        attn = None
        for hh in range(NH):                                   # static, NH = 2
            q = qkv[:, hh * DH:(hh + 1) * DH].astype(BF16)             # (BS, dh)
            k = qkv[:, H + hh * DH:H + (hh + 1) * DH].astype(BF16)
            v = qkv[:, 2 * H + hh * DH:2 * H + (hh + 1) * DH].astype(BF16)
            s = jax.lax.dot_general(q, k, (((1,), (1,)), ((), ())),
                                    preferred_element_type=jnp.float32)  # (BS,BS)
            s = s * scale + mbias
            m = jnp.max(s, axis=-1, keepdims=True)
            e = jnp.exp(s - m)
            p = e * pl.reciprocal(jnp.sum(e, axis=-1, keepdims=True), approx=True)
            ctx = jnp.dot(p.astype(BF16), v,
                          preferred_element_type=jnp.float32)            # (BS, dh)
            part = jnp.dot(ctx.astype(BF16), wo[hh * DH:(hh + 1) * DH, :],
                           preferred_element_type=jnp.float32)           # (BS, H)
            attn = part if attn is None else attn + part
        attn = attn + misc_row(f"bo{l}", H)

        h1 = layer_norm(attn + h, misc_row(f"ln1g{l}", H), misc_row(f"ln1b{l}", H))
        f = jnp.dot(h1.astype(BF16), w1,
                    preferred_element_type=jnp.float32) + misc_row(f"b1{l}", I)
        # TODO(synk): HF BERT uses exact (erf) GELU; tanh approximation kept here.
        f = jax.nn.gelu(f)
        f = jnp.dot(f.astype(BF16), w2,
                    preferred_element_type=jnp.float32) + misc_row(f"b2{l}", H)
        h = layer_norm(f + h1, misc_row(f"ln2g{l}", H), misc_row(f"ln2b{l}", H))

    # ---- fused TextCNN: 4 per-shift matmuls into the 3*128-lane filter domain
    # Conv2d(1, FN, (k, H)) == sum_j hidden[t+j, :] @ W_fi[j*H:(j+1)*H, :]; the
    # shift slab W_j concatenates that block over the 3 filters (zero block
    # when j >= k_fi), so one (BS,H)@(H,384) matmul per shift covers all filters.
    h_bf = h.astype(BF16)
    acc = None
    for j in range(KMAX):                                      # static, KMAX = 4
        wj = w384_ref[j * H:(j + 1) * H, :]                    # (H, 384) bf16
        zj = jnp.dot(h_bf, wj, preferred_element_type=jnp.float32)      # (BS, 384)
        if j == 0:
            acc = zj
        else:
            acc = acc + jnp.concatenate(
                [zj[j:, :], jnp.zeros((j, NF), jnp.float32)], axis=0)
    y = jnp.maximum(acc + misc_row("conv_b", NF), 0.0)         # ReLU, (BS, 384)

    pooled = []
    for b in range(B):                                         # static, B = 2
        cols = []
        for fi, ksz in enumerate(FS):
            t = S - ksz + 1
            blk = y[b * S:b * S + t, fi * FN:(fi + 1) * FN]    # valid conv rows only
            cols.append(jnp.max(blk, axis=0, keepdims=True))   # max_pool1d
        pooled.append(jnp.concatenate(cols, axis=1))           # (1, 384)
    feat = jnp.concatenate(pooled, axis=0)                     # (B, 384)

    # ---- classifier: Linear -> BatchNorm1d(eval, folded) -> ReLU -> Linear ->
    # sigmoid
    wc1 = w384_ref[W384_CONV_ROWS:W384_CONV_ROWS + NF, 0:MID]  # (384, 256) bf16
    hc = jnp.dot(feat.astype(BF16), wc1,
                 preferred_element_type=jnp.float32) + misc_row("cls_b1", MID)
    hc = hc * misc_row("bn_scale", MID) + misc_row("bn_shift", MID)
    hc = jnp.maximum(hc, 0.0)
    r = W128_ROWS["cls_w2"]
    wc2 = w128_ref[r:r + MID, 0:NC]                            # (256, 8) bf16
    logits = jnp.dot(hc.astype(BF16), wc2,
                     preferred_element_type=jnp.float32) + misc_row("cls_b2", NC)
    o_ref[...] = jax.nn.sigmoid(logits)


# ------------------------ deterministic parameter init ----------------------

def init_params(key):
    std = 0.02
    keys = iter(jax.random.split(key, 64))

    def nrm(shape):
        return std * jax.random.normal(next(keys), shape, F32)

    # TODO(synk): BertModel.from_pretrained is a checkpoint load; a small
    # deterministic synthetic BERT encoder (L=2, H=32) is used instead.

    # ---- packed f32 misc block: biases / LayerNorm / BN fold / pos+type ----
    misc = jnp.zeros((MISC_NROWS, MISC_LANES), F32)

    def put_misc(block, name, val):
        r = MISC_ROWS[name]
        return block.at[r:r + val.shape[0], 0:val.shape[1]].set(val)

    misc = put_misc(misc, "emb_ln_g", jnp.ones((1, H), F32))
    misc = put_misc(misc, "emb_ln_b", jnp.zeros((1, H), F32))
    pos_emb = nrm((CFG["max_pos"], H))
    type_emb = nrm((2, H))
    misc = put_misc(misc, "pos_type", pos_emb[:S] + type_emb[0:1])
    for l in range(L):
        misc = put_misc(misc, f"bqkv{l}", jnp.zeros((1, 3 * H), F32))
        misc = put_misc(misc, f"bo{l}", jnp.zeros((1, H), F32))
        misc = put_misc(misc, f"ln1g{l}", jnp.ones((1, H), F32))
        misc = put_misc(misc, f"ln1b{l}", jnp.zeros((1, H), F32))
        misc = put_misc(misc, f"b1{l}", jnp.zeros((1, I), F32))
        misc = put_misc(misc, f"b2{l}", jnp.zeros((1, H), F32))
        misc = put_misc(misc, f"ln2g{l}", jnp.ones((1, H), F32))
        misc = put_misc(misc, f"ln2b{l}", jnp.zeros((1, H), F32))
    misc = put_misc(misc, "conv_b", nrm((1, NF)))
    misc = put_misc(misc, "cls_b1", nrm((1, MID)))
    # BatchNorm1d (eval) folded once at init time into a scale/shift.
    bn_gamma = jnp.ones((1, MID), F32)
    bn_beta = jnp.zeros((1, MID), F32)
    bn_mean = nrm((1, MID))
    bn_var = jnp.ones((1, MID), F32)
    bn_scale = bn_gamma / jnp.sqrt(bn_var + 1e-5)
    bn_shift = bn_beta - bn_mean * bn_scale
    misc = put_misc(misc, "bn_scale", bn_scale)
    misc = put_misc(misc, "bn_shift", bn_shift)
    misc = put_misc(misc, "cls_b2", nrm((1, NC)))

    # ---- packed bf16 (W128_NROWS, 128) weight block -------------------------
    w128 = jnp.zeros((W128_NROWS, 128), F32)

    def put_w128(block, name, val):
        r = W128_ROWS[name]
        return block.at[r:r + val.shape[0], 0:val.shape[1]].set(val)

    w128 = put_w128(w128, "word_emb", nrm((V, H)))
    for l in range(L):
        wq, wk, wv = nrm((H, H)), nrm((H, H)), nrm((H, H))
        w128 = put_w128(w128, f"wqkv{l}", jnp.concatenate([wq, wk, wv], axis=1))
        w128 = put_w128(w128, f"wo{l}", nrm((H, H)))
        w128 = put_w128(w128, f"w1{l}", nrm((H, I)))
        w128 = put_w128(w128, f"w2{l}", nrm((I, H)))
    w128 = put_w128(w128, "cls_w2", nrm((MID, NC)))

    # ---- packed bf16 (512, 384) block: per-shift TextCNN slabs + cls_w1 -----
    # Conv2d(1, FN, (k, H)) weight reshaped to (k*H, FN); shift slab j holds,
    # per filter fi, rows j*H:(j+1)*H of that filter (zeros when j >= k_fi).
    w384 = jnp.zeros((W384_NROWS, MISC_LANES), F32)
    for fi, ksz in enumerate(FS):
        cw = nrm((ksz * H, FN))
        for j in range(ksz):
            w384 = w384.at[j * H:(j + 1) * H, fi * FN:(fi + 1) * FN].set(
                cw[j * H:(j + 1) * H, :])
    w384 = w384.at[W384_CONV_ROWS:W384_CONV_ROWS + NF, 0:MID].set(nrm((NF, MID)))

    return {"misc": misc, "w128": w128.astype(BF16), "w384": w384.astype(BF16)}


# --------------------------------- forward ----------------------------------

@jax.jit
def model_forward(params, input_ids, attention_mask):
    ids = input_ids.reshape(BS, 1).astype(jnp.int32)           # row = b*S + s
    mask = attention_mask.reshape(1, BS).astype(F32)
    # One pallas_call, grid=(): all 5 operands + activations stay resident in
    # VMEM (<1 MiB total).  Single TensorCore by design at B=2 (splitting the
    # v7x megacore would be pure overhead at this size).
    return pl.pallas_call(
        _fused_forward_kernel,
        out_shape=jax.ShapeDtypeStruct((B, NC), F32),
    )(ids, mask, params["misc"], params["w128"], params["w384"])


if __name__ == "__main__":
    key = jax.random.PRNGKey(0)
    pkey, ikey = jax.random.split(key)
    params = init_params(pkey)

    input_ids = jax.random.randint(ikey, (B, S), 0, V, dtype=jnp.int32)
    attention_mask = jnp.ones((B, S), dtype=jnp.int32).at[:, S - 3:].set(0)

    out = jax.block_until_ready(model_forward(params, input_ids, attention_mask))
    assert out.shape == (B, NC)
    assert bool(jnp.all(jnp.isfinite(out)))
    assert bool(jnp.all((out >= 0.0) & (out <= 1.0)))
    print("KERNEL_OK")
</pallas_src>

<mosaic_0001>
module attributes {stable_mosaic.version = 11 : i64} {
  func.func @_fused_forward_kernel(%arg0: memref<32x1xi32, #tpu.memory_space<vmem>>, %arg1: memref<1x32xf32, #tpu.memory_space<vmem>>, %arg2: memref<39x384xf32, #tpu.memory_space<vmem>>, %arg3: memref<688x128xbf16, #tpu.memory_space<vmem>>, %arg4: memref<512x384xbf16, #tpu.memory_space<vmem>>, %arg5: memref<2x8xf32, #tpu.memory_space<vmem>>) attributes {dimension_semantics = [], scalar_prefetch = 0 : i64, scratch_operands = 0 : i64, tpu.core_type = #tpu.core_type<tc>} {
    %c0 = arith.constant 0 : index
    %c0_0 = arith.constant 0 : index
    %0 = vector.load %arg0[%c0, %c0_0] : memref<32x1xi32, #tpu.memory_space<vmem>>, vector<32x1xi32>
    %1 = tpu.iota {dimensions = array<i32: 1>} : vector<32x112xi32>
    %2 = vector.broadcast %0 : vector<32x1xi32> to vector<32x112xi32>
    %3 = arith.cmpi eq, %1, %2 : vector<32x112xi32>
    %cst = arith.constant 1.000000e+00 : f32
    %cst_1 = arith.constant 0.000000e+00 : f32
    %4 = vector.broadcast %cst : f32 to vector<32x112xf32>
    %5 = vector.broadcast %cst_1 : f32 to vector<32x112xf32>
    %6 = arith.select %3, %4, %5 : vector<32x112xi1>, vector<32x112xf32>
    %7 = arith.truncf %6 : vector<32x112xf32> to vector<32x112xbf16>
    %c0_2 = arith.constant 0 : index
    %c0_3 = arith.constant 0 : index
    %8 = vector.load %arg3[%c0_2, %c0_3] : memref<688x128xbf16, #tpu.memory_space<vmem>>, vector<112x32xbf16>
    %cst_4 = arith.constant dense<0.000000e+00> : vector<32x32xf32>
    %9 = tpu.matmul %7, %8, %cst_4 {dimension_numbers = #tpu.dot_dimension_numbers<[1], [0], [0], [1], [0, 0, 1, 1], [], []>} : vector<32x112xbf16>, vector<112x32xbf16>, vector<32x32xf32> -> vector<32x32xf32>
    %c2 = arith.constant 2 : index
    %c0_5 = arith.constant 0 : index
    %10 = vector.load %arg2[%c2, %c0_5] : memref<39x384xf32, #tpu.memory_space<vmem>>, vector<16x32xf32>
    %11 = tpu.concatenate %10, %10 in 0 : vector<16x32xf32>, vector<16x32xf32> -> vector<32x32xf32>
    %12 = arith.addf %9, %11 : vector<32x32xf32>
    %c0_6 = arith.constant 0 : index
    %c0_7 = arith.constant 0 : index
    %13 = vector.load %arg2[%c0_6, %c0_7] : memref<39x384xf32, #tpu.memory_space<vmem>>, vector<1x32xf32>
    %c1 = arith.constant 1 : index
    %c0_8 = arith.constant 0 : index
    %14 = vector.load %arg2[%c1, %c0_8] : memref<39x384xf32, #tpu.memory_space<vmem>>, vector<1x32xf32>
    %cst_9 = arith.constant dense<0.000000e+00> : vector<32xf32>
    %15 = vector.multi_reduction <add>, %12, %cst_9 [1] : vector<32x32xf32> to vector<32xf32>
    %16 = vector.shape_cast %15 : vector<32xf32> to vector<32x1xf32>
    %cst_10 = arith.constant 3.200000e+01 : f32
    %17 = vector.broadcast %cst_10 : f32 to vector<32x1xf32>
    %18 = arith.divf %16, %17 : vector<32x1xf32>
    %19 = vector.broadcast %18 : vector<32x1xf32> to vector<32x32xf32>
    %20 = arith.subf %12, %19 : vector<32x32xf32>
    %21 = arith.mulf %20, %20 : vector<32x32xf32>
    %cst_11 = arith.constant dense<0.000000e+00> : vector<32xf32>
    %22 = vector.multi_reduction <add>, %21, %cst_11 [1] : vector<32x32xf32> to vector<32xf32>
    %23 = vector.shape_cast %22 : vector<32xf32> to vector<32x1xf32>
    %cst_12 = arith.constant 3.200000e+01 : f32
    %24 = vector.broadcast %cst_12 : f32 to vector<32x1xf32>
    %25 = arith.divf %23, %24 : vector<32x1xf32>
    %26 = vector.broadcast %18 : vector<32x1xf32> to vector<32x32xf32>
    %27 = arith.subf %12, %26 : vector<32x32xf32>
    %cst_13 = arith.constant 9.99999996E-13 : f32
    %28 = vector.broadcast %cst_13 : f32 to vector<32x1xf32>
    %29 = arith.addf %25, %28 : vector<32x1xf32>
    %30 = math.rsqrt %29 : vector<32x1xf32>
    %31 = vector.broadcast %30 : vector<32x1xf32> to vector<32x32xf32>
    %32 = arith.mulf %27, %31 : vector<32x32xf32>
    %33 = vector.broadcast %13 : vector<1x32xf32> to vector<32x32xf32>
    %34 = arith.mulf %32, %33 : vector<32x32xf32>
    %35 = vector.broadcast %14 : vector<1x32xf32> to vector<32x32xf32>
    %36 = arith.addf %34, %35 : vector<32x32xf32>
    %c0_14 = arith.constant 0 : index
    %c0_15 = arith.constant 0 : index
    %37 = vector.load %arg1[%c0_14, %c0_15] : memref<1x32xf32, #tpu.memory_space<vmem>>, vector<1x32xf32>
    %cst_16 = arith.constant 5.000000e-01 : f32
    %38 = vector.broadcast %cst_16 : f32 to vector<1x32xf32>
    %39 = arith.cmpf ogt, %37, %38 : vector<1x32xf32>
    %40 = tpu.iota {dimensions = array<i32: 0>} : vector<32x32xi32>
    %c4_i32 = arith.constant 4 : i32
    %41 = vector.broadcast %c4_i32 : i32 to vector<32x32xi32>
    %42 = arith.shrsi %40, %41 : vector<32x32xi32>
    %43 = tpu.iota {dimensions = array<i32: 1>} : vector<32x32xi32>
    %c4_i32_17 = arith.constant 4 : i32
    %44 = vector.broadcast %c4_i32_17 : i32 to vector<32x32xi32>
    %45 = arith.shrsi %43, %44 : vector<32x32xi32>
    %46 = arith.cmpi eq, %42, %45 : vector<32x32xi32>
    %47 = vector.broadcast %39 : vector<1x32xi1> to vector<32x32xi1>
    %48 = arith.andi %46, %47 : vector<32x32xi1>
    %cst_18 = arith.constant 0.000000e+00 : f32
    %cst_19 = arith.constant -1.000000e+09 : f32
    %49 = vector.broadcast %cst_18 : f32 to vector<32x32xf32>
    %50 = vector.broadcast %cst_19 : f32 to vector<32x32xf32>
    %51 = arith.select %48, %49, %50 : vector<32x32xi1>, vector<32x32xf32>
    %c112 = arith.constant 112 : index
    %c0_20 = arith.constant 0 : index
    %52 = vector.load %arg3[%c112, %c0_20] : memref<688x128xbf16, #tpu.memory_space<vmem>>, vector<32x128xbf16>
    %c144 = arith.constant 144 : index
    %c0_21 = arith.constant 0 : index
    %53 = vector.load %arg3[%c144, %c0_21] : memref<688x128xbf16, #tpu.memory_space<vmem>>, vector<32x32xbf16>
    %c176 = arith.constant 176 : index
    %c0_22 = arith.constant 0 : index
    %54 = vector.load %arg3[%c176, %c0_22] : memref<688x128xbf16, #tpu.memory_space<vmem>>, vector<32x64xbf16>
    %c208 = arith.constant 208 : index
    %c0_23 = arith.constant 0 : index
    %55 = vector.load %arg3[%c208, %c0_23] : memref<688x128xbf16, #tpu.memory_space<vmem>>, vector<64x32xbf16>
    %56 = arith.truncf %36 : vector<32x32xf32> to vector<32x32xbf16>
    %cst_24 = arith.constant dense<0.000000e+00> : vector<32x128xf32>
    %57 = tpu.matmul %56, %52, %cst_24 {dimension_numbers = #tpu.dot_dimension_numbers<[1], [0], [0], [1], [0, 0, 1, 1], [], []>} : vector<32x32xbf16>, vector<32x128xbf16>, vector<32x128xf32> -> vector<32x128xf32>
    %c18 = arith.constant 18 : index
    %c0_25 = arith.constant 0 : index
    %58 = vector.load %arg2[%c18, %c0_25] : memref<39x384xf32, #tpu.memory_space<vmem>>, vector<1x128xf32>
    %59 = vector.broadcast %58 : vector<1x128xf32> to vector<32x128xf32>
    %60 = arith.addf %57, %59 : vector<32x128xf32>
    %61 = vector.extract_strided_slice %60 {offsets = [0, 0], sizes = [32, 16], strides = [1, 1]} : vector<32x128xf32> to vector<32x16xf32>
    %62 = arith.truncf %61 : vector<32x16xf32> to vector<32x16xbf16>
    %63 = vector.extract_strided_slice %60 {offsets = [0, 32], sizes = [32, 16], strides = [1, 1]} : vector<32x128xf32> to vector<32x16xf32>
    %64 = arith.truncf %63 : vector<32x16xf32> to vector<32x16xbf16>
    %65 = vector.extract_strided_slice %60 {offsets = [0, 64], sizes = [32, 16], strides = [1, 1]} : vector<32x128xf32> to vector<32x16xf32>
    %66 = arith.truncf %65 : vector<32x16xf32> to vector<32x16xbf16>
    %cst_26 = arith.constant dense<0.000000e+00> : vector<32x32xf32>
    %67 = tpu.matmul %62, %64, %cst_26 {dimension_numbers = #tpu.dot_dimension_numbers<[1], [1], [0], [0], [0, 0, 1, 0], [], []>} : vector<32x16xbf16>, vector<32x16xbf16>, vector<32x32xf32> -> vector<32x32xf32>
    %cst_27 = arith.constant 2.500000e-01 : f32
    %68 = vector.broadcast %cst_27 : f32 to vector<32x32xf32>
    %69 = arith.mulf %67, %68 : vector<32x32xf32>
    %70 = arith.addf %69, %51 : vector<32x32xf32>
    %cst_28 = arith.constant dense<0xFF800000> : vector<32xf32>
    %71 = vector.multi_reduction <maximumf>, %70, %cst_28 [1] : vector<32x32xf32> to vector<32xf32>
    %72 = vector.shape_cast %71 : vector<32xf32> to vector<32x1xf32>
    %73 = vector.broadcast %72 : vector<32x1xf32> to vector<32x32xf32>
    %74 = arith.subf %70, %73 : vector<32x32xf32>
    %75 = math.exp %74 : vector<32x32xf32>
    %cst_29 = arith.constant dense<0.000000e+00> : vector<32xf32>
    %76 = vector.multi_reduction <add>, %75, %cst_29 [1] : vector<32x32xf32> to vector<32xf32>
    %77 = vector.shape_cast %76 : vector<32xf32> to vector<32x1xf32>
    %78 = tpu.reciprocal %77 {approx = true} : vector<32x1xf32> -> vector<32x1xf32>
    %79 = vector.broadcast %78 : vector<32x1xf32> to vector<32x32xf32>
    %80 = arith.mulf %75, %79 : vector<32x32xf32>
    %81 = arith.truncf %80 : vector<32x32xf32> to vector<32x32xbf16>
    %cst_30 = arith.constant dense<0.000000e+00> : vector<32x16xf32>
    %82 = tpu.matmul %81, %66, %cst_30 {dimension_numbers = #tpu.dot_dimension_numbers<[1], [0], [0], [1], [0, 0, 1, 1], [], []>} : vector<32x32xbf16>, vector<32x16xbf16>, vector<32x16xf32> -> vector<32x16xf32>
    %83 = arith.truncf %82 : vector<32x16xf32> to vector<32x16xbf16>
    %84 = vector.extract_strided_slice %53 {offsets = [0, 0], sizes = [16, 32], strides = [1, 1]} : vector<32x32xbf16> to vector<16x32xbf16>
    %cst_31 = arith.constant dense<0.000000e+00> : vector<32x32xf32>
    %85 = tpu.matmul %83, %84, %cst_31 {dimension_numbers = #tpu.dot_dimension_numbers<[1], [0], [0], [1], [0, 0, 1, 1], [], []>} : vector<32x16xbf16>, vector<16x32xbf16>, vector<32x32xf32> -> vector<32x32xf32>
    %86 = vector.extract_strided_slice %60 {offsets = [0, 16], sizes = [32, 16], strides = [1, 1]} : vector<32x128xf32> to vector<32x16xf32>
    %87 = arith.truncf %86 : vector<32x16xf32> to vector<32x16xbf16>
    %88 = vector.extract_strided_slice %60 {offsets = [0, 48], sizes = [32, 16], strides = [1, 1]} : vector<32x128xf32> to vector<32x16xf32>
    %89 = arith.truncf %88 : vector<32x16xf32> to vector<32x16xbf16>
    %90 = vector.extract_strided_slice %60 {offsets = [0, 80], sizes = [32, 16], strides = [1, 1]} : vector<32x128xf32> to vector<32x16xf32>
    %91 = arith.truncf %90 : vector<32x16xf32> to vector<32x16xbf16>
    %cst_32 = arith.constant dense<0.000000e+00> : vector<32x32xf32>
    %92 = tpu.matmul %87, %89, %cst_32 {dimension_numbers = #tpu.dot_dimension_numbers<[1], [1], [0], [0], [0, 0, 1, 0], [], []>} : vector<32x16xbf16>, vector<32x16xbf16>, vector<32x32xf32> -> vector<32x32xf32>
    %cst_33 = arith.constant 2.500000e-01 : f32
    %93 = vector.broadcast %cst_33 : f32 to vector<32x32xf32>
    %94 = arith.mulf %92, %93 : vector<32x32xf32>
    %95 = arith.addf %94, %51 : vector<32x32xf32>
    %cst_34 = arith.constant dense<0xFF800000> : vector<32xf32>
    %96 = vector.multi_reduction <maximumf>, %95, %cst_34 [1] : vector<32x32xf32> to vector<32xf32>
    %97 = vector.shape_cast %96 : vector<32xf32> to vector<32x1xf32>
    %98 = vector.broadcast %97 : vector<32x1xf32> to vector<32x32xf32>
    %99 = arith.subf %95, %98 : vector<32x32xf32>
    %100 = math.exp %99 : vector<32x32xf32>
    %cst_35 = arith.constant dense<0.000000e+00> : vector<32xf32>
    %101 = vector.multi_reduction <add>, %100, %cst_35 [1] : vector<32x32xf32> to vector<32xf32>
    %102 = vector.shape_cast %101 : vector<32xf32> to vector<32x1xf32>
    %103 = tpu.reciprocal %102 {approx = true} : vector<32x1xf32> -> vector<32x1xf32>
    %104 = vector.broadcast %103 : vector<32x1xf32> to vector<32x32xf32>
    %105 = arith.mulf %100, %104 : vector<32x32xf32>
    %106 = arith.truncf %105 : vector<32x32xf32> to vector<32x32xbf16>
    %cst_36 = arith.constant dense<0.000000e+00> : vector<32x16xf32>
    %107 = tpu.matmul %106, %91, %cst_36 {dimension_numbers = #tpu.dot_dimension_numbers<[1], [0], [0], [1], [0, 0, 1, 1], [], []>} : vector<32x32xbf16>, vector<32x16xbf16>, vector<32x16xf32> -> vector<32x16xf32>
    %108 = arith.truncf %107 : vector<32x16xf32> to vector<32x16xbf16>
    %109 = vector.extract_strided_slice %53 {offsets = [16, 0], sizes = [16, 32], strides = [1, 1]} : vector<32x32xbf16> to vector<16x32xbf16>
    %cst_37 = arith.constant dense<0.000000e+00> : vector<32x32xf32>
    %110 = tpu.matmul %108, %109, %cst_37 {dimension_numbers = #tpu.dot_dimension_numbers<[1], [0], [0], [1], [0, 0, 1, 1], [], []>} : vector<32x16xbf16>, vector<16x32xbf16>, vector<32x32xf32> -> vector<32x32xf32>
    %111 = arith.addf %85, %110 : vector<32x32xf32>
    %c19 = arith.constant 19 : index
    %c0_38 = arith.constant 0 : index
    %112 = vector.load %arg2[%c19, %c0_38] : memref<39x384xf32, #tpu.memory_space<vmem>>, vector<1x32xf32>
    %113 = vector.broadcast %112 : vector<1x32xf32> to vector<32x32xf32>
    %114 = arith.addf %111, %113 : vector<32x32xf32>
    %115 = arith.addf %114, %36 : vector<32x32xf32>
    %c20 = arith.constant 20 : index
    %c0_39 = arith.constant 0 : index
    %116 = vector.load %arg2[%c20, %c0_39] : memref<39x384xf32, #tpu.memory_space<vmem>>, vector<1x32xf32>
    %c21 = arith.constant 21 : index
    %c0_40 = arith.constant 0 : index
    %117 = vector.load %arg2[%c21, %c0_40] : memref<39x384xf32, #tpu.memory_space<vmem>>, vector<1x32xf32>
    %cst_41 = arith.constant dense<0.000000e+00> : vector<32xf32>
    %118 = vector.multi_reduction <add>, %115, %cst_41 [1] : vector<32x32xf32> to vector<32xf32>
    %119 = vector.shape_cast %118 : vector<32xf32> to vector<32x1xf32>
    %cst_42 = arith.constant 3.200000e+01 : f32
    %120 = vector.broadcast %cst_42 : f32 to vector<32x1xf32>
    %121 = arith.divf %119, %120 : vector<32x1xf32>
    %122 = vector.broadcast %121 : vector<32x1xf32> to vector<32x32xf32>
    %123 = arith.subf %115, %122 : vector<32x32xf32>
    %124 = arith.mulf %123, %123 : vector<32x32xf32>
    %cst_43 = arith.constant dense<0.000000e+00> : vector<32xf32>
    %125 = vector.multi_reduction <add>, %124, %cst_43 [1] : vector<32x32xf32> to vector<32xf32>
    %126 = vector.shape_cast %125 : vector<32xf32> to vector<32x1xf32>
    %cst_44 = arith.constant 3.200000e+01 : f32
    %127 = vector.broadcast %cst_44 : f32 to vector<32x1xf32>
    %128 = arith.divf %126, %127 : vector<32x1xf32>
    %129 = vector.broadcast %121 : vector<32x1xf32> to vector<32x32xf32>
    %130 = arith.subf %115, %129 : vector<32x32xf32>
    %cst_45 = arith.constant 9.99999996E-13 : f32
    %131 = vector.broadcast %cst_45 : f32 to vector<32x1xf32>
    %132 = arith.addf %128, %131 : vector<32x1xf32>
    %133 = math.rsqrt %132 : vector<32x1xf32>
    %134 = vector.broadcast %133 : vector<32x1xf32> to vector<32x32xf32>
    %135 = arith.mulf %130, %134 : vector<32x32xf32>
    %136 = vector.broadcast %116 : vector<1x32xf32> to vector<32x32xf32>
    %137 = arith.mulf %135, %136 : vector<32x32xf32>
    %138 = vector.broadcast %117 : vector<1x32xf32> to vector<32x32xf32>
    %139 = arith.addf %137, %138 : vector<32x32xf32>
    %140 = arith.truncf %139 : vector<32x32xf32> to vector<32x32xbf16>
    %cst_46 = arith.constant dense<0.000000e+00> : vector<32x64xf32>
    %141 = tpu.matmul %140, %54, %cst_46 {dimension_numbers = #tpu.dot_dimension_numbers<[1], [0], [0], [1], [0, 0, 1, 1], [], []>} : vector<32x32xbf16>, vector<32x64xbf16>, vector<32x64xf32> -> vector<32x64xf32>
    %c22 = arith.constant 22 : index
    %c0_47 = arith.constant 0 : index
    %142 = vector.load %arg2[%c22, %c0_47] : memref<39x384xf32, #tpu.memory_space<vmem>>, vector<1x64xf32>
    %143 = vector.broadcast %142 : vector<1x64xf32> to vector<32x64xf32>
    %144 = arith.addf %141, %143 : vector<32x64xf32>
    %145 = arith.mulf %144, %144 : vector<32x64xf32>
    %146 = arith.mulf %144, %145 : vector<32x64xf32>
    %cst_48 = arith.constant 4.471500e-02 : f32
    %147 = vector.broadcast %cst_48 : f32 to vector<32x64xf32>
    %148 = arith.mulf %147, %146 : vector<32x64xf32>
    %149 = arith.addf %144, %148 : vector<32x64xf32>
    %cst_49 = arith.constant 0.797884583 : f32
    %150 = vector.broadcast %cst_49 : f32 to vector<32x64xf32>
    %151 = arith.mulf %150, %149 : vector<32x64xf32>
    %152 = math.tanh %151 : vector<32x64xf32>
    %cst_50 = arith.constant 1.000000e+00 : f32
    %153 = vector.broadcast %cst_50 : f32 to vector<32x64xf32>
    %154 = arith.addf %153, %152 : vector<32x64xf32>
    %cst_51 = arith.constant 5.000000e-01 : f32
    %155 = vector.broadcast %cst_51 : f32 to vector<32x64xf32>
    %156 = arith.mulf %155, %154 : vector<32x64xf32>
    %157 = arith.mulf %144, %156 : vector<32x64xf32>
    %158 = arith.truncf %157 : vector<32x64xf32> to vector<32x64xbf16>
    %cst_52 = arith.constant dense<0.000000e+00> : vector<32x32xf32>
    %159 = tpu.matmul %158, %55, %cst_52 {dimension_numbers = #tpu.dot_dimension_numbers<[1], [0], [0], [1], [0, 0, 1, 1], [], []>} : vector<32x64xbf16>, vector<64x32xbf16>, vector<32x32xf32> -> vector<32x32xf32>
    %c23 = arith.constant 23 : index
    %c0_53 = arith.constant 0 : index
    %160 = vector.load %arg2[%c23, %c0_53] : memref<39x384xf32, #tpu.memory_space<vmem>>, vector<1x32xf32>
    %161 = vector.broadcast %160 : vector<1x32xf32> to vector<32x32xf32>
    %162 = arith.addf %159, %161 : vector<32x32xf32>
    %163 = arith.addf %162, %139 : vector<32x32xf32>
    %c24 = arith.constant 24 : index
    %c0_54 = arith.constant 0 : index
    %164 = vector.load %arg2[%c24, %c0_54] : memref<39x384xf32, #tpu.memory_space<vmem>>, vector<1x32xf32>
    %c25 = arith.constant 25 : index
    %c0_55 = arith.constant 0 : index
    %165 = vector.load %arg2[%c25, %c0_55] : memref<39x384xf32, #tpu.memory_space<vmem>>, vector<1x32xf32>
    %cst_56 = arith.constant dense<0.000000e+00> : vector<32xf32>
    %166 = vector.multi_reduction <add>, %163, %cst_56 [1] : vector<32x32xf32> to vector<32xf32>
    %167 = vector.shape_cast %166 : vector<32xf32> to vector<32x1xf32>
    %cst_57 = arith.constant 3.200000e+01 : f32
    %168 = vector.broadcast %cst_57 : f32 to vector<32x1xf32>
    %169 = arith.divf %167, %168 : vector<32x1xf32>
    %170 = vector.broadcast %169 : vector<32x1xf32> to vector<32x32xf32>
    %171 = arith.subf %163, %170 : vector<32x32xf32>
    %172 = arith.mulf %171, %171 : vector<32x32xf32>
    %cst_58 = arith.constant dense<0.000000e+00> : vector<32xf32>
    %173 = vector.multi_reduction <add>, %172, %cst_58 [1] : vector<32x32xf32> to vector<32xf32>
    %174 = vector.shape_cast %173 : vector<32xf32> to vector<32x1xf32>
    %cst_59 = arith.constant 3.200000e+01 : f32
    %175 = vector.broadcast %cst_59 : f32 to vector<32x1xf32>
    %176 = arith.divf %174, %175 : vector<32x1xf32>
    %177 = vector.broadcast %169 : vector<32x1xf32> to vector<32x32xf32>
    %178 = arith.subf %163, %177 : vector<32x32xf32>
    %cst_60 = arith.constant 9.99999996E-13 : f32
    %179 = vector.broadcast %cst_60 : f32 to vector<32x1xf32>
    %180 = arith.addf %176, %179 : vector<32x1xf32>
    %181 = math.rsqrt %180 : vector<32x1xf32>
    %182 = vector.broadcast %181 : vector<32x1xf32> to vector<32x32xf32>
    %183 = arith.mulf %178, %182 : vector<32x32xf32>
    %184 = vector.broadcast %164 : vector<1x32xf32> to vector<32x32xf32>
    %185 = arith.mulf %183, %184 : vector<32x32xf32>
    %186 = vector.broadcast %165 : vector<1x32xf32> to vector<32x32xf32>
    %187 = arith.addf %185, %186 : vector<32x32xf32>
    %c272 = arith.constant 272 : index
    %c0_61 = arith.constant 0 : index
    %188 = vector.load %arg3[%c272, %c0_61] : memref<688x128xbf16, #tpu.memory_space<vmem>>, vector<32x128xbf16>
    %c304 = arith.constant 304 : index
    %c0_62 = arith.constant 0 : index
    %189 = vector.load %arg3[%c304, %c0_62] : memref<688x128xbf16, #tpu.memory_space<vmem>>, vector<32x32xbf16>
    %c336 = arith.constant 336 : index
    %c0_63 = arith.constant 0 : index
    %190 = vector.load %arg3[%c336, %c0_63] : memref<688x128xbf16, #tpu.memory_space<vmem>>, vector<32x64xbf16>
    %c368 = arith.constant 368 : index
    %c0_64 = arith.constant 0 : index
    %191 = vector.load %arg3[%c368, %c0_64] : memref<688x128xbf16, #tpu.memory_space<vmem>>, vector<64x32xbf16>
    %192 = arith.truncf %187 : vector<32x32xf32> to vector<32x32xbf16>
    %cst_65 = arith.constant dense<0.000000e+00> : vector<32x128xf32>
    %193 = tpu.matmul %192, %188, %cst_65 {dimension_numbers = #tpu.dot_dimension_numbers<[1], [0], [0], [1], [0, 0, 1, 1], [], []>} : vector<32x32xbf16>, vector<32x128xbf16>, vector<32x128xf32> -> vector<32x128xf32>
    %c26 = arith.constant 26 : index
    %c0_66 = arith.constant 0 : index
    %194 = vector.load %arg2[%c26, %c0_66] : memref<39x384xf32, #tpu.memory_space<vmem>>, vector<1x128xf32>
    %195 = vector.broadcast %194 : vector<1x128xf32> to vector<32x128xf32>
    %196 = arith.addf %193, %195 : vector<32x128xf32>
    %197 = vector.extract_strided_slice %196 {offsets = [0, 0], sizes = [32, 16], strides = [1, 1]} : vector<32x128xf32> to vector<32x16xf32>
    %198 = arith.truncf %197 : vector<32x16xf32> to vector<32x16xbf16>
    %199 = vector.extract_strided_slice %196 {offsets = [0, 32], sizes = [32, 16], strides = [1, 1]} : vector<32x128xf32> to vector<32x16xf32>
    %200 = arith.truncf %199 : vector<32x16xf32> to vector<32x16xbf16>
    %201 = vector.extract_strided_slice %196 {offsets = [0, 64], sizes = [32, 16], strides = [1, 1]} : vector<32x128xf32> to vector<32x16xf32>
    %202 = arith.truncf %201 : vector<32x16xf32> to vector<32x16xbf16>
    %cst_67 = arith.constant dense<0.000000e+00> : vector<32x32xf32>
    %203 = tpu.matmul %198, %200, %cst_67 {dimension_numbers = #tpu.dot_dimension_numbers<[1], [1], [0], [0], [0, 0, 1, 0], [], []>} : vector<32x16xbf16>, vector<32x16xbf16>, vector<32x32xf32> -> vector<32x32xf32>
    %cst_68 = arith.constant 2.500000e-01 : f32
    %204 = vector.broadcast %cst_68 : f32 to vector<32x32xf32>
    %205 = arith.mulf %203, %204 : vector<32x32xf32>
    %206 = arith.addf %205, %51 : vector<32x32xf32>
    %cst_69 = arith.constant dense<0xFF800000> : vector<32xf32>
    %207 = vector.multi_reduction <maximumf>, %206, %cst_69 [1] : vector<32x32xf32> to vector<32xf32>
    %208 = vector.shape_cast %207 : vector<32xf32> to vector<32x1xf32>
    %209 = vector.broadcast %208 : vector<32x1xf32> to vector<32x32xf32>
    %210 = arith.subf %206, %209 : vector<32x32xf32>
    %211 = math.exp %210 : vector<32x32xf32>
    %cst_70 = arith.constant dense<0.000000e+00> : vector<32xf32>
    %212 = vector.multi_reduction <add>, %211, %cst_70 [1] : vector<32x32xf32> to vector<32xf32>
    %213 = vector.shape_cast %212 : vector<32xf32> to vector<32x1xf32>
    %214 = tpu.reciprocal %213 {approx = true} : vector<32x1xf32> -> vector<32x1xf32>
    %215 = vector.broadcast %214 : vector<32x1xf32> to vector<32x32xf32>
    %216 = arith.mulf %211, %215 : vector<32x32xf32>
    %217 = arith.truncf %216 : vector<32x32xf32> to vector<32x32xbf16>
    %cst_71 = arith.constant dense<0.000000e+00> : vector<32x16xf32>
    %218 = tpu.matmul %217, %202, %cst_71 {dimension_numbers = #tpu.dot_dimension_numbers<[1], [0], [0], [1], [0, 0, 1, 1], [], []>} : vector<32x32xbf16>, vector<32x16xbf16>, vector<32x16xf32> -> vector<32x16xf32>
    %219 = arith.truncf %218 : vector<32x16xf32> to vector<32x16xbf16>
    %220 = vector.extract_strided_slice %189 {offsets = [0, 0], sizes = [16, 32], strides = [1, 1]} : vector<32x32xbf16> to vector<16x32xbf16>
    %cst_72 = arith.constant dense<0.000000e+00> : vector<32x32xf32>
    %221 = tpu.matmul %219, %220, %cst_72 {dimension_numbers = #tpu.dot_dimension_numbers<[1], [0], [0], [1], [0, 0, 1, 1], [], []>} : vector<32x16xbf16>, vector<16x32xbf16>, vector<32x32xf32> -> vector<32x32xf32>
    %222 = vector.extract_strided_slice %196 {offsets = [0, 16], sizes = [32, 16], strides = [1, 1]} : vector<32x128xf32> to vector<32x16xf32>
    %223 = arith.truncf %222 : vector<32x16xf32> to vector<32x16xbf16>
    %224 = vector.extract_strided_slice %196 {offsets = [0, 48], sizes = [32, 16], strides = [1, 1]} : vector<32x128xf32> to vector<32x16xf32>
    %225 = arith.truncf %224 : vector<32x16xf32> to vector<32x16xbf16>
    %226 = vector.extract_strided_slice %196 {offsets = [0, 80], sizes = [32, 16], strides = [1, 1]} : vector<32x128xf32> to vector<32x16xf32>
    %227 = arith.truncf %226 : vector<32x16xf32> to vector<32x16xbf16>
    %cst_73 = arith.constant dense<0.000000e+00> : vector<32x32xf32>
    %228 = tpu.matmul %223, %225, %cst_73 {dimension_numbers = #tpu.dot_dimension_numbers<[1], [1], [0], [0], [0, 0, 1, 0], [], []>} : vector<32x16xbf16>, vector<32x16xbf16>, vector<32x32xf32> -> vector<32x32xf32>
    %cst_74 = arith.constant 2.500000e-01 : f32
    %229 = vector.broadcast %cst_74 : f32 to vector<32x32xf32>
    %230 = arith.mulf %228, %229 : vector<32x32xf32>
    %231 = arith.addf %230, %51 : vector<32x32xf32>
    %cst_75 = arith.constant dense<0xFF800000> : vector<32xf32>
    %232 = vector.multi_reduction <maximumf>, %231, %cst_75 [1] : vector<32x32xf32> to vector<32xf32>
    %233 = vector.shape_cast %232 : vector<32xf32> to vector<32x1xf32>
    %234 = vector.broadcast %233 : vector<32x1xf32> to vector<32x32xf32>
    %235 = arith.subf %231, %234 : vector<32x32xf32>
    %236 = math.exp %235 : vector<32x32xf32>
    %cst_76 = arith.constant dense<0.000000e+00> : vector<32xf32>
    %237 = vector.multi_reduction <add>, %236, %cst_76 [1] : vector<32x32xf32> to vector<32xf32>
    %238 = vector.shape_cast %237 : vector<32xf32> to vector<32x1xf32>
    %239 = tpu.reciprocal %238 {approx = true} : vector<32x1xf32> -> vector<32x1xf32>
    %240 = vector.broadcast %239 : vector<32x1xf32> to vector<32x32xf32>
    %241 = arith.mulf %236, %240 : vector<32x32xf32>
    %242 = arith.truncf %241 : vector<32x32xf32> to vector<32x32xbf16>
    %cst_77 = arith.constant dense<0.000000e+00> : vector<32x16xf32>
    %243 = tpu.matmul %242, %227, %cst_77 {dimension_numbers = #tpu.dot_dimension_numbers<[1], [0], [0], [1], [0, 0, 1, 1], [], []>} : vector<32x32xbf16>, vector<32x16xbf16>, vector<32x16xf32> -> vector<32x16xf32>
    %244 = arith.truncf %243 : vector<32x16xf32> to vector<32x16xbf16>
    %245 = vector.extract_strided_slice %189 {offsets = [16, 0], sizes = [16, 32], strides = [1, 1]} : vector<32x32xbf16> to vector<16x32xbf16>
    %cst_78 = arith.constant dense<0.000000e+00> : vector<32x32xf32>
    %246 = tpu.matmul %244, %245, %cst_78 {dimension_numbers = #tpu.dot_dimension_numbers<[1], [0], [0], [1], [0, 0, 1, 1], [], []>} : vector<32x16xbf16>, vector<16x32xbf16>, vector<32x32xf32> -> vector<32x32xf32>
    %247 = arith.addf %221, %246 : vector<32x32xf32>
    %c27 = arith.constant 27 : index
    %c0_79 = arith.constant 0 : index
    %248 = vector.load %arg2[%c27, %c0_79] : memref<39x384xf32, #tpu.memory_space<vmem>>, vector<1x32xf32>
    %249 = vector.broadcast %248 : vector<1x32xf32> to vector<32x32xf32>
    %250 = arith.addf %247, %249 : vector<32x32xf32>
    %251 = arith.addf %250, %187 : vector<32x32xf32>
    %c28 = arith.constant 28 : index
    %c0_80 = arith.constant 0 : index
    %252 = vector.load %arg2[%c28, %c0_80] : memref<39x384xf32, #tpu.memory_space<vmem>>, vector<1x32xf32>
    %c29 = arith.constant 29 : index
    %c0_81 = arith.constant 0 : index
    %253 = vector.load %arg2[%c29, %c0_81] : memref<39x384xf32, #tpu.memory_space<vmem>>, vector<1x32xf32>
    %cst_82 = arith.constant dense<0.000000e+00> : vector<32xf32>
    %254 = vector.multi_reduction <add>, %251, %cst_82 [1] : vector<32x32xf32> to vector<32xf32>
    %255 = vector.shape_cast %254 : vector<32xf32> to vector<32x1xf32>
    %cst_83 = arith.constant 3.200000e+01 : f32
    %256 = vector.broadcast %cst_83 : f32 to vector<32x1xf32>
    %257 = arith.divf %255, %256 : vector<32x1xf32>
    %258 = vector.broadcast %257 : vector<32x1xf32> to vector<32x32xf32>
    %259 = arith.subf %251, %258 : vector<32x32xf32>
    %260 = arith.mulf %259, %259 : vector<32x32xf32>
    %cst_84 = arith.constant dense<0.000000e+00> : vector<32xf32>
    %261 = vector.multi_reduction <add>, %260, %cst_84 [1] : vector<32x32xf32> to vector<32xf32>
    %262 = vector.shape_cast %261 : vector<32xf32> to vector<32x1xf32>
    %cst_85 = arith.constant 3.200000e+01 : f32
    %263 = vector.broadcast %cst_85 : f32 to vector<32x1xf32>
    %264 = arith.divf %262, %263 : vector<32x1xf32>
    %265 = vector.broadcast %257 : vector<32x1xf32> to vector<32x32xf32>
    %266 = arith.subf %251, %265 : vector<32x32xf32>
    %cst_86 = arith.constant 9.99999996E-13 : f32
    %267 = vector.broadcast %cst_86 : f32 to vector<32x1xf32>
    %268 = arith.addf %264, %267 : vector<32x1xf32>
    %269 = math.rsqrt %268 : vector<32x1xf32>
    %270 = vector.broadcast %269 : vector<32x1xf32> to vector<32x32xf32>
    %271 = arith.mulf %266, %270 : vector<32x32xf32>
    %272 = vector.broadcast %252 : vector<1x32xf32> to vector<32x32xf32>
    %273 = arith.mulf %271, %272 : vector<32x32xf32>
    %274 = vector.broadcast %253 : vector<1x32xf32> to vector<32x32xf32>
    %275 = arith.addf %273, %274 : vector<32x32xf32>
    %276 = arith.truncf %275 : vector<32x32xf32> to vector<32x32xbf16>
    %cst_87 = arith.constant dense<0.000000e+00> : vector<32x64xf32>
    %277 = tpu.matmul %276, %190, %cst_87 {dimension_numbers = #tpu.dot_dimension_numbers<[1], [0], [0], [1], [0, 0, 1, 1], [], []>} : vector<32x32xbf16>, vector<32x64xbf16>, vector<32x64xf32> -> vector<32x64xf32>
    %c30 = arith.constant 30 : index
    %c0_88 = arith.constant 0 : index
    %278 = vector.load %arg2[%c30, %c0_88] : memref<39x384xf32, #tpu.memory_space<vmem>>, vector<1x64xf32>
    %279 = vector.broadcast %278 : vector<1x64xf32> to vector<32x64xf32>
    %280 = arith.addf %277, %279 : vector<32x64xf32>
    %281 = arith.mulf %280, %280 : vector<32x64xf32>
    %282 = arith.mulf %280, %281 : vector<32x64xf32>
    %cst_89 = arith.constant 4.471500e-02 : f32
    %283 = vector.broadcast %cst_89 : f32 to vector<32x64xf32>
    %284 = arith.mulf %283, %282 : vector<32x64xf32>
    %285 = arith.addf %280, %284 : vector<32x64xf32>
    %cst_90 = arith.constant 0.797884583 : f32
    %286 = vector.broadcast %cst_90 : f32 to vector<32x64xf32>
    %287 = arith.mulf %286, %285 : vector<32x64xf32>
    %288 = math.tanh %287 : vector<32x64xf32>
    %cst_91 = arith.constant 1.000000e+00 : f32
    %289 = vector.broadcast %cst_91 : f32 to vector<32x64xf32>
    %290 = arith.addf %289, %288 : vector<32x64xf32>
    %cst_92 = arith.constant 5.000000e-01 : f32
    %291 = vector.broadcast %cst_92 : f32 to vector<32x64xf32>
    %292 = arith.mulf %291, %290 : vector<32x64xf32>
    %293 = arith.mulf %280, %292 : vector<32x64xf32>
    %294 = arith.truncf %293 : vector<32x64xf32> to vector<32x64xbf16>
    %cst_93 = arith.constant dense<0.000000e+00> : vector<32x32xf32>
    %295 = tpu.matmul %294, %191, %cst_93 {dimension_numbers = #tpu.dot_dimension_numbers<[1], [0], [0], [1], [0, 0, 1, 1], [], []>} : vector<32x64xbf16>, vector<64x32xbf16>, vector<32x32xf32> -> vector<32x32xf32>
    %c31 = arith.constant 31 : index
    %c0_94 = arith.constant 0 : index
    %296 = vector.load %arg2[%c31, %c0_94] : memref<39x384xf32, #tpu.memory_space<vmem>>, vector<1x32xf32>
    %297 = vector.broadcast %296 : vector<1x32xf32> to vector<32x32xf32>
    %298 = arith.addf %295, %297 : vector<32x32xf32>
    %299 = arith.addf %298, %275 : vector<32x32xf32>
    %c32 = arith.constant 32 : index
    %c0_95 = arith.constant 0 : index
    %300 = vector.load %arg2[%c32, %c0_95] : memref<39x384xf32, #tpu.memory_space<vmem>>, vector<1x32xf32>
    %c33 = arith.constant 33 : index
    %c0_96 = arith.constant 0 : index
    %301 = vector.load %arg2[%c33, %c0_96] : memref<39x384xf32, #tpu.memory_space<vmem>>, vector<1x32xf32>
    %cst_97 = arith.constant dense<0.000000e+00> : vector<32xf32>
    %302 = vector.multi_reduction <add>, %299, %cst_97 [1] : vector<32x32xf32> to vector<32xf32>
    %303 = vector.shape_cast %302 : vector<32xf32> to vector<32x1xf32>
    %cst_98 = arith.constant 3.200000e+01 : f32
    %304 = vector.broadcast %cst_98 : f32 to vector<32x1xf32>
    %305 = arith.divf %303, %304 : vector<32x1xf32>
    %306 = vector.broadcast %305 : vector<32x1xf32> to vector<32x32xf32>
    %307 = arith.subf %299, %306 : vector<32x32xf32>
    %308 = arith.mulf %307, %307 : vector<32x32xf32>
    %cst_99 = arith.constant dense<0.000000e+00> : vector<32xf32>
    %309 = vector.multi_reduction <add>, %308, %cst_99 [1] : vector<32x32xf32> to vector<32xf32>
    %310 = vector.shape_cast %309 : vector<32xf32> to vector<32x1xf32>
    %cst_100 = arith.constant 3.200000e+01 : f32
    %311 = vector.broadcast %cst_100 : f32 to vector<32x1xf32>
    %312 = arith.divf %310, %311 : vector<32x1xf32>
    %313 = vector.broadcast %305 : vector<32x1xf32> to vector<32x32xf32>
    %314 = arith.subf %299, %313 : vector<32x32xf32>
    %cst_101 = arith.constant 9.99999996E-13 : f32
    %315 = vector.broadcast %cst_101 : f32 to vector<32x1xf32>
    %316 = arith.addf %312, %315 : vector<32x1xf32>
    %317 = math.rsqrt %316 : vector<32x1xf32>
    %318 = vector.broadcast %317 : vector<32x1xf32> to vector<32x32xf32>
    %319 = arith.mulf %314, %318 : vector<32x32xf32>
    %320 = vector.broadcast %300 : vector<1x32xf32> to vector<32x32xf32>
    %321 = arith.mulf %319, %320 : vector<32x32xf32>
    %322 = vector.broadcast %301 : vector<1x32xf32> to vector<32x32xf32>
    %323 = arith.addf %321, %322 : vector<32x32xf32>
    %324 = arith.truncf %323 : vector<32x32xf32> to vector<32x32xbf16>
    %c0_102 = arith.constant 0 : index
    %c0_103 = arith.constant 0 : index
    %325 = vector.load %arg4[%c0_102, %c0_103] : memref<512x384xbf16, #tpu.memory_space<vmem>>, vector<32x384xbf16>
    %cst_104 = arith.constant dense<0.000000e+00> : vector<32x384xf32>
    %326 = tpu.matmul %324, %325, %cst_104 {dimension_numbers = #tpu.dot_dimension_numbers<[1], [0], [0], [1], [0, 0, 1, 1], [], []>} : vector<32x32xbf16>, vector<32x384xbf16>, vector<32x384xf32> -> vector<32x384xf32>
    %c32_105 = arith.constant 32 : index
    %c0_106 = arith.constant 0 : index
    %327 = vector.load %arg4[%c32_105, %c0_106] : memref<512x384xbf16, #tpu.memory_space<vmem>>, vector<32x384xbf16>
    %cst_107 = arith.constant dense<0.000000e+00> : vector<32x384xf32>
    %328 = tpu.matmul %324, %327, %cst_107 {dimension_numbers = #tpu.dot_dimension_numbers<[1], [0], [0], [1], [0, 0, 1, 1], [], []>} : vector<32x32xbf16>, vector<32x384xbf16>, vector<32x384xf32> -> vector<32x384xf32>
    %329 = vector.extract_strided_slice %328 {offsets = [1, 0], sizes = [31, 384], strides = [1, 1]} : vector<32x384xf32> to vector<31x384xf32>
    %cst_108 = arith.constant 0.000000e+00 : f32
    %330 = vector.broadcast %cst_108 : f32 to vector<1x384xf32>
    %331 = tpu.concatenate %329, %330 in 0 : vector<31x384xf32>, vector<1x384xf32> -> vector<32x384xf32>
    %332 = arith.addf %326, %331 : vector<32x384xf32>
    %c64 = arith.constant 64 : index
    %c0_109 = arith.constant 0 : index
    %333 = vector.load %arg4[%c64, %c0_109] : memref<512x384xbf16, #tpu.memory_space<vmem>>, vector<32x384xbf16>
    %cst_110 = arith.constant dense<0.000000e+00> : vector<32x384xf32>
    %334 = tpu.matmul %324, %333, %cst_110 {dimension_numbers = #tpu.dot_dimension_numbers<[1], [0], [0], [1], [0, 0, 1, 1], [], []>} : vector<32x32xbf16>, vector<32x384xbf16>, vector<32x384xf32> -> vector<32x384xf32>
    %335 = vector.extract_strided_slice %334 {offsets = [2, 0], sizes = [30, 384], strides = [1, 1]} : vector<32x384xf32> to vector<30x384xf32>
    %cst_111 = arith.constant 0.000000e+00 : f32
    %336 = vector.broadcast %cst_111 : f32 to vector<2x384xf32>
    %337 = tpu.concatenate %335, %336 in 0 : vector<30x384xf32>, vector<2x384xf32> -> vector<32x384xf32>
    %338 = arith.addf %332, %337 : vector<32x384xf32>
    %c96 = arith.constant 96 : index
    %c0_112 = arith.constant 0 : index
    %339 = vector.load %arg4[%c96, %c0_112] : memref<512x384xbf16, #tpu.memory_space<vmem>>, vector<32x384xbf16>
    %cst_113 = arith.constant dense<0.000000e+00> : vector<32x384xf32>
    %340 = tpu.matmul %324, %339, %cst_113 {dimension_numbers = #tpu.dot_dimension_numbers<[1], [0], [0], [1], [0, 0, 1, 1], [], []>} : vector<32x32xbf16>, vector<32x384xbf16>, vector<32x384xf32> -> vector<32x384xf32>
    %341 = vector.extract_strided_slice %340 {offsets = [3, 0], sizes = [29, 384], strides = [1, 1]} : vector<32x384xf32> to vector<29x384xf32>
    %cst_114 = arith.constant 0.000000e+00 : f32
    %342 = vector.broadcast %cst_114 : f32 to vector<3x384xf32>
    %343 = tpu.concatenate %341, %342 in 0 : vector<29x384xf32>, vector<3x384xf32> -> vector<32x384xf32>
    %344 = arith.addf %338, %343 : vector<32x384xf32>
    %c34 = arith.constant 34 : index
    %c0_115 = arith.constant 0 : index
    %345 = vector.load %arg2[%c34, %c0_115] : memref<39x384xf32, #tpu.memory_space<vmem>>, vector<1x384xf32>
    %346 = vector.broadcast %345 : vector<1x384xf32> to vector<32x384xf32>
    %347 = arith.addf %344, %346 : vector<32x384xf32>
    %cst_116 = arith.constant 0.000000e+00 : f32
    %348 = vector.broadcast %cst_116 : f32 to vector<32x384xf32>
    %349 = arith.maximumf %347, %348 : vector<32x384xf32>
    %350 = vector.extract_strided_slice %349 {offsets = [0, 0], sizes = [15, 128], strides = [1, 1]} : vector<32x384xf32> to vector<15x128xf32>
    %cst_117 = arith.constant dense<0xFF800000> : vector<128xf32>
    %351 = vector.multi_reduction <maximumf>, %350, %cst_117 [0] : vector<15x128xf32> to vector<128xf32>
    %352 = vector.shape_cast %351 : vector<128xf32> to vector<1x128xf32>
    %353 = vector.extract_strided_slice %349 {offsets = [0, 128], sizes = [14, 128], strides = [1, 1]} : vector<32x384xf32> to vector<14x128xf32>
    %cst_118 = arith.constant dense<0xFF800000> : vector<128xf32>
    %354 = vector.multi_reduction <maximumf>, %353, %cst_118 [0] : vector<14x128xf32> to vector<128xf32>
    %355 = vector.shape_cast %354 : vector<128xf32> to vector<1x128xf32>
    %356 = vector.extract_strided_slice %349 {offsets = [0, 256], sizes = [13, 128], strides = [1, 1]} : vector<32x384xf32> to vector<13x128xf32>
    %cst_119 = arith.constant dense<0xFF800000> : vector<128xf32>
    %357 = vector.multi_reduction <maximumf>, %356, %cst_119 [0] : vector<13x128xf32> to vector<128xf32>
    %358 = vector.shape_cast %357 : vector<128xf32> to vector<1x128xf32>
    %359 = tpu.concatenate %352, %355, %358 in 1 : vector<1x128xf32>, vector<1x128xf32>, vector<1x128xf32> -> vector<1x384xf32>
    %360 = vector.extract_strided_slice %349 {offsets = [16, 0], sizes = [15, 128], strides = [1, 1]} : vector<32x384xf32> to vector<15x128xf32>
    %cst_120 = arith.constant dense<0xFF800000> : vector<128xf32>
    %361 = vector.multi_reduction <maximumf>, %360, %cst_120 [0] : vector<15x128xf32> to vector<128xf32>
    %362 = vector.shape_cast %361 : vector<128xf32> to vector<1x128xf32>
    %363 = vector.extract_strided_slice %349 {offsets = [16, 128], sizes = [14, 128], strides = [1, 1]} : vector<32x384xf32> to vector<14x128xf32>
    %cst_121 = arith.constant dense<0xFF800000> : vector<128xf32>
    %364 = vector.multi_reduction <maximumf>, %363, %cst_121 [0] : vector<14x128xf32> to vector<128xf32>
    %365 = vector.shape_cast %364 : vector<128xf32> to vector<1x128xf32>
    %366 = vector.extract_strided_slice %349 {offsets = [16, 256], sizes = [13, 128], strides = [1, 1]} : vector<32x384xf32> to vector<13x128xf32>
    %cst_122 = arith.constant dense<0xFF800000> : vector<128xf32>
    %367 = vector.multi_reduction <maximumf>, %366, %cst_122 [0] : vector<13x128xf32> to vector<128xf32>
    %368 = vector.shape_cast %367 : vector<128xf32> to vector<1x128xf32>
    %369 = tpu.concatenate %362, %365, %368 in 1 : vector<1x128xf32>, vector<1x128xf32>, vector<1x128xf32> -> vector<1x384xf32>
    %370 = tpu.concatenate %359, %369 in 0 : vector<1x384xf32>, vector<1x384xf32> -> vector<2x384xf32>
    %c128 = arith.constant 128 : index
    %c0_123 = arith.constant 0 : index
    %371 = vector.load %arg4[%c128, %c0_123] : memref<512x384xbf16, #tpu.memory_space<vmem>>, vector<384x256xbf16>
    %372 = arith.truncf %370 : vector<2x384xf32> to vector<2x384xbf16>
    %cst_124 = arith.constant dense<0.000000e+00> : vector<2x256xf32>
    %373 = tpu.matmul %372, %371, %cst_124 {dimension_numbers = #tpu.dot_dimension_numbers<[1], [0], [0], [1], [0, 0, 1, 1], [], []>} : vector<2x384xbf16>, vector<384x256xbf16>, vector<2x256xf32> -> vector<2x256xf32>
    %c35 = arith.constant 35 : index
    %c0_125 = arith.constant 0 : index
    %374 = vector.load %arg2[%c35, %c0_125] : memref<39x384xf32, #tpu.memory_space<vmem>>, vector<1x256xf32>
    %375 = vector.broadcast %374 : vector<1x256xf32> to vector<2x256xf32>
    %376 = arith.addf %373, %375 : vector<2x256xf32>
    %c36 = arith.constant 36 : index
    %c0_126 = arith.constant 0 : index
    %377 = vector.load %arg2[%c36, %c0_126] : memref<39x384xf32, #tpu.memory_space<vmem>>, vector<1x256xf32>
    %378 = vector.broadcast %377 : vector<1x256xf32> to vector<2x256xf32>
    %379 = arith.mulf %376, %378 : vector<2x256xf32>
    %c37 = arith.constant 37 : index
    %c0_127 = arith.constant 0 : index
    %380 = vector.load %arg2[%c37, %c0_127] : memref<39x384xf32, #tpu.memory_space<vmem>>, vector<1x256xf32>
    %381 = vector.broadcast %380 : vector<1x256xf32> to vector<2x256xf32>
    %382 = arith.addf %379, %381 : vector<2x256xf32>
    %cst_128 = arith.constant 0.000000e+00 : f32
    %383 = vector.broadcast %cst_128 : f32 to vector<2x256xf32>
    %384 = arith.maximumf %382, %383 : vector<2x256xf32>
    %c432 = arith.constant 432 : index
    %c0_129 = arith.constant 0 : index
    %385 = vector.load %arg3[%c432, %c0_129] : memref<688x128xbf16, #tpu.memory_space<vmem>>, vector<256x8xbf16>
    %386 = arith.truncf %384 : vector<2x256xf32> to vector<2x256xbf16>
    %cst_130 = arith.constant dense<0.000000e+00> : vector<2x8xf32>
    %387 = tpu.matmul %386, %385, %cst_130 {dimension_numbers = #tpu.dot_dimension_numbers<[1], [0], [0], [1], [0, 0, 1, 1], [], []>} : vector<2x256xbf16>, vector<256x8xbf16>, vector<2x8xf32> -> vector<2x8xf32>
    %c38 = arith.constant 38 : index
    %c0_131 = arith.constant 0 : index
    %388 = vector.load %arg2[%c38, %c0_131] : memref<39x384xf32, #tpu.memory_space<vmem>>, vector<1x8xf32>
    %389 = vector.broadcast %388 : vector<1x8xf32> to vector<2x8xf32>
    %390 = arith.addf %387, %389 : vector<2x8xf32>
    %391 = arith.negf %390 : vector<2x8xf32>
    %392 = math.exp %391 : vector<2x8xf32>
    %cst_132 = arith.constant 1.000000e+00 : f32
    %393 = vector.broadcast %cst_132 : f32 to vector<2x8xf32>
    %394 = arith.addf %393, %392 : vector<2x8xf32>
    %395 = arith.divf %393, %394 : vector<2x8xf32>
    %c0_133 = arith.constant 0 : index
    %c0_134 = arith.constant 0 : index
    %396 = vector.load %arg5[%c0_133, %c0_134] : memref<2x8xf32, #tpu.memory_space<vmem>>, vector<2x8xf32>
    tpu.vector_store %arg5[%c0_133, %c0_134], %395 {strides = array<i32>} : memref<2x8xf32, #tpu.memory_space<vmem>>, vector<2x8xf32>,
    return
  }
}

</mosaic_0001>

<llo_original>
// kernel: model_forward.1
$region0: #{model_forward.1}
  #allocation0 [shape = 'u32[]', space=smem, size = 0x4, offset = 0x4, fixed_abs, tag = 'smem constant byte address 0x4 - core index']
  #allocation1 [shape = 'u32[144,128]{1,0:T(1,128)}', space=vmem, size = 0x12000, scoped, tag = 'internal scratch']
  %s0 = inlined_call_operand.vmem [shape: s32[32,1], index: 0, kind: input, shape index: {}]
  %s1 = inlined_call_operand.vmem [shape: f32[1,32], index: 1, kind: input, shape index: {}]
  %s2 = inlined_call_operand.hbm [shape: f32[39,384], index: 2, kind: input, shape index: {}]
  %s3 = inlined_call_operand.hbm [shape: bf16[688,128], index: 3, kind: input, shape index: {}]
  %s4 = inlined_call_operand.hbm [shape: bf16[512,384], index: 4, kind: input, shape index: {}]
  %s5 = inlined_call_operand.hbm [shape: f32[2,8], index: 5, kind: output, shape index: {}]
  %s6 = sld [smem:[#allocation0]]
  $region42: #{model_forward.1} parent=0
    _
  %s8 = ssub.s32 1, %s6
  %s9 = scalar_select 0, %s8, %s6
  $region1: #{model_forward.1} parent=0
    #allocation2 [shape = 'u8[61440]{0}', space=vmem, size = 0xf000, scoped, tag = 'input window, operand 2, single buffered']
    #allocation3 [shape = 's32[1]{0}', space=sflag, size = 0x4, scoped, tag = 'scoped memory for model_forward.1']
    #allocation4 [shape = 's32[1]{0}', space=sflag, size = 0x4, scoped, tag = 'scoped memory for model_forward.1']
    #allocation5 [shape = 'u8[176128]{0}', space=vmem, size = 0x2b000, scoped, tag = 'input window, operand 3, single buffered']
    #allocation6 [shape = 's32[1]{0}', space=sflag, size = 0x4, scoped, tag = 'scoped memory for model_forward.1']
    #allocation7 [shape = 'u8[393216]{0}', space=vmem, size = 0x60000, scoped, tag = 'input window, operand 4, single buffered']
    #allocation8 [shape = 'u8[1024]{0}', space=vmem, size = 0x400, scoped, tag = 'output window, operand 0, single buffered']
    %10 = vsyncpa [#allocation3], 0
    %11 = vsyncpa [#allocation6], 0
    %12 = vsyncpa [#allocation4], 0
    // Predicated region
    $region2: #{model_forward.1} parent=1 // pred_check
      _
    $region3: #{model_forward.1} parent=1 // pred_check_branch
      %14 = sbr.rel (0) target = $region5
    $region4: #{model_forward.1} parent=1 // pred_region
      _
    $region5: #{model_forward.1} parent=1 // pred_fallthru
      _
    // Predicated region
    $region6: #{model_forward.1} parent=1 // pred_check
      _
    $region7: #{model_forward.1} parent=1 // pred_check_branch
      %16 = sbr.rel (0) target = $region9
    $region8: #{model_forward.1} parent=1 // pred_region
      _
    $region9: #{model_forward.1} parent=1 // pred_fallthru
      _
    // Predicated region
    $region10: #{model_forward.1} parent=1 // pred_check
      _
    $region11: #{model_forward.1} parent=1 // pred_check_branch
      %18 = sbr.rel (0) target = $region13
    $region12: #{model_forward.1} parent=1 // pred_region
      %s20 = ssub.s32 1920, 1920
      %21 = vsyncadd [#allocation3], %s20
      %s22 = sshll.u32 [#allocation2], 4
      %s23 = int_to_ptr.vmem [resolvable:$true] %s22
      %28 = dma.hbm_to_vmem [thread:$0]  %s2, 1920, %s23, [#allocation3], 384, 384, 24
    $region13: #{model_forward.1} parent=1 // pred_fallthru
      _
    // Predicated region
    $region14: #{model_forward.1} parent=1 // pred_check
      _
    $region15: #{model_forward.1} parent=1 // pred_check_branch
      %30 = sbr.rel (0) target = $region17
    $region16: #{model_forward.1} parent=1 // pred_region
      %s32 = ssub.s32 5504, 5504
      %33 = vsyncadd [#allocation6], %s32
      %s34 = sshll.u32 [#allocation5], 4
      %s35 = int_to_ptr.vmem [resolvable:$true] %s34
      %40 = dma.hbm_to_vmem [thread:$0]  %s3, 5504, %s35, [#allocation6], 64, 64, 4
    $region17: #{model_forward.1} parent=1 // pred_fallthru
      _
    // Predicated region
    $region18: #{model_forward.1} parent=1 // pred_check
      _
    $region19: #{model_forward.1} parent=1 // pred_check_branch
      %42 = sbr.rel (0) target = $region21
    $region20: #{model_forward.1} parent=1 // pred_region
      %s44 = ssub.s32 12288, 12288
      %45 = vsyncadd [#allocation6], %s44
      %s46 = sshll.u32 [#allocation7], 4
      %s47 = int_to_ptr.vmem [resolvable:$true] %s46
      %52 = dma.hbm_to_vmem [thread:$0]  %s4, 12288, %s47, [#allocation6], 192, 192, 12
    $region21: #{model_forward.1} parent=1 // pred_fallthru
      _
    // Predicated region
    $region22: #{model_forward.1} parent=1 // pred_check
      _
    $region23: #{model_forward.1} parent=1 // pred_check_branch
      %54 = sbr.rel (0) target = $region25
    $region24: #{model_forward.1} parent=1 // pred_region
      %55 = dma.done [#allocation3], 1920
    $region25: #{model_forward.1} parent=1 // pred_fallthru
      _
    // Predicated region
    $region26: #{model_forward.1} parent=1 // pred_check
      _
    $region27: #{model_forward.1} parent=1 // pred_check_branch
      %57 = sbr.rel (0) target = $region29
    $region28: #{model_forward.1} parent=1 // pred_region
      %58 = dma.done [#allocation6], 5504
    $region29: #{model_forward.1} parent=1 // pred_fallthru
      _
    // Predicated region
    $region30: #{model_forward.1} parent=1 // pred_check
      _
    $region31: #{model_forward.1} parent=1 // pred_check_branch
      %60 = sbr.rel (0) target = $region33
    $region32: #{model_forward.1} parent=1 // pred_region
      %61 = dma.done [#allocation6], 12288
    $region33: #{model_forward.1} parent=1 // pred_fallthru
      _
    %v63 = vld [vmem:[%s0] sm:$0xff]
    %v64 = vld [vmem:[%s0 + $0x8] sm:$0xff]
    %v65 = vld [vmem:[%s0 + $0x10] sm:$0xff]
    %v66 = vld [vmem:[%s0 + $0x18] sm:$0xff]
    %v67 = vlaneseq
    %v68 = vand.u32 %v67, 127
    %69 = vset.pattern.permute.xlu0 0
    %70 = vperm.xlu0 %69, %v63
    %v71 = vpop.permute.xlu0 %70
    %72 = vset.pattern.permute.xlu0 0
    %73 = vperm.xlu0 %72, %v64
    %v74 = vpop.permute.xlu0 %73
    %75 = vset.pattern.permute.xlu0 0
    %76 = vperm.xlu0 %75, %v65
    %v77 = vpop.permute.xlu0 %76
    %78 = vset.pattern.permute.xlu0 0
    %79 = vperm.xlu0 %78, %v66
    %v80 = vpop.permute.xlu0 %79
    %vm81 = vcmp.eq.s32.totalorder %v68, %v71
    %vm82 = vcmp.eq.s32.totalorder %v68, %v74
    %vm83 = vcmp.eq.s32.totalorder %v68, %v77
    %vm84 = vcmp.eq.s32.totalorder %v68, %v80
    %v85 = vsel %vm81, 1.0, 0.0
    %v86 = vsel %vm82, 1.0, 0.0
    %v87 = vsel %vm83, 1.0, 0.0
    %v88 = vsel %vm84, 1.0, 0.0
    %v89 = vpack.c.bf16 %v86, %v85
    %v90 = vpack.c.bf16 %v88, %v87
    %v91 = vld [vmem:[#allocation5] sm:$0xf]
    %v92 = vld [vmem:[#allocation5 + $0x4] sm:$0xf]
    %v93 = vld [vmem:[#allocation5 + $0x8] sm:$0xf]
    %v94 = vld [vmem:[#allocation5 + $0xc] sm:$0xf]
    %v95 = vld [vmem:[#allocation5 + $0x10] sm:$0xf]
    %v96 = vld [vmem:[#allocation5 + $0x14] sm:$0xf]
    %v97 = vld [vmem:[#allocation5 + $0x18] sm:$0xf]
    %v98 = vld [vmem:[#allocation5 + $0x1c] sm:$0xf]
    %v99 = vld [vmem:[#allocation5 + $0x20] sm:$0xf]
    %v100 = vld [vmem:[#allocation5 + $0x24] sm:$0xf]
    %v101 = vld [vmem:[#allocation5 + $0x28] sm:$0xf]
    %v102 = vld [vmem:[#allocation5 + $0x2c] sm:$0xf]
    %v103 = vld [vmem:[#allocation5 + $0x30] sm:$0xf]
    %v104 = vld [vmem:[#allocation5 + $0x34] sm:$0xf]
    %v105 = vld [vmem:[#allocation2] sm:$0xfc]
    %v106 = vld [vmem:[#allocation2 + $0x18] sm:$0xff]
    %v107 = vld [vmem:[#allocation2 + $0x30] sm:$0x3]
    %vm111 = vcmask 1045504
    %v112 = vrot.slane %v105, 2
    %v113 = vrot.slane %v106, 2
    %v114 = vsel %vm111, %v112, %v113
    %v115 = vrot.slane %v107, 2
    %v116 = vsel %vm111, %v113, %v115
    %v133 = vunpack.c.l.b16 %v91
    %v134 = vunpack.c.l.b16 %v92
    %v135 = vunpack.c.l.b16 %v93
    %v136 = vunpack.c.l.b16 %v94
    %v137 = vunpack.c.l.b16 %v95
    %v138 = vunpack.c.l.b16 %v96
    %v139 = vunpack.c.l.b16 %v97
    %v140 = vunpack.c.l.b16 %v98
    %v141 = vunpack.c.l.b16 %v99
    %v142 = vunpack.c.l.b16 %v100
    %v143 = vunpack.c.l.b16 %v101
    %v144 = vunpack.c.l.b16 %v102
    %v145 = vunpack.c.l.b16 %v103
    %v146 = vunpack.c.l.b16 %v104
    %v147 = vpack.c.b16 %v134, %v133
    %v148 = vpack.c.b16 %v136, %v135
    %v149 = vpack.c.b16 %v138, %v137
    %v150 = vpack.c.b16 %v140, %v139
    %v151 = vpack.c.b16 %v142, %v141
    %v152 = vpack.c.b16 %v144, %v143
    %v153 = vpack.c.b16 %v146, %v145
    %vm161 = vcmask 916480
    %v163 = vsel %vm161, %v89, 0
    %v166 = vsel %vm161, %v90, 0
    %168 = vmatprep.subr.bf16.mxu0 0
    %169 = vmatpush1.bf16.msra.mxu0 0
    %170 = vmatprep.subr.bf16.mxu0 0
    %171 = vmatpush1.bf16.msra.mxu0 %v153
    %172 = vmatprep.subr.bf16.mxu0 0
    %173 = vmatpush1.bf16.msra.mxu0 %v152
    %174 = vmatprep.subr.bf16.mxu0 0
    %175 = vmatpush1.bf16.msra.mxu0 %v151
    %176 = vmatprep.subr.bf16.mxu0 0
    %177 = vmatpush1.bf16.msra.mxu0 %v150
    %178 = vmatprep.subr.bf16.mxu0 0
    %179 = vmatpush1.bf16.msra.mxu0 %v149
    %180 = vmatprep.subr.bf16.mxu0 0
    %181 = vmatpush1.bf16.msra.mxu0 %v148
    %182 = vmatprep.subr.bf16.mxu0 0
    %183 = vmatpush1.bf16.msra.mxu0 %v147
    %184 = vmatprep.subr.bf16.mxu0 0
    %185 = vmatpush2.bf16.msra.mxu0 0
    %186 = vmatprep.subr.bf16.mxu0 0
    %187 = vmatpush2.bf16.msra.mxu0 0
    %188 = vmatprep.subr.bf16.mxu0 0
    %189 = vmatpush2.bf16.msra.mxu0 0
    %190 = vmatprep.subr.bf16.mxu0 0
    %191 = vmatpush2.bf16.msra.mxu0 0
    %192 = vmatprep.subr.bf16.mxu0 0
    %193 = vmatpush2.bf16.msra.mxu0 0
    %194 = vmatprep.subr.bf16.mxu0 0
    %195 = vmatpush2.bf16.msra.mxu0 0
    %196 = vmatprep.subr.bf16.mxu0 0
    %197 = vmatpush2.bf16.msra.mxu0 0
    %198 = vmatprep.subr.bf16.mxu0 0
    %199 = vmatpush2.bf16.msra.mxu0 0
    %200 = vmatprep.mubr.bf16.mxu0 0
    %201 = vmatmul.mubr.bf16.gmra.mxu0 %v163
    %v202 = vpop.f32.mrf.mxu0
    %v203 = vadd.f32 %v114, %v202
    %v204 = vpop.f32.mrf.mxu0
    %v205 = vpop.f32.mrf.mxu0
    %v206 = vadd.f32 %v116, %v205
    %v207 = vpop.f32.mrf.mxu0
    %208 = vmatprep.mubr.bf16.mxu0 0
    %209 = vmatmul.mubr.bf16.gmra.mxu0 %v166
    %v210 = vpop.f32.mrf.mxu0
    %v211 = vadd.f32 %v114, %v210
    %v212 = vpop.f32.mrf.mxu0
    %v213 = vpop.f32.mrf.mxu0
    %v214 = vadd.f32 %v116, %v213
    %v215 = vpop.f32.mrf.mxu0
    %216 = vdwg.mxu0
    %v217 = vld [vmem:[#allocation2] ss:$0 sm:$0xff]
    %v218 = vld [vmem:[#allocation2 + $0x1] ss:$0 sm:$0xff]
    %vm219 = vcmask 261120
    %v220 = vsel %vm219, %v203, 0.0
    %221 = vadd.xlane.f32.xlu0 %v220
    %v222 = vpop.xlane.xlu0 %221
    %v223 = vsel %vm219, %v206, 0.0
    %224 = vadd.xlane.f32.xlu0 %v223
    %v225 = vpop.xlane.xlu0 %224
    %v226 = vsel %vm219, %v211, 0.0
    %227 = vadd.xlane.f32.xlu0 %v226
    %v228 = vpop.xlane.xlu0 %227
    %v229 = vsel %vm219, %v214, 0.0
    %230 = vadd.xlane.f32.xlu0 %v229
    %v231 = vpop.xlane.xlu0 %230
    %v232 = vrcp.pop 32.0
    %v233 = vmul.f32 %v222, %v232
    %v234 = vmul.f32 %v225, %v232
    %v235 = vmul.f32 %v228, %v232
    %v236 = vmul.f32 %v231, %v232
    %v237 = vsub.f32 %v203, %v233
    %v238 = vsub.f32 %v206, %v234
    %v239 = vsub.f32 %v211, %v235
    %v240 = vsub.f32 %v214, %v236
    %v241 = vmul.f32 %v237, %v237
    %v242 = vmul.f32 %v238, %v238
    %v243 = vmul.f32 %v239, %v239
    %v244 = vmul.f32 %v240, %v240
    %v245 = vsel %vm219, %v241, 0.0
    %246 = vadd.xlane.f32.xlu0 %v245
    %v247 = vpop.xlane.xlu0 %246
    %v248 = vsel %vm219, %v242, 0.0
    %249 = vadd.xlane.f32.xlu0 %v248
    %v250 = vpop.xlane.xlu0 %249
    %v251 = vsel %vm219, %v243, 0.0
    %252 = vadd.xlane.f32.xlu0 %v251
    %v253 = vpop.xlane.xlu0 %252
    %v254 = vsel %vm219, %v244, 0.0
    %255 = vadd.xlane.f32.xlu0 %v254
    %v256 = vpop.xlane.xlu0 %255
    %v257 = vmul.f32 %v247, %v232
    %v258 = vmul.f32 %v250, %v232
    %v259 = vmul.f32 %v253, %v232
    %v260 = vmul.f32 %v256, %v232
    %v261 = vadd.f32 %v257, 1e-12
    %v262 = vadd.f32 %v258, 1e-12
    %v263 = vadd.f32 %v259, 1e-12
    %v264 = vadd.f32 %v260, 1e-12
    %v265 = vrsqrt.pop %v261
    %v266 = vrsqrt.pop %v262
    %v267 = vrsqrt.pop %v263
    %v268 = vrsqrt.pop %v264
    %v269 = vmul.f32 %v237, %v265
    %v270 = vmul.f32 %v238, %v266
    %v271 = vmul.f32 %v239, %v267
    %v272 = vmul.f32 %v240, %v268
    %v273 = vmul.f32 %v269, %v217
    %v274 = vmul.f32 %v270, %v217
    %v275 = vmul.f32 %v271, %v217
    %v276 = vmul.f32 %v272, %v217
    %v277 = vadd.f32 %v273, %v218
    %v278 = vadd.f32 %v274, %v218
    %v279 = vadd.f32 %v275, %v218
    %v280 = vadd.f32 %v276, %v218
    %v281 = vld [vmem:[%s1] sm:$0x1]
    %vm282 = vcmp.gt.f32.partialorder %v281, 0.5
    %v283 = vlaneseq
    %v284 = vshrl.u32 %v283, 7
    %v285 = vadd.s32 %v284, 8
    %v286 = vadd.s32 %v284, 16
    %v287 = vadd.s32 %v284, 24
    %v288 = vshra.s32 %v284, 4
    %v289 = vshra.s32 %v285, 4
    %v290 = vshra.s32 %v286, 4
    %v291 = vshra.s32 %v287, 4
    %v292 = vshra.s32 %v68, 4
    %vm293 = vcmp.eq.s32.totalorder %v288, %v292
    %vm294 = vcmp.eq.s32.totalorder %v289, %v292
    %vm295 = vcmp.eq.s32.totalorder %v290, %v292
    %vm296 = vcmp.eq.s32.totalorder %v291, %v292
    %v297 = vsel %vm282, 1, 0
    %v298 = vlaneseq
    %v299 = vshrl.u32 %v298, 7
    %v300 = vsub.s32 0, %v299
    %v301 = vrot.slane %v297, %v300
    %vm302 = vcmp.eq.s32.totalorder %v301, 1
    %vm303 = vmand %vm293, %vm302
    %vm304 = vmand %vm294, %vm302
    %vm305 = vmand %vm295, %vm302
    %vm306 = vmand %vm296, %vm302
    %v307 = vsel %vm303, 0.0, -1e+09
    %v308 = vsel %vm304, 0.0, -1e+09
    %v309 = vsel %vm305, 0.0, -1e+09
    %v310 = vsel %vm306, 0.0, -1e+09
    %v311 = vld [vmem:[#allocation5 + $0x38] sm:$0xf]
    %v312 = vld [vmem:[#allocation5 + $0x3c] sm:$0xf]
    %v313 = vld [vmem:[#allocation5 + $0x40] sm:$0xf]
    %v314 = vld [vmem:[#allocation5 + $0x44] sm:$0xf]
    %v315 = vld [vmem:[#allocation5 + $0x48] sm:$0xf]
    %v316 = vld [vmem:[#allocation5 + $0x4c] sm:$0xf]
    %v317 = vld [vmem:[#allocation5 + $0x50] sm:$0xf]
    %v318 = vld [vmem:[#allocation5 + $0x54] sm:$0xf]
    %v319 = vld [vmem:[#allocation5 + $0x58] sm:$0xf]
    %v320 = vld [vmem:[#allocation5 + $0x5c] sm:$0xf]
    %v321 = vld [vmem:[#allocation5 + $0x60] sm:$0xf]
    %v322 = vld [vmem:[#allocation5 + $0x64] sm:$0xf]
    %v323 = vld [vmem:[#allocation5 + $0x68] sm:$0xf]
    %v324 = vld [vmem:[#allocation5 + $0x6c] sm:$0xf]
    %v325 = vld [vmem:[#allocation5 + $0x70] sm:$0xf]
    %v326 = vld [vmem:[#allocation5 + $0x74] sm:$0xf]
    %v327 = vld [vmem:[#allocation5 + $0x78] sm:$0xf]
    %v328 = vld [vmem:[#allocation5 + $0x7c] sm:$0xf]
    %v329 = vld [vmem:[#allocation5 + $0x80] sm:$0xf]
    %v330 = vld [vmem:[#allocation5 + $0x84] sm:$0xf]
    %v331 = vpack.c.bf16 %v278, %v277
    %v332 = vpack.c.bf16 %v280, %v279
    %v333 = vld [vmem:[#allocation2 + $0x32] ss:$0 sm:$0xff]
    %v338 = vunpack.c.l.b16 %v311
    %v339 = vunpack.c.l.b16 %v312
    %v340 = vunpack.c.l.b16 %v313
    %v341 = vunpack.c.l.b16 %v314
    %v342 = vpack.c.b16 %v339, %v338
    %v343 = vpack.c.b16 %v341, %v340
    %v347 = vsel %vm219, %v331, 0
    %v350 = vsel %vm219, %v332, 0
    %352 = vmatprep.subr.bf16.mxu0 0
    %353 = vmatpush1.bf16.msra.mxu0 0
    %354 = vmatprep.subr.bf16.mxu0 0
    %355 = vmatpush1.bf16.msra.mxu0 0
    %356 = vmatprep.subr.bf16.mxu0 0
    %357 = vmatpush1.bf16.msra.mxu0 0
    %358 = vmatprep.subr.bf16.mxu0 0
    %359 = vmatpush1.bf16.msra.mxu0 0
    %360 = vmatprep.subr.bf16.mxu0 0
    %361 = vmatpush1.bf16.msra.mxu0 0
    %362 = vmatprep.subr.bf16.mxu0 0
    %363 = vmatpush1.bf16.msra.mxu0 0
    %364 = vmatprep.subr.bf16.mxu0 0
    %365 = vmatpush1.bf16.msra.mxu0 %v343
    %366 = vmatprep.subr.bf16.mxu0 0
    %367 = vmatpush1.bf16.msra.mxu0 %v342
    %368 = vmatprep.subr.bf16.mxu0 0
    %369 = vmatpush2.bf16.msra.mxu0 0
    %370 = vmatprep.subr.bf16.mxu0 0
    %371 = vmatpush2.bf16.msra.mxu0 0
    %372 = vmatprep.subr.bf16.mxu0 0
    %373 = vmatpush2.bf16.msra.mxu0 0
    %374 = vmatprep.subr.bf16.mxu0 0
    %375 = vmatpush2.bf16.msra.mxu0 0
    %376 = vmatprep.subr.bf16.mxu0 0
    %377 = vmatpush2.bf16.msra.mxu0 0
    %378 = vmatprep.subr.bf16.mxu0 0
    %379 = vmatpush2.bf16.msra.mxu0 0
    %380 = vmatprep.subr.bf16.mxu0 0
    %381 = vmatpush2.bf16.msra.mxu0 0
    %382 = vmatprep.subr.bf16.mxu0 0
    %383 = vmatpush2.bf16.msra.mxu0 0
    %384 = vmatprep.mubr.bf16.mxu0 0
    %385 = vmatmul.mubr.bf16.gmra.mxu0 %v347
    %v386 = vpop.f32.mrf.mxu0
    %v387 = vadd.f32 %v333, %v386
    %v388 = vpop.f32.mrf.mxu0
    %v389 = vpop.f32.mrf.mxu0
    %v390 = vadd.f32 %v333, %v389
    %v391 = vpop.f32.mrf.mxu0
    %392 = vmatprep.mubr.bf16.mxu0 0
    %393 = vmatmul.mubr.bf16.gmra.mxu0 %v350
    %v394 = vpop.f32.mrf.mxu0
    %v395 = vadd.f32 %v333, %v394
    %v396 = vpop.f32.mrf.mxu0
    %v397 = vpop.f32.mrf.mxu0
    %v398 = vadd.f32 %v333, %v397
    %v399 = vpop.f32.mrf.mxu0
    %400 = vdwg.mxu0
    %v401 = vpack.c.bf16 %v390, %v387
    %v402 = vpack.c.bf16 %v398, %v395
    %405 = vrot.lane.b32.xlu0 %v401, 96
    %v406 = vpop.permute.xlu0 %405
    %407 = vrot.lane.b32.xlu0 %v402, 96
    %v408 = vpop.permute.xlu0 %407
    %vm409 = vcmask 130048
    %v411 = vsel %vm409, %v401, 0
    %v414 = vsel %vm409, %v402, 0
    %v417 = vsel %vm409, %v406, 0
    %v420 = vsel %vm409, %v408, 0
    %422 = vmatprep.subr.bf16.mxu0 0
    %423 = vmatpush1.bf16.xpose.msra.mxu0 0
    %424 = vmatprep.subr.bf16.mxu0 0
    %425 = vmatpush1.bf16.xpose.msra.mxu0 0
    %426 = vmatprep.subr.bf16.mxu0 0
    %427 = vmatpush1.bf16.xpose.msra.mxu0 0
    %428 = vmatprep.subr.bf16.mxu0 0
    %429 = vmatpush1.bf16.xpose.msra.mxu0 0
    %430 = vmatprep.subr.bf16.mxu0 0
    %431 = vmatpush1.bf16.xpose.msra.mxu0 0
    %432 = vmatprep.subr.bf16.mxu0 0
    %433 = vmatpush1.bf16.xpose.msra.mxu0 0
    %434 = vmatprep.subr.bf16.mxu0 0
    %435 = vmatpush1.bf16.xpose.msra.mxu0 %v420
    %436 = vmatprep.subr.bf16.mxu0 0
    %437 = vmatpush1.bf16.xpose.msra.mxu0 %v417
    %438 = vmatprep.subr.bf16.mxu0 0
    %439 = vmatpush2.bf16.xpose.msra.mxu0 0
    %440 = vmatprep.subr.bf16.mxu0 0
    %441 = vmatpush2.bf16.xpose.msra.mxu0 0
    %442 = vmatprep.subr.bf16.mxu0 0
    %443 = vmatpush2.bf16.xpose.msra.mxu0 0
    %444 = vmatprep.subr.bf16.mxu0 0
    %445 = vmatpush2.bf16.xpose.msra.mxu0 0
    %446 = vmatprep.subr.bf16.mxu0 0
    %447 = vmatpush2.bf16.xpose.msra.mxu0 0
    %448 = vmatprep.subr.bf16.mxu0 0
    %449 = vmatpush2.bf16.xpose.msra.mxu0 0
    %450 = vmatprep.subr.bf16.mxu0 0
    %451 = vmatpush2.bf16.xpose.msra.mxu0 0
    %452 = vmatprep.subr.bf16.mxu0 0
    %453 = vmatpush2.bf16.xpose.msra.mxu0 0
    %454 = vmatprep.mubr.bf16.mxu0 0
    %455 = vmatmul.mubr.bf16.gmra.mxu0 %v411
    %v456 = vpop.f32.mrf.mxu0
    %v457 = vadd.f32 0.0, %v456
    %v458 = vpop.f32.mrf.mxu0
    %v459 = vpop.f32.mrf.mxu0
    %v460 = vadd.f32 0.0, %v459
    %v461 = vpop.f32.mrf.mxu0
    %462 = vmatprep.mubr.bf16.mxu0 0
    %463 = vmatmul.mubr.bf16.gmra.mxu0 %v414
    %v464 = vpop.f32.mrf.mxu0
    %v465 = vadd.f32 0.0, %v464
    %v466 = vpop.f32.mrf.mxu0
    %v467 = vpop.f32.mrf.mxu0
    %v468 = vadd.f32 0.0, %v467
    %v469 = vpop.f32.mrf.mxu0
    %470 = vdwg.mxu0
    %v471 = vmul.f32 %v457, 0.25
    %v472 = vmul.f32 %v460, 0.25
    %v473 = vmul.f32 %v465, 0.25
    %v474 = vmul.f32 %v468, 0.25
    %v475 = vadd.f32 %v471, %v307
    %v476 = vadd.f32 %v472, %v308
    %v477 = vadd.f32 %v473, %v309
    %v478 = vadd.f32 %v474, %v310
    %v479 = vsel %vm219, %v475, -inf
    %480 = vmax.xlane.f32.xlu0 %v479
    %v481 = vpop.xlane.xlu0 %480
    %v482 = vsel %vm219, %v476, -inf
    %483 = vmax.xlane.f32.xlu0 %v482
    %v484 = vpop.xlane.xlu0 %483
    %v485 = vsel %vm219, %v477, -inf
    %486 = vmax.xlane.f32.xlu0 %v485
    %v487 = vpop.xlane.xlu0 %486
    %v488 = vsel %vm219, %v478, -inf
    %489 = vmax.xlane.f32.xlu0 %v488
    %v490 = vpop.xlane.xlu0 %489
    %v491 = vsub.f32 %v475, %v481
    %v492 = vsub.f32 %v476, %v484
    %v493 = vsub.f32 %v477, %v487
    %v494 = vsub.f32 %v478, %v490
    %v495 = vmul.f32 %v491, 1.442695
    %v496 = vpow.pop %v495
    %v497 = vmul.f32 %v492, 1.442695
    %v498 = vpow.pop %v497
    %v499 = vmul.f32 %v493, 1.442695
    %v500 = vpow.pop %v499
    %v501 = vmul.f32 %v494, 1.442695
    %v502 = vpow.pop %v501
    %v503 = vsel %vm219, %v496, 0.0
    %504 = vadd.xlane.f32.xlu0 %v503
    %v505 = vpop.xlane.xlu0 %504
    %v506 = vsel %vm219, %v498, 0.0
    %507 = vadd.xlane.f32.xlu0 %v506
    %v508 = vpop.xlane.xlu0 %507
    %v509 = vsel %vm219, %v500, 0.0
    %510 = vadd.xlane.f32.xlu0 %v509
    %v511 = vpop.xlane.xlu0 %510
    %v512 = vsel %vm219, %v502, 0.0
    %513 = vadd.xlane.f32.xlu0 %v512
    %v514 = vpop.xlane.xlu0 %513
    %v515 = vrcp.pop %v505
    %v516 = vrcp.pop %v508
    %v517 = vrcp.pop %v511
    %v518 = vrcp.pop %v514
    %v519 = vmul.f32 %v496, %v515
    %v520 = vmul.f32 %v498, %v516
    %v521 = vmul.f32 %v500, %v517
    %v522 = vmul.f32 %v502, %v518
    %v523 = vpack.c.bf16 %v520, %v519
    %v524 = vpack.c.bf16 %v522, %v521
    %525 = vrot.lane.b32.xlu0 %v401, 64
    %v526 = vpop.permute.xlu0 %525
    %527 = vrot.lane.b32.xlu0 %v402, 64
    %v528 = vpop.permute.xlu0 %527
    %v532 = vsel %vm219, %v523, 0
    %v535 = vsel %vm219, %v524, 0
    %537 = vmatprep.subr.bf16.mxu0 0
    %538 = vmatpush1.bf16.msra.mxu0 0
    %539 = vmatprep.subr.bf16.mxu0 0
    %540 = vmatpush1.bf16.msra.mxu0 0
    %541 = vmatprep.subr.bf16.mxu0 0
    %542 = vmatpush1.bf16.msra.mxu0 0
    %543 = vmatprep.subr.bf16.mxu0 0
    %544 = vmatpush1.bf16.msra.mxu0 0
    %545 = vmatprep.subr.bf16.mxu0 0
    %546 = vmatpush1.bf16.msra.mxu0 0
    %547 = vmatprep.subr.bf16.mxu0 0
    %548 = vmatpush1.bf16.msra.mxu0 0
    %549 = vmatprep.subr.bf16.mxu0 0
    %550 = vmatpush1.bf16.msra.mxu0 %v528
    %551 = vmatprep.subr.bf16.mxu0 0
    %552 = vmatpush1.bf16.msra.mxu0 %v526
    %553 = vmatprep.subr.bf16.mxu0 0
    %554 = vmatpush2.bf16.msra.mxu0 0
    %555 = vmatprep.subr.bf16.mxu0 0
    %556 = vmatpush2.bf16.msra.mxu0 0
    %557 = vmatprep.subr.bf16.mxu0 0
    %558 = vmatpush2.bf16.msra.mxu0 0
    %559 = vmatprep.subr.bf16.mxu0 0
    %560 = vmatpush2.bf16.msra.mxu0 0
    %561 = vmatprep.subr.bf16.mxu0 0
    %562 = vmatpush2.bf16.msra.mxu0 0
    %563 = vmatprep.subr.bf16.mxu0 0
    %564 = vmatpush2.bf16.msra.mxu0 0
    %565 = vmatprep.subr.bf16.mxu0 0
    %566 = vmatpush2.bf16.msra.mxu0 0
    %567 = vmatprep.subr.bf16.mxu0 0
    %568 = vmatpush2.bf16.msra.mxu0 0
    %569 = vmatprep.mubr.bf16.mxu0 0
    %570 = vmatmul.mubr.bf16.gmra.mxu0 %v532
    %v571 = vpop.f32.mrf.mxu0
    %v572 = vadd.f32 0.0, %v571
    %v573 = vpop.f32.mrf.mxu0
    %v574 = vpop.f32.mrf.mxu0
    %v575 = vadd.f32 0.0, %v574
    %v576 = vpop.f32.mrf.mxu0
    %577 = vmatprep.mubr.bf16.mxu0 0
    %578 = vmatmul.mubr.bf16.gmra.mxu0 %v535
    %v579 = vpop.f32.mrf.mxu0
    %v580 = vadd.f32 0.0, %v579
    %v581 = vpop.f32.mrf.mxu0
    %v582 = vpop.f32.mrf.mxu0
    %v583 = vadd.f32 0.0, %v582
    %v584 = vpop.f32.mrf.mxu0
    %585 = vdwg.mxu0
    %v586 = vpack.c.bf16 %v575, %v572
    %v587 = vpack.c.bf16 %v583, %v580
    %588 = vrot.lane.b32.xlu0 %v401, 112
    %v589 = vpop.permute.xlu0 %588
    %590 = vrot.lane.b32.xlu0 %v402, 112
    %v591 = vpop.permute.xlu0 %590
    %592 = vrot.lane.b32.xlu0 %v401, 80
    %v593 = vpop.permute.xlu0 %592
    %594 = vrot.lane.b32.xlu0 %v402, 80
    %v595 = vpop.permute.xlu0 %594
    %v597 = vsel %vm409, %v589, 0
    %v600 = vsel %vm409, %v591, 0
    %v603 = vsel %vm409, %v593, 0
    %v606 = vsel %vm409, %v595, 0
    %608 = vmatprep.subr.bf16.mxu0 0
    %609 = vmatpush1.bf16.xpose.msra.mxu0 0
    %610 = vmatprep.subr.bf16.mxu0 0
    %611 = vmatpush1.bf16.xpose.msra.mxu0 0
    %612 = vmatprep.subr.bf16.mxu0 0
    %613 = vmatpush1.bf16.xpose.msra.mxu0 0
    %614 = vmatprep.subr.bf16.mxu0 0
    %615 = vmatpush1.bf16.xpose.msra.mxu0 0
    %616 = vmatprep.subr.bf16.mxu0 0
    %617 = vmatpush1.bf16.xpose.msra.mxu0 0
    %618 = vmatprep.subr.bf16.mxu0 0
    %619 = vmatpush1.bf16.xpose.msra.mxu0 0
    %620 = vmatprep.subr.bf16.mxu0 0
    %621 = vmatpush1.bf16.xpose.msra.mxu0 %v606
    %622 = vmatprep.subr.bf16.mxu0 0
    %623 = vmatpush1.bf16.xpose.msra.mxu0 %v603
    %624 = vmatprep.subr.bf16.mxu0 0
    %625 = vmatpush2.bf16.xpose.msra.mxu0 0
    %626 = vmatprep.subr.bf16.mxu0 0
    %627 = vmatpush2.bf16.xpose.msra.mxu0 0
    %628 = vmatprep.subr.bf16.mxu0 0
    %629 = vmatpush2.bf16.xpose.msra.mxu0 0
    %630 = vmatprep.subr.bf16.mxu0 0
    %631 = vmatpush2.bf16.xpose.msra.mxu0 0
    %632 = vmatprep.subr.bf16.mxu0 0
    %633 = vmatpush2.bf16.xpose.msra.mxu0 0
    %634 = vmatprep.subr.bf16.mxu0 0
    %635 = vmatpush2.bf16.xpose.msra.mxu0 0
    %636 = vmatprep.subr.bf16.mxu0 0
    %637 = vmatpush2.bf16.xpose.msra.mxu0 0
    %638 = vmatprep.subr.bf16.mxu0 0
    %639 = vmatpush2.bf16.xpose.msra.mxu0 0
    %640 = vmatprep.mubr.bf16.mxu0 0
    %641 = vmatmul.mubr.bf16.gmra.mxu0 %v597
    %v642 = vpop.f32.mrf.mxu0
    %v643 = vadd.f32 0.0, %v642
    %v644 = vpop.f32.mrf.mxu0
    %v645 = vpop.f32.mrf.mxu0
    %v646 = vadd.f32 0.0, %v645
    %v647 = vpop.f32.mrf.mxu0
    %648 = vmatprep.mubr.bf16.mxu0 0
    %649 = vmatmul.mubr.bf16.gmra.mxu0 %v600
    %v650 = vpop.f32.mrf.mxu0
    %v651 = vadd.f32 0.0, %v650
    %v652 = vpop.f32.mrf.mxu0
    %v653 = vpop.f32.mrf.mxu0
    %v654 = vadd.f32 0.0, %v653
    %v655 = vpop.f32.mrf.mxu0
    %656 = vdwg.mxu0
    %v657 = vmul.f32 %v643, 0.25
    %v658 = vmul.f32 %v646, 0.25
    %v659 = vmul.f32 %v651, 0.25
    %v660 = vmul.f32 %v654, 0.25
    %v661 = vadd.f32 %v657, %v307
    %v662 = vadd.f32 %v658, %v308
    %v663 = vadd.f32 %v659, %v309
    %v664 = vadd.f32 %v660, %v310
    %v665 = vsel %vm219, %v661, -inf
    %666 = vmax.xlane.f32.xlu0 %v665
    %v667 = vpop.xlane.xlu0 %666
    %v668 = vsel %vm219, %v662, -inf
    %669 = vmax.xlane.f32.xlu0 %v668
    %v670 = vpop.xlane.xlu0 %669
    %v671 = vsel %vm219, %v663, -inf
    %672 = vmax.xlane.f32.xlu0 %v671
    %v673 = vpop.xlane.xlu0 %672
    %v674 = vsel %vm219, %v664, -inf
    %675 = vmax.xlane.f32.xlu0 %v674
    %v676 = vpop.xlane.xlu0 %675
    %v677 = vsub.f32 %v661, %v667
    %v678 = vsub.f32 %v662, %v670
    %v679 = vsub.f32 %v663, %v673
    %v680 = vsub.f32 %v664, %v676
    %v681 = vmul.f32 %v677, 1.442695
    %v682 = vpow.pop %v681
    %v683 = vmul.f32 %v678, 1.442695
    %v684 = vpow.pop %v683
    %v685 = vmul.f32 %v679, 1.442695
    %v686 = vpow.pop %v685
    %v687 = vmul.f32 %v680, 1.442695
    %v688 = vpow.pop %v687
    %v689 = vsel %vm219, %v682, 0.0
    %690 = vadd.xlane.f32.xlu0 %v689
    %v691 = vpop.xlane.xlu0 %690
    %v692 = vsel %vm219, %v684, 0.0
    %693 = vadd.xlane.f32.xlu0 %v692
    %v694 = vpop.xlane.xlu0 %693
    %v695 = vsel %vm219, %v686, 0.0
    %696 = vadd.xlane.f32.xlu0 %v695
    %v697 = vpop.xlane.xlu0 %696
    %v698 = vsel %vm219, %v688, 0.0
    %699 = vadd.xlane.f32.xlu0 %v698
    %v700 = vpop.xlane.xlu0 %699
    %v701 = vrcp.pop %v691
    %v702 = vrcp.pop %v694
    %v703 = vrcp.pop %v697
    %v704 = vrcp.pop %v700
    %v705 = vmul.f32 %v682, %v701
    %v706 = vmul.f32 %v684, %v702
    %v707 = vmul.f32 %v686, %v703
    %v708 = vmul.f32 %v688, %v704
    %v709 = vpack.c.bf16 %v706, %v705
    %v710 = vpack.c.bf16 %v708, %v707
    %711 = vrot.lane.b32.xlu0 %v401, 48
    %v712 = vpop.permute.xlu0 %711
    %713 = vrot.lane.b32.xlu0 %v402, 48
    %v714 = vpop.permute.xlu0 %713
    %v718 = vsel %vm219, %v709, 0
    %v721 = vsel %vm219, %v710, 0
    %723 = vmatprep.subr.bf16.mxu0 0
    %724 = vmatpush1.bf16.msra.mxu0 0
    %725 = vmatprep.subr.bf16.mxu0 0
    %726 = vmatpush1.bf16.msra.mxu0 0
    %727 = vmatprep.subr.bf16.mxu0 0
    %728 = vmatpush1.bf16.msra.mxu0 0
    %729 = vmatprep.subr.bf16.mxu0 0
    %730 = vmatpush1.bf16.msra.mxu0 0
    %731 = vmatprep.subr.bf16.mxu0 0
    %732 = vmatpush1.bf16.msra.mxu0 0
    %733 = vmatprep.subr.bf16.mxu0 0
    %734 = vmatpush1.bf16.msra.mxu0 0
    %735 = vmatprep.subr.bf16.mxu0 0
    %736 = vmatpush1.bf16.msra.mxu0 %v714
    %737 = vmatprep.subr.bf16.mxu0 0
    %738 = vmatpush1.bf16.msra.mxu0 %v712
    %739 = vmatprep.subr.bf16.mxu0 0
    %740 = vmatpush2.bf16.msra.mxu0 0
    %741 = vmatprep.subr.bf16.mxu0 0
    %742 = vmatpush2.bf16.msra.mxu0 0
    %743 = vmatprep.subr.bf16.mxu0 0
    %744 = vmatpush2.bf16.msra.mxu0 0
    %745 = vmatprep.subr.bf16.mxu0 0
    %746 = vmatpush2.bf16.msra.mxu0 0
    %747 = vmatprep.subr.bf16.mxu0 0
    %748 = vmatpush2.bf16.msra.mxu0 0
    %749 = vmatprep.subr.bf16.mxu0 0
    %750 = vmatpush2.bf16.msra.mxu0 0
    %751 = vmatprep.subr.bf16.mxu0 0
    %752 = vmatpush2.bf16.msra.mxu0 0
    %753 = vmatprep.subr.bf16.mxu0 0
    %754 = vmatpush2.bf16.msra.mxu0 0
    %755 = vmatprep.mubr.bf16.mxu0 0
    %756 = vmatmul.mubr.bf16.gmra.mxu0 %v718
    %v757 = vpop.f32.mrf.mxu0
    %v758 = vadd.f32 0.0, %v757
    %v759 = vpop.f32.mrf.mxu0
    %v760 = vpop.f32.mrf.mxu0
    %v761 = vadd.f32 0.0, %v760
    %v762 = vpop.f32.mrf.mxu0
    %763 = vmatprep.mubr.bf16.mxu0 0
    %764 = vmatmul.mubr.bf16.gmra.mxu0 %v721
    %v765 = vpop.f32.mrf.mxu0
    %v766 = vadd.f32 0.0, %v765
    %v767 = vpop.f32.mrf.mxu0
    %v768 = vpop.f32.mrf.mxu0
    %v769 = vadd.f32 0.0, %v768
    %v770 = vpop.f32.mrf.mxu0
    %771 = vdwg.mxu0
    %v772 = vpack.c.bf16 %v761, %v758
    %v773 = vpack.c.bf16 %v769, %v766
    %v776 = vunpack.c.l.b16 %v317
    %v777 = vunpack.c.l.b16 %v318
    %v778 = vpack.c.b16 %v777, %v776
    %v781 = vsel %vm409, %v772, 0
    %v784 = vsel %vm409, %v773, 0
    %786 = vmatprep.subr.bf16.mxu0 0
    %787 = vmatpush1.bf16.msra.mxu0 0
    %788 = vmatprep.subr.bf16.mxu0 0
    %789 = vmatpush1.bf16.msra.mxu0 0
    %790 = vmatprep.subr.bf16.mxu0 0
    %791 = vmatpush1.bf16.msra.mxu0 0
    %792 = vmatprep.subr.bf16.mxu0 0
    %793 = vmatpush1.bf16.msra.mxu0 0
    %794 = vmatprep.subr.bf16.mxu0 0
    %795 = vmatpush1.bf16.msra.mxu0 0
    %796 = vmatprep.subr.bf16.mxu0 0
    %797 = vmatpush1.bf16.msra.mxu0 0
    %798 = vmatprep.subr.bf16.mxu0 0
    %799 = vmatpush1.bf16.msra.mxu0 0
    %800 = vmatprep.subr.bf16.mxu0 0
    %801 = vmatpush1.bf16.msra.mxu0 %v778
    %802 = vmatprep.subr.bf16.mxu0 0
    %803 = vmatpush2.bf16.msra.mxu0 0
    %804 = vmatprep.subr.bf16.mxu0 0
    %805 = vmatpush2.bf16.msra.mxu0 0
    %806 = vmatprep.subr.bf16.mxu0 0
    %807 = vmatpush2.bf16.msra.mxu0 0
    %808 = vmatprep.subr.bf16.mxu0 0
    %809 = vmatpush2.bf16.msra.mxu0 0
    %810 = vmatprep.subr.bf16.mxu0 0
    %811 = vmatpush2.bf16.msra.mxu0 0
    %812 = vmatprep.subr.bf16.mxu0 0
    %813 = vmatpush2.bf16.msra.mxu0 0
    %814 = vmatprep.subr.bf16.mxu0 0
    %815 = vmatpush2.bf16.msra.mxu0 0
    %816 = vmatprep.subr.bf16.mxu0 0
    %817 = vmatpush2.bf16.msra.mxu0 0
    %818 = vmatprep.mubr.bf16.mxu0 0
    %819 = vmatmul.mubr.bf16.gmra.mxu0 %v781
    %v820 = vpop.f32.mrf.mxu0
    %v821 = vadd.f32 0.0, %v820
    %v822 = vpop.f32.mrf.mxu0
    %v823 = vpop.f32.mrf.mxu0
    %v824 = vadd.f32 0.0, %v823
    %v825 = vpop.f32.mrf.mxu0
    %826 = vmatprep.mubr.bf16.mxu0 0
    %827 = vmatmul.mubr.bf16.gmra.mxu0 %v784
    %v828 = vpop.f32.mrf.mxu0
    %v829 = vadd.f32 0.0, %v828
    %v830 = vpop.f32.mrf.mxu0
    %v831 = vpop.f32.mrf.mxu0
    %v832 = vadd.f32 0.0, %v831
    %v833 = vpop.f32.mrf.mxu0
    %834 = vdwg.mxu0
    %v837 = vunpack.c.l.b16 %v315
    %v838 = vunpack.c.l.b16 %v316
    %v839 = vpack.c.b16 %v838, %v837
    %v842 = vsel %vm409, %v586, 0
    %v845 = vsel %vm409, %v587, 0
    %847 = vmatprep.subr.bf16.mxu0 0
    %848 = vmatpush1.bf16.msra.mxu0 0
    %849 = vmatprep.subr.bf16.mxu0 0
    %850 = vmatpush1.bf16.msra.mxu0 0
    %851 = vmatprep.subr.bf16.mxu0 0
    %852 = vmatpush1.bf16.msra.mxu0 0
    %853 = vmatprep.subr.bf16.mxu0 0
    %854 = vmatpush1.bf16.msra.mxu0 0
    %855 = vmatprep.subr.bf16.mxu0 0
    %856 = vmatpush1.bf16.msra.mxu0 0
    %857 = vmatprep.subr.bf16.mxu0 0
    %858 = vmatpush1.bf16.msra.mxu0 0
    %859 = vmatprep.subr.bf16.mxu0 0
    %860 = vmatpush1.bf16.msra.mxu0 0
    %861 = vmatprep.subr.bf16.mxu0 0
    %862 = vmatpush1.bf16.msra.mxu0 %v839
    %863 = vmatprep.subr.bf16.mxu0 0
    %864 = vmatpush2.bf16.msra.mxu0 0
    %865 = vmatprep.subr.bf16.mxu0 0
    %866 = vmatpush2.bf16.msra.mxu0 0
    %867 = vmatprep.subr.bf16.mxu0 0
    %868 = vmatpush2.bf16.msra.mxu0 0
    %869 = vmatprep.subr.bf16.mxu0 0
    %870 = vmatpush2.bf16.msra.mxu0 0
    %871 = vmatprep.subr.bf16.mxu0 0
    %872 = vmatpush2.bf16.msra.mxu0 0
    %873 = vmatprep.subr.bf16.mxu0 0
    %874 = vmatpush2.bf16.msra.mxu0 0
    %875 = vmatprep.subr.bf16.mxu0 0
    %876 = vmatpush2.bf16.msra.mxu0 0
    %877 = vmatprep.subr.bf16.mxu0 0
    %878 = vmatpush2.bf16.msra.mxu0 0
    %879 = vmatprep.mubr.bf16.mxu0 0
    %880 = vmatmul.mubr.bf16.gmra.mxu0 %v842
    %v881 = vpop.f32.mrf.mxu0
    %v882 = vadd.f32 %v821, %v881
    %v883 = vpop.f32.mrf.mxu0
    %v884 = vpop.f32.mrf.mxu0
    %v885 = vadd.f32 %v824, %v884
    %v886 = vpop.f32.mrf.mxu0
    %887 = vmatprep.mubr.bf16.mxu0 0
    %888 = vmatmul.mubr.bf16.gmra.mxu0 %v845
    %v889 = vpop.f32.mrf.mxu0
    %v890 = vadd.f32 %v829, %v889
    %v891 = vpop.f32.mrf.mxu0
    %v892 = vpop.f32.mrf.mxu0
    %v893 = vadd.f32 %v832, %v892
    %v894 = vpop.f32.mrf.mxu0
    %895 = vdwg.mxu0
    %v896 = vld [vmem:[#allocation2 + $0x33] ss:$0 sm:$0xff]
    %v897 = vadd.f32 %v882, %v896
    %v898 = vadd.f32 %v885, %v896
    %v899 = vadd.f32 %v890, %v896
    %v900 = vadd.f32 %v893, %v896
    %v901 = vadd.f32 %v897, %v277
    %v902 = vadd.f32 %v898, %v278
    %v903 = vadd.f32 %v899, %v279
    %v904 = vadd.f32 %v900, %v280
    %v905 = vld [vmem:[#allocation2 + $0x34] ss:$0 sm:$0xff]
    %v906 = vld [vmem:[#allocation2 + $0x35] ss:$0 sm:$0xff]
    %v907 = vsel %vm219, %v901, 0.0
    %908 = vadd.xlane.f32.xlu0 %v907
    %v909 = vpop.xlane.xlu0 %908
    %v910 = vsel %vm219, %v902, 0.0
    %911 = vadd.xlane.f32.xlu0 %v910
    %v912 = vpop.xlane.xlu0 %911
    %v913 = vsel %vm219, %v903, 0.0
    %914 = vadd.xlane.f32.xlu0 %v913
    %v915 = vpop.xlane.xlu0 %914
    %v916 = vsel %vm219, %v904, 0.0
    %917 = vadd.xlane.f32.xlu0 %v916
    %v918 = vpop.xlane.xlu0 %917
    %v919 = vmul.f32 %v909, %v232
    %v920 = vmul.f32 %v912, %v232
    %v921 = vmul.f32 %v915, %v232
    %v922 = vmul.f32 %v918, %v232
    %v923 = vsub.f32 %v901, %v919
    %v924 = vsub.f32 %v902, %v920
    %v925 = vsub.f32 %v903, %v921
    %v926 = vsub.f32 %v904, %v922
    %v927 = vmul.f32 %v923, %v923
    %v928 = vmul.f32 %v924, %v924
    %v929 = vmul.f32 %v925, %v925
    %v930 = vmul.f32 %v926, %v926
    %v931 = vsel %vm219, %v927, 0.0
    %932 = vadd.xlane.f32.xlu0 %v931
    %v933 = vpop.xlane.xlu0 %932
    %v934 = vsel %vm219, %v928, 0.0
    %935 = vadd.xlane.f32.xlu0 %v934
    %v936 = vpop.xlane.xlu0 %935
    %v937 = vsel %vm219, %v929, 0.0
    %938 = vadd.xlane.f32.xlu0 %v937
    %v939 = vpop.xlane.xlu0 %938
    %v940 = vsel %vm219, %v930, 0.0
    %941 = vadd.xlane.f32.xlu0 %v940
    %v942 = vpop.xlane.xlu0 %941
    %v943 = vmul.f32 %v933, %v232
    %v944 = vmul.f32 %v936, %v232
    %v945 = vmul.f32 %v939, %v232
    %v946 = vmul.f32 %v942, %v232
    %v947 = vadd.f32 %v943, 1e-12
    %v948 = vadd.f32 %v944, 1e-12
    %v949 = vadd.f32 %v945, 1e-12
    %v950 = vadd.f32 %v946, 1e-12
    %v951 = vrsqrt.pop %v947
    %v952 = vrsqrt.pop %v948
    %v953 = vrsqrt.pop %v949
    %v954 = vrsqrt.pop %v950
    %v955 = vmul.f32 %v923, %v951
    %v956 = vmul.f32 %v924, %v952
    %v957 = vmul.f32 %v925, %v953
    %v958 = vmul.f32 %v926, %v954
    %v959 = vmul.f32 %v955, %v905
    %v960 = vmul.f32 %v956, %v905
    %v961 = vmul.f32 %v957, %v905
    %v962 = vmul.f32 %v958, %v905
    %v963 = vadd.f32 %v959, %v906
    %v964 = vadd.f32 %v960, %v906
    %v965 = vadd.f32 %v961, %v906
    %v966 = vadd.f32 %v962, %v906
    %v967 = vpack.c.bf16 %v964, %v963
    %v968 = vpack.c.bf16 %v966, %v965
    %v969 = vld [vmem:[#allocation2 + $0x36] ss:$0 sm:$0xff]
    %v974 = vunpack.c.l.b16 %v319
    %v975 = vunpack.c.l.b16 %v320
    %v976 = vunpack.c.l.b16 %v321
    %v977 = vunpack.c.l.b16 %v322
    %v978 = vpack.c.b16 %v975, %v974
    %v979 = vpack.c.b16 %v977, %v976
    %v983 = vsel %vm219, %v967, 0
    %v986 = vsel %vm219, %v968, 0
    %988 = vmatprep.subr.bf16.mxu0 0
    %989 = vmatpush1.bf16.msra.mxu0 0
    %990 = vmatprep.subr.bf16.mxu0 0
    %991 = vmatpush1.bf16.msra.mxu0 0
    %992 = vmatprep.subr.bf16.mxu0 0
    %993 = vmatpush1.bf16.msra.mxu0 0
    %994 = vmatprep.subr.bf16.mxu0 0
    %995 = vmatpush1.bf16.msra.mxu0 0
    %996 = vmatprep.subr.bf16.mxu0 0
    %997 = vmatpush1.bf16.msra.mxu0 0
    %998 = vmatprep.subr.bf16.mxu0 0
    %999 = vmatpush1.bf16.msra.mxu0 0
    %1000 = vmatprep.subr.bf16.mxu0 0
    %1001 = vmatpush1.bf16.msra.mxu0 %v979
    %1002 = vmatprep.subr.bf16.mxu0 0
    %1003 = vmatpush1.bf16.msra.mxu0 %v978
    %1004 = vmatprep.subr.bf16.mxu0 0
    %1005 = vmatpush2.bf16.msra.mxu0 0
    %1006 = vmatprep.subr.bf16.mxu0 0
    %1007 = vmatpush2.bf16.msra.mxu0 0
    %1008 = vmatprep.subr.bf16.mxu0 0
    %1009 = vmatpush2.bf16.msra.mxu0 0
    %1010 = vmatprep.subr.bf16.mxu0 0
    %1011 = vmatpush2.bf16.msra.mxu0 0
    %1012 = vmatprep.subr.bf16.mxu0 0
    %1013 = vmatpush2.bf16.msra.mxu0 0
    %1014 = vmatprep.subr.bf16.mxu0 0
    %1015 = vmatpush2.bf16.msra.mxu0 0
    %1016 = vmatprep.subr.bf16.mxu0 0
    %1017 = vmatpush2.bf16.msra.mxu0 0
    %1018 = vmatprep.subr.bf16.mxu0 0
    %1019 = vmatpush2.bf16.msra.mxu0 0
    %1020 = vmatprep.mubr.bf16.mxu0 0
    %1021 = vmatmul.mubr.bf16.gmra.mxu0 %v983
    %v1022 = vpop.f32.mrf.mxu0
    %v1023 = vadd.f32 %v969, %v1022
    %v1024 = vpop.f32.mrf.mxu0
    %v1025 = vpop.f32.mrf.mxu0
    %v1026 = vadd.f32 %v969, %v1025
    %v1027 = vpop.f32.mrf.mxu0
    %1028 = vmatprep.mubr.bf16.mxu0 0
    %1029 = vmatmul.mubr.bf16.gmra.mxu0 %v986
    %v1030 = vpop.f32.mrf.mxu0
    %v1031 = vadd.f32 %v969, %v1030
    %v1032 = vpop.f32.mrf.mxu0
    %v1033 = vpop.f32.mrf.mxu0
    %v1034 = vadd.f32 %v969, %v1033
    %v1035 = vpop.f32.mrf.mxu0
    %1036 = vdwg.mxu0
    %v1037 = vmul.f32 %v1023, %v1023
    %v1038 = vmul.f32 %v1026, %v1026
    %v1039 = vmul.f32 %v1031, %v1031
    %v1040 = vmul.f32 %v1034, %v1034
    %v1041 = vmul.f32 %v1023, %v1037
    %v1042 = vmul.f32 %v1026, %v1038
    %v1043 = vmul.f32 %v1031, %v1039
    %v1044 = vmul.f32 %v1034, %v1040
    %v1045 = vmul.f32 %v1041, 0.044715
    %v1046 = vmul.f32 %v1042, 0.044715
    %v1047 = vmul.f32 %v1043, 0.044715
    %v1048 = vmul.f32 %v1044, 0.044715
    %v1049 = vadd.f32 %v1023, %v1045
    %v1050 = vadd.f32 %v1026, %v1046
    %v1051 = vadd.f32 %v1031, %v1047
    %v1052 = vadd.f32 %v1034, %v1048
    %v1053 = vmul.f32 %v1049, 0.7978846
    %v1054 = vmul.f32 %v1050, 0.7978846
    %v1055 = vmul.f32 %v1051, 0.7978846
    %v1056 = vmul.f32 %v1052, 0.7978846
    %v1057 = vtanh.pop %v1053
    %v1058 = vtanh.pop %v1054
    %v1059 = vtanh.pop %v1055
    %v1060 = vtanh.pop %v1056
    %v1061 = vadd.f32 %v1057, 1.0
    %v1062 = vadd.f32 %v1058, 1.0
    %v1063 = vadd.f32 %v1059, 1.0
    %v1064 = vadd.f32 %v1060, 1.0
    %v1065 = vmul.f32 %v1061, 0.5
    %v1066 = vmul.f32 %v1062, 0.5
    %v1067 = vmul.f32 %v1063, 0.5
    %v1068 = vmul.f32 %v1064, 0.5
    %v1069 = vmul.f32 %v1023, %v1065
    %v1070 = vmul.f32 %v1026, %v1066
    %v1071 = vmul.f32 %v1031, %v1067
    %v1072 = vmul.f32 %v1034, %v1068
    %v1073 = vpack.c.bf16 %v1070, %v1069
    %v1074 = vpack.c.bf16 %v1072, %v1071
    %v1075 = vld [vmem:[#allocation2 + $0x37] ss:$0 sm:$0xff]
    %v1084 = vunpack.c.l.b16 %v323
    %v1085 = vunpack.c.l.b16 %v324
    %v1086 = vunpack.c.l.b16 %v325
    %v1087 = vunpack.c.l.b16 %v326
    %v1088 = vunpack.c.l.b16 %v327
    %v1089 = vunpack.c.l.b16 %v328
    %v1090 = vunpack.c.l.b16 %v329
    %v1091 = vunpack.c.l.b16 %v330
    %v1092 = vpack.c.b16 %v1085, %v1084
    %v1093 = vpack.c.b16 %v1087, %v1086
    %v1094 = vpack.c.b16 %v1089, %v1088
    %v1095 = vpack.c.b16 %v1091, %v1090
    %vm1100 = vcmask 523264
    %v1102 = vsel %vm1100, %v1073, 0
    %v1105 = vsel %vm1100, %v1074, 0
    %1107 = vmatprep.subr.bf16.mxu0 0
    %1108 = vmatpush1.bf16.msra.mxu0 0
    %1109 = vmatprep.subr.bf16.mxu0 0
    %1110 = vmatpush1.bf16.msra.mxu0 0
    %1111 = vmatprep.subr.bf16.mxu0 0
    %1112 = vmatpush1.bf16.msra.mxu0 0
    %1113 = vmatprep.subr.bf16.mxu0 0
    %1114 = vmatpush1.bf16.msra.mxu0 0
    %1115 = vmatprep.subr.bf16.mxu0 0
    %1116 = vmatpush1.bf16.msra.mxu0 %v1095
    %1117 = vmatprep.subr.bf16.mxu0 0
    %1118 = vmatpush1.bf16.msra.mxu0 %v1094
    %1119 = vmatprep.subr.bf16.mxu0 0
    %1120 = vmatpush1.bf16.msra.mxu0 %v1093
    %1121 = vmatprep.subr.bf16.mxu0 0
    %1122 = vmatpush1.bf16.msra.mxu0 %v1092
    %1123 = vmatprep.subr.bf16.mxu0 0
    %1124 = vmatpush2.bf16.msra.mxu0 0
    %1125 = vmatprep.subr.bf16.mxu0 0
    %1126 = vmatpush2.bf16.msra.mxu0 0
    %1127 = vmatprep.subr.bf16.mxu0 0
    %1128 = vmatpush2.bf16.msra.mxu0 0
    %1129 = vmatprep.subr.bf16.mxu0 0
    %1130 = vmatpush2.bf16.msra.mxu0 0
    %1131 = vmatprep.subr.bf16.mxu0 0
    %1132 = vmatpush2.bf16.msra.mxu0 0
    %1133 = vmatprep.subr.bf16.mxu0 0
    %1134 = vmatpush2.bf16.msra.mxu0 0
    %1135 = vmatprep.subr.bf16.mxu0 0
    %1136 = vmatpush2.bf16.msra.mxu0 0
    %1137 = vmatprep.subr.bf16.mxu0 0
    %1138 = vmatpush2.bf16.msra.mxu0 0
    %1139 = vmatprep.mubr.bf16.mxu0 0
    %1140 = vmatmul.mubr.bf16.gmra.mxu0 %v1102
    %v1141 = vpop.f32.mrf.mxu0
    %v1142 = vadd.f32 %v1075, %v1141
    %v1143 = vpop.f32.mrf.mxu0
    %v1144 = vpop.f32.mrf.mxu0
    %v1145 = vadd.f32 %v1075, %v1144
    %v1146 = vpop.f32.mrf.mxu0
    %1147 = vmatprep.mubr.bf16.mxu0 0
    %1148 = vmatmul.mubr.bf16.gmra.mxu0 %v1105
    %v1149 = vpop.f32.mrf.mxu0
    %v1150 = vadd.f32 %v1075, %v1149
    %v1151 = vpop.f32.mrf.mxu0
    %v1152 = vpop.f32.mrf.mxu0
    %v1153 = vadd.f32 %v1075, %v1152
    %v1154 = vpop.f32.mrf.mxu0
    %1155 = vdwg.mxu0
    %v1156 = vadd.f32 %v1142, %v963
    %v1157 = vadd.f32 %v1145, %v964
    %v1158 = vadd.f32 %v1150, %v965
    %v1159 = vadd.f32 %v1153, %v966
    %v1160 = vld [vmem:[#allocation2 + $0x48] ss:$0 sm:$0xff]
    %v1161 = vld [vmem:[#allocation2 + $0x49] ss:$0 sm:$0xff]
    %v1162 = vsel %vm219, %v1156, 0.0
    %1163 = vadd.xlane.f32.xlu0 %v1162
    %v1164 = vpop.xlane.xlu0 %1163
    %v1165 = vsel %vm219, %v1157, 0.0
    %1166 = vadd.xlane.f32.xlu0 %v1165
    %v1167 = vpop.xlane.xlu0 %1166
    %v1168 = vsel %vm219, %v1158, 0.0
    %1169 = vadd.xlane.f32.xlu0 %v1168
    %v1170 = vpop.xlane.xlu0 %1169
    %v1171 = vsel %vm219, %v1159, 0.0
    %1172 = vadd.xlane.f32.xlu0 %v1171
    %v1173 = vpop.xlane.xlu0 %1172
    %v1174 = vmul.f32 %v1164, %v232
    %v1175 = vmul.f32 %v1167, %v232
    %v1176 = vmul.f32 %v1170, %v232
    %v1177 = vmul.f32 %v1173, %v232
    %v1178 = vsub.f32 %v1156, %v1174
    %v1179 = vsub.f32 %v1157, %v1175
    %v1180 = vsub.f32 %v1158, %v1176
    %v1181 = vsub.f32 %v1159, %v1177
    %v1182 = vmul.f32 %v1178, %v1178
    %v1183 = vmul.f32 %v1179, %v1179
    %v1184 = vmul.f32 %v1180, %v1180
    %v1185 = vmul.f32 %v1181, %v1181
    %v1186 = vsel %vm219, %v1182, 0.0
    %1187 = vadd.xlane.f32.xlu0 %v1186
    %v1188 = vpop.xlane.xlu0 %1187
    %v1189 = vsel %vm219, %v1183, 0.0
    %1190 = vadd.xlane.f32.xlu0 %v1189
    %v1191 = vpop.xlane.xlu0 %1190
    %v1192 = vsel %vm219, %v1184, 0.0
    %1193 = vadd.xlane.f32.xlu0 %v1192
    %v1194 = vpop.xlane.xlu0 %1193
    %v1195 = vsel %vm219, %v1185, 0.0
    %1196 = vadd.xlane.f32.xlu0 %v1195
    %v1197 = vpop.xlane.xlu0 %1196
    %v1198 = vmul.f32 %v1188, %v232
    %v1199 = vmul.f32 %v1191, %v232
    %v1200 = vmul.f32 %v1194, %v232
    %v1201 = vmul.f32 %v1197, %v232
    %v1202 = vadd.f32 %v1198, 1e-12
    %v1203 = vadd.f32 %v1199, 1e-12
    %v1204 = vadd.f32 %v1200, 1e-12
    %v1205 = vadd.f32 %v1201, 1e-12
    %v1206 = vrsqrt.pop %v1202
    %v1207 = vrsqrt.pop %v1203
    %v1208 = vrsqrt.pop %v1204
    %v1209 = vrsqrt.pop %v1205
    %v1210 = vmul.f32 %v1178, %v1206
    %v1211 = vmul.f32 %v1179, %v1207
    %v1212 = vmul.f32 %v1180, %v1208
    %v1213 = vmul.f32 %v1181, %v1209
    %v1214 = vmul.f32 %v1210, %v1160
    %v1215 = vmul.f32 %v1211, %v1160
    %v1216 = vmul.f32 %v1212, %v1160
    %v1217 = vmul.f32 %v1213, %v1160
    %v1218 = vadd.f32 %v1214, %v1161
    %v1219 = vadd.f32 %v1215, %v1161
    %v1220 = vadd.f32 %v1216, %v1161
    %v1221 = vadd.f32 %v1217, %v1161
    %v1222 = vld [vmem:[#allocation5 + $0x88] sm:$0xf]
    %v1223 = vld [vmem:[#allocation5 + $0x8c] sm:$0xf]
    %v1224 = vld [vmem:[#allocation5 + $0x90] sm:$0xf]
    %v1225 = vld [vmem:[#allocation5 + $0x94] sm:$0xf]
    %v1226 = vld [vmem:[#allocation5 + $0x98] sm:$0xf]
    %v1227 = vld [vmem:[#allocation5 + $0x9c] sm:$0xf]
    %v1228 = vld [vmem:[#allocation5 + $0xa0] sm:$0xf]
    %v1229 = vld [vmem:[#allocation5 + $0xa4] sm:$0xf]
    %v1230 = vld [vmem:[#allocation5 + $0xa8] sm:$0xf]
    %v1231 = vld [vmem:[#allocation5 + $0xac] sm:$0xf]
    %v1232 = vld [vmem:[#allocation5 + $0xb0] sm:$0xf]
    %v1233 = vld [vmem:[#allocation5 + $0xb4] sm:$0xf]
    %v1234 = vld [vmem:[#allocation5 + $0xb8] sm:$0xf]
    %v1235 = vld [vmem:[#allocation5 + $0xbc] sm:$0xf]
    %v1236 = vld [vmem:[#allocation5 + $0xc0] sm:$0xf]
    %v1237 = vld [vmem:[#allocation5 + $0xc4] sm:$0xf]
    %v1238 = vld [vmem:[#allocation5 + $0xc8] sm:$0xf]
    %v1239 = vld [vmem:[#allocation5 + $0xcc] sm:$0xf]
    %v1240 = vld [vmem:[#allocation5 + $0xd0] sm:$0xf]
    %v1241 = vld [vmem:[#allocation5 + $0xd4] sm:$0xf]
    %v1242 = vpack.c.bf16 %v1219, %v1218
    %v1243 = vpack.c.bf16 %v1221, %v1220
    %v1244 = vld [vmem:[#allocation2 + $0x4a] ss:$0 sm:$0xff]
    %v1249 = vunpack.c.l.b16 %v1222
    %v1250 = vunpack.c.l.b16 %v1223
    %v1251 = vunpack.c.l.b16 %v1224
    %v1252 = vunpack.c.l.b16 %v1225
    %v1253 = vpack.c.b16 %v1250, %v1249
    %v1254 = vpack.c.b16 %v1252, %v1251
    %v1258 = vsel %vm219, %v1242, 0
    %v1261 = vsel %vm219, %v1243, 0
    %1263 = vmatprep.subr.bf16.mxu0 0
    %1264 = vmatpush1.bf16.msra.mxu0 0
    %1265 = vmatprep.subr.bf16.mxu0 0
    %1266 = vmatpush1.bf16.msra.mxu0 0
    %1267 = vmatprep.subr.bf16.mxu0 0
    %1268 = vmatpush1.bf16.msra.mxu0 0
    %1269 = vmatprep.subr.bf16.mxu0 0
    %1270 = vmatpush1.bf16.msra.mxu0 0
    %1271 = vmatprep.subr.bf16.mxu0 0
    %1272 = vmatpush1.bf16.msra.mxu0 0
    %1273 = vmatprep.subr.bf16.mxu0 0
    %1274 = vmatpush1.bf16.msra.mxu0 0
    %1275 = vmatprep.subr.bf16.mxu0 0
    %1276 = vmatpush1.bf16.msra.mxu0 %v1254
    %1277 = vmatprep.subr.bf16.mxu0 0
    %1278 = vmatpush1.bf16.msra.mxu0 %v1253
    %1279 = vmatprep.subr.bf16.mxu0 0
    %1280 = vmatpush2.bf16.msra.mxu0 0
    %1281 = vmatprep.subr.bf16.mxu0 0
    %1282 = vmatpush2.bf16.msra.mxu0 0
    %1283 = vmatprep.subr.bf16.mxu0 0
    %1284 = vmatpush2.bf16.msra.mxu0 0
    %1285 = vmatprep.subr.bf16.mxu0 0
    %1286 = vmatpush2.bf16.msra.mxu0 0
    %1287 = vmatprep.subr.bf16.mxu0 0
    %1288 = vmatpush2.bf16.msra.mxu0 0
    %1289 = vmatprep.subr.bf16.mxu0 0
    %1290 = vmatpush2.bf16.msra.mxu0 0
    %1291 = vmatprep.subr.bf16.mxu0 0
    %1292 = vmatpush2.bf16.msra.mxu0 0
    %1293 = vmatprep.subr.bf16.mxu0 0
    %1294 = vmatpush2.bf16.msra.mxu0 0
    %1295 = vmatprep.mubr.bf16.mxu0 0
    %1296 = vmatmul.mubr.bf16.gmra.mxu0 %v1258
    %v1297 = vpop.f32.mrf.mxu0
    %v1298 = vadd.f32 %v1244, %v1297
    %v1299 = vpop.f32.mrf.mxu0
    %v1300 = vpop.f32.mrf.mxu0
    %v1301 = vadd.f32 %v1244, %v1300
    %v1302 = vpop.f32.mrf.mxu0
    %1303 = vmatprep.mubr.bf16.mxu0 0
    %1304 = vmatmul.mubr.bf16.gmra.mxu0 %v1261
    %v1305 = vpop.f32.mrf.mxu0
    %v1306 = vadd.f32 %v1244, %v1305
    %v1307 = vpop.f32.mrf.mxu0
    %v1308 = vpop.f32.mrf.mxu0
    %v1309 = vadd.f32 %v1244, %v1308
    %v1310 = vpop.f32.mrf.mxu0
    %1311 = vdwg.mxu0
    %v1312 = vpack.c.bf16 %v1301, %v1298
    %v1313 = vpack.c.bf16 %v1309, %v1306
    %1316 = vrot.lane.b32.xlu0 %v1312, 96
    %v1317 = vpop.permute.xlu0 %1316
    %1318 = vrot.lane.b32.xlu0 %v1313, 96
    %v1319 = vpop.permute.xlu0 %1318
    %v1321 = vsel %vm409, %v1312, 0
    %v1324 = vsel %vm409, %v1313, 0
    %v1327 = vsel %vm409, %v1317, 0
    %v1330 = vsel %vm409, %v1319, 0
    %1332 = vmatprep.subr.bf16.mxu0 0
    %1333 = vmatpush1.bf16.xpose.msra.mxu0 0
    %1334 = vmatprep.subr.bf16.mxu0 0
    %1335 = vmatpush1.bf16.xpose.msra.mxu0 0
    %1336 = vmatprep.subr.bf16.mxu0 0
    %1337 = vmatpush1.bf16.xpose.msra.mxu0 0
    %1338 = vmatprep.subr.bf16.mxu0 0
    %1339 = vmatpush1.bf16.xpose.msra.mxu0 0
    %1340 = vmatprep.subr.bf16.mxu0 0
    %1341 = vmatpush1.bf16.xpose.msra.mxu0 0
    %1342 = vmatprep.subr.bf16.mxu0 0
    %1343 = vmatpush1.bf16.xpose.msra.mxu0 0
    %1344 = vmatprep.subr.bf16.mxu0 0
    %1345 = vmatpush1.bf16.xpose.msra.mxu0 %v1330
    %1346 = vmatprep.subr.bf16.mxu0 0
    %1347 = vmatpush1.bf16.xpose.msra.mxu0 %v1327
    %1348 = vmatprep.subr.bf16.mxu0 0
    %1349 = vmatpush2.bf16.xpose.msra.mxu0 0
    %1350 = vmatprep.subr.bf16.mxu0 0
    %1351 = vmatpush2.bf16.xpose.msra.mxu0 0
    %1352 = vmatprep.subr.bf16.mxu0 0
    %1353 = vmatpush2.bf16.xpose.msra.mxu0 0
    %1354 = vmatprep.subr.bf16.mxu0 0
    %1355 = vmatpush2.bf16.xpose.msra.mxu0 0
    %1356 = vmatprep.subr.bf16.mxu0 0
    %1357 = vmatpush2.bf16.xpose.msra.mxu0 0
    %1358 = vmatprep.subr.bf16.mxu0 0
    %1359 = vmatpush2.bf16.xpose.msra.mxu0 0
    %1360 = vmatprep.subr.bf16.mxu0 0
    %1361 = vmatpush2.bf16.xpose.msra.mxu0 0
    %1362 = vmatprep.subr.bf16.mxu0 0
    %1363 = vmatpush2.bf16.xpose.msra.mxu0 0
    %1364 = vmatprep.mubr.bf16.mxu0 0
    %1365 = vmatmul.mubr.bf16.gmra.mxu0 %v1321
    %v1366 = vpop.f32.mrf.mxu0
    %v1367 = vadd.f32 0.0, %v1366
    %v1368 = vpop.f32.mrf.mxu0
    %v1369 = vpop.f32.mrf.mxu0
    %v1370 = vadd.f32 0.0, %v1369
    %v1371 = vpop.f32.mrf.mxu0
    %1372 = vmatprep.mubr.bf16.mxu0 0
    %1373 = vmatmul.mubr.bf16.gmra.mxu0 %v1324
    %v1374 = vpop.f32.mrf.mxu0
    %v1375 = vadd.f32 0.0, %v1374
    %v1376 = vpop.f32.mrf.mxu0
    %v1377 = vpop.f32.mrf.mxu0
    %v1378 = vadd.f32 0.0, %v1377
    %v1379 = vpop.f32.mrf.mxu0
    %1380 = vdwg.mxu0
    %v1381 = vmul.f32 %v1367, 0.25
    %v1382 = vmul.f32 %v1370, 0.25
    %v1383 = vmul.f32 %v1375, 0.25
    %v1384 = vmul.f32 %v1378, 0.25
    %v1385 = vadd.f32 %v1381, %v307
    %v1386 = vadd.f32 %v1382, %v308
    %v1387 = vadd.f32 %v1383, %v309
    %v1388 = vadd.f32 %v1384, %v310
    %v1389 = vsel %vm219, %v1385, -inf
    %1390 = vmax.xlane.f32.xlu0 %v1389
    %v1391 = vpop.xlane.xlu0 %1390
    %v1392 = vsel %vm219, %v1386, -inf
    %1393 = vmax.xlane.f32.xlu0 %v1392
    %v1394 = vpop.xlane.xlu0 %1393
    %v1395 = vsel %vm219, %v1387, -inf
    %1396 = vmax.xlane.f32.xlu0 %v1395
    %v1397 = vpop.xlane.xlu0 %1396
    %v1398 = vsel %vm219, %v1388, -inf
    %1399 = vmax.xlane.f32.xlu0 %v1398
    %v1400 = vpop.xlane.xlu0 %1399
    %v1401 = vsub.f32 %v1385, %v1391
    %v1402 = vsub.f32 %v1386, %v1394
    %v1403 = vsub.f32 %v1387, %v1397
    %v1404 = vsub.f32 %v1388, %v1400
    %v1405 = vmul.f32 %v1401, 1.442695
    %v1406 = vpow.pop %v1405
    %v1407 = vmul.f32 %v1402, 1.442695
    %v1408 = vpow.pop %v1407
    %v1409 = vmul.f32 %v1403, 1.442695
    %v1410 = vpow.pop %v1409
    %v1411 = vmul.f32 %v1404, 1.442695
    %v1412 = vpow.pop %v1411
    %v1413 = vsel %vm219, %v1406, 0.0
    %1414 = vadd.xlane.f32.xlu0 %v1413
    %v1415 = vpop.xlane.xlu0 %1414
    %v1416 = vsel %vm219, %v1408, 0.0
    %1417 = vadd.xlane.f32.xlu0 %v1416
    %v1418 = vpop.xlane.xlu0 %1417
    %v1419 = vsel %vm219, %v1410, 0.0
    %1420 = vadd.xlane.f32.xlu0 %v1419
    %v1421 = vpop.xlane.xlu0 %1420
    %v1422 = vsel %vm219, %v1412, 0.0
    %1423 = vadd.xlane.f32.xlu0 %v1422
    %v1424 = vpop.xlane.xlu0 %1423
    %v1425 = vrcp.pop %v1415
    %v1426 = vrcp.pop %v1418
    %v1427 = vrcp.pop %v1421
    %v1428 = vrcp.pop %v1424
    %v1429 = vmul.f32 %v1406, %v1425
    %v1430 = vmul.f32 %v1408, %v1426
    %v1431 = vmul.f32 %v1410, %v1427
    %v1432 = vmul.f32 %v1412, %v1428
    %v1433 = vpack.c.bf16 %v1430, %v1429
    %v1434 = vpack.c.bf16 %v1432, %v1431
    %1435 = vrot.lane.b32.xlu0 %v1312, 64
    %v1436 = vpop.permute.xlu0 %1435
    %1437 = vrot.lane.b32.xlu0 %v1313, 64
    %v1438 = vpop.permute.xlu0 %1437
    %v1442 = vsel %vm219, %v1433, 0
    %v1445 = vsel %vm219, %v1434, 0
    %1447 = vmatprep.subr.bf16.mxu0 0
    %1448 = vmatpush1.bf16.msra.mxu0 0
    %1449 = vmatprep.subr.bf16.mxu0 0
    %1450 = vmatpush1.bf16.msra.mxu0 0
    %1451 = vmatprep.subr.bf16.mxu0 0
    %1452 = vmatpush1.bf16.msra.mxu0 0
    %1453 = vmatprep.subr.bf16.mxu0 0
    %1454 = vmatpush1.bf16.msra.mxu0 0
    %1455 = vmatprep.subr.bf16.mxu0 0
    %1456 = vmatpush1.bf16.msra.mxu0 0
    %1457 = vmatprep.subr.bf16.mxu0 0
    %1458 = vmatpush1.bf16.msra.mxu0 0
    %1459 = vmatprep.subr.bf16.mxu0 0
    %1460 = vmatpush1.bf16.msra.mxu0 %v1438
    %1461 = vmatprep.subr.bf16.mxu0 0
    %1462 = vmatpush1.bf16.msra.mxu0 %v1436
    %1463 = vmatprep.subr.bf16.mxu0 0
    %1464 = vmatpush2.bf16.msra.mxu0 0
    %1465 = vmatprep.subr.bf16.mxu0 0
    %1466 = vmatpush2.bf16.msra.mxu0 0
    %1467 = vmatprep.subr.bf16.mxu0 0
    %1468 = vmatpush2.bf16.msra.mxu0 0
    %1469 = vmatprep.subr.bf16.mxu0 0
    %1470 = vmatpush2.bf16.msra.mxu0 0
    %1471 = vmatprep.subr.bf16.mxu0 0
    %1472 = vmatpush2.bf16.msra.mxu0 0
    %1473 = vmatprep.subr.bf16.mxu0 0
    %1474 = vmatpush2.bf16.msra.mxu0 0
    %1475 = vmatprep.subr.bf16.mxu0 0
    %1476 = vmatpush2.bf16.msra.mxu0 0
    %1477 = vmatprep.subr.bf16.mxu0 0
    %1478 = vmatpush2.bf16.msra.mxu0 0
    %1479 = vmatprep.mubr.bf16.mxu0 0
    %1480 = vmatmul.mubr.bf16.gmra.mxu0 %v1442
    %v1481 = vpop.f32.mrf.mxu0
    %v1482 = vadd.f32 0.0, %v1481
    %v1483 = vpop.f32.mrf.mxu0
    %v1484 = vpop.f32.mrf.mxu0
    %v1485 = vadd.f32 0.0, %v1484
    %v1486 = vpop.f32.mrf.mxu0
    %1487 = vmatprep.mubr.bf16.mxu0 0
    %1488 = vmatmul.mubr.bf16.gmra.mxu0 %v1445
    %v1489 = vpop.f32.mrf.mxu0
    %v1490 = vadd.f32 0.0, %v1489
    %v1491 = vpop.f32.mrf.mxu0
    %v1492 = vpop.f32.mrf.mxu0
    %v1493 = vadd.f32 0.0, %v1492
    %v1494 = vpop.f32.mrf.mxu0
    %1495 = vdwg.mxu0
    %v1496 = vpack.c.bf16 %v1485, %v1482
    %v1497 = vpack.c.bf16 %v1493, %v1490
    %1498 = vrot.lane.b32.xlu0 %v1312, 112
    %v1499 = vpop.permute.xlu0 %1498
    %1500 = vrot.lane.b32.xlu0 %v1313, 112
    %v1501 = vpop.permute.xlu0 %1500
    %1502 = vrot.lane.b32.xlu0 %v1312, 80
    %v1503 = vpop.permute.xlu0 %1502
    %1504 = vrot.lane.b32.xlu0 %v1313, 80
    %v1505 = vpop.permute.xlu0 %1504
    %v1507 = vsel %vm409, %v1499, 0
    %v1510 = vsel %vm409, %v1501, 0
    %v1513 = vsel %vm409, %v1503, 0
    %v1516 = vsel %vm409, %v1505, 0
    %1518 = vmatprep.subr.bf16.mxu0 0
    %1519 = vmatpush1.bf16.xpose.msra.mxu0 0
    %1520 = vmatprep.subr.bf16.mxu0 0
    %1521 = vmatpush1.bf16.xpose.msra.mxu0 0
    %1522 = vmatprep.subr.bf16.mxu0 0
    %1523 = vmatpush1.bf16.xpose.msra.mxu0 0
    %1524 = vmatprep.subr.bf16.mxu0 0
    %1525 = vmatpush1.bf16.xpose.msra.mxu0 0
    %1526 = vmatprep.subr.bf16.mxu0 0
    %1527 = vmatpush1.bf16.xpose.msra.mxu0 0
    %1528 = vmatprep.subr.bf16.mxu0 0
    %1529 = vmatpush1.bf16.xpose.msra.mxu0 0
    %1530 = vmatprep.subr.bf16.mxu0 0
    %1531 = vmatpush1.bf16.xpose.msra.mxu0 %v1516
    %1532 = vmatprep.subr.bf16.mxu0 0
    %1533 = vmatpush1.bf16.xpose.msra.mxu0 %v1513
    %1534 = vmatprep.subr.bf16.mxu0 0
    %1535 = vmatpush2.bf16.xpose.msra.mxu0 0
    %1536 = vmatprep.subr.bf16.mxu0 0
    %1537 = vmatpush2.bf16.xpose.msra.mxu0 0
    %1538 = vmatprep.subr.bf16.mxu0 0
    %1539 = vmatpush2.bf16.xpose.msra.mxu0 0
    %1540 = vmatprep.subr.bf16.mxu0 0
    %1541 = vmatpush2.bf16.xpose.msra.mxu0 0
    %1542 = vmatprep.subr.bf16.mxu0 0
    %1543 = vmatpush2.bf16.xpose.msra.mxu0 0
    %1544 = vmatprep.subr.bf16.mxu0 0
    %1545 = vmatpush2.bf16.xpose.msra.mxu0 0
    %1546 = vmatprep.subr.bf16.mxu0 0
    %1547 = vmatpush2.bf16.xpose.msra.mxu0 0
    %1548 = vmatprep.subr.bf16.mxu0 0
    %1549 = vmatpush2.bf16.xpose.msra.mxu0 0
    %1550 = vmatprep.mubr.bf16.mxu0 0
    %1551 = vmatmul.mubr.bf16.gmra.mxu0 %v1507
    %v1552 = vpop.f32.mrf.mxu0
    %v1553 = vadd.f32 0.0, %v1552
    %v1554 = vpop.f32.mrf.mxu0
    %v1555 = vpop.f32.mrf.mxu0
    %v1556 = vadd.f32 0.0, %v1555
    %v1557 = vpop.f32.mrf.mxu0
    %1558 = vmatprep.mubr.bf16.mxu0 0
    %1559 = vmatmul.mubr.bf16.gmra.mxu0 %v1510
    %v1560 = vpop.f32.mrf.mxu0
    %v1561 = vadd.f32 0.0, %v1560
    %v1562 = vpop.f32.mrf.mxu0
    %v1563 = vpop.f32.mrf.mxu0
    %v1564 = vadd.f32 0.0, %v1563
    %v1565 = vpop.f32.mrf.mxu0
    %1566 = vdwg.mxu0
    %v1567 = vmul.f32 %v1553, 0.25
    %v1568 = vmul.f32 %v1556, 0.25
    %v1569 = vmul.f32 %v1561, 0.25
    %v1570 = vmul.f32 %v1564, 0.25
    %v1571 = vadd.f32 %v1567, %v307
    %v1572 = vadd.f32 %v1568, %v308
    %v1573 = vadd.f32 %v1569, %v309
    %v1574 = vadd.f32 %v1570, %v310
    %v1575 = vsel %vm219, %v1571, -inf
    %1576 = vmax.xlane.f32.xlu0 %v1575
    %v1577 = vpop.xlane.xlu0 %1576
    %v1578 = vsel %vm219, %v1572, -inf
    %1579 = vmax.xlane.f32.xlu0 %v1578
    %v1580 = vpop.xlane.xlu0 %1579
    %v1581 = vsel %vm219, %v1573, -inf
    %1582 = vmax.xlane.f32.xlu0 %v1581
    %v1583 = vpop.xlane.xlu0 %1582
    %v1584 = vsel %vm219, %v1574, -inf
    %1585 = vmax.xlane.f32.xlu0 %v1584
    %v1586 = vpop.xlane.xlu0 %1585
    %v1587 = vsub.f32 %v1571, %v1577
    %v1588 = vsub.f32 %v1572, %v1580
    %v1589 = vsub.f32 %v1573, %v1583
    %v1590 = vsub.f32 %v1574, %v1586
    %v1591 = vmul.f32 %v1587, 1.442695
    %v1592 = vpow.pop %v1591
    %v1593 = vmul.f32 %v1588, 1.442695
    %v1594 = vpow.pop %v1593
    %v1595 = vmul.f32 %v1589, 1.442695
    %v1596 = vpow.pop %v1595
    %v1597 = vmul.f32 %v1590, 1.442695
    %v1598 = vpow.pop %v1597
    %v1599 = vsel %vm219, %v1592, 0.0
    %1600 = vadd.xlane.f32.xlu0 %v1599
    %v1601 = vpop.xlane.xlu0 %1600
    %v1602 = vsel %vm219, %v1594, 0.0
    %1603 = vadd.xlane.f32.xlu0 %v1602
    %v1604 = vpop.xlane.xlu0 %1603
    %v1605 = vsel %vm219, %v1596, 0.0
    %1606 = vadd.xlane.f32.xlu0 %v1605
    %v1607 = vpop.xlane.xlu0 %1606
    %v1608 = vsel %vm219, %v1598, 0.0
    %1609 = vadd.xlane.f32.xlu0 %v1608
    %v1610 = vpop.xlane.xlu0 %1609
    %v1611 = vrcp.pop %v1601
    %v1612 = vrcp.pop %v1604
    %v1613 = vrcp.pop %v1607
    %v1614 = vrcp.pop %v1610
    %v1615 = vmul.f32 %v1592, %v1611
    %v1616 = vmul.f32 %v1594, %v1612
    %v1617 = vmul.f32 %v1596, %v1613
    %v1618 = vmul.f32 %v1598, %v1614
    %v1619 = vpack.c.bf16 %v1616, %v1615
    %v1620 = vpack.c.bf16 %v1618, %v1617
    %1621 = vrot.lane.b32.xlu0 %v1312, 48
    %v1622 = vpop.permute.xlu0 %1621
    %1623 = vrot.lane.b32.xlu0 %v1313, 48
    %v1624 = vpop.permute.xlu0 %1623
    %v1628 = vsel %vm219, %v1619, 0
    %v1631 = vsel %vm219, %v1620, 0
    %1633 = vmatprep.subr.bf16.mxu0 0
    %1634 = vmatpush1.bf16.msra.mxu0 0
    %1635 = vmatprep.subr.bf16.mxu0 0
    %1636 = vmatpush1.bf16.msra.mxu0 0
    %1637 = vmatprep.subr.bf16.mxu0 0
    %1638 = vmatpush1.bf16.msra.mxu0 0
    %1639 = vmatprep.subr.bf16.mxu0 0
    %1640 = vmatpush1.bf16.msra.mxu0 0
    %1641 = vmatprep.subr.bf16.mxu0 0
    %1642 = vmatpush1.bf16.msra.mxu0 0
    %1643 = vmatprep.subr.bf16.mxu0 0
    %1644 = vmatpush1.bf16.msra.mxu0 0
    %1645 = vmatprep.subr.bf16.mxu0 0
    %1646 = vmatpush1.bf16.msra.mxu0 %v1624
    %1647 = vmatprep.subr.bf16.mxu0 0
    %1648 = vmatpush1.bf16.msra.mxu0 %v1622
    %1649 = vmatprep.subr.bf16.mxu0 0
    %1650 = vmatpush2.bf16.msra.mxu0 0
    %1651 = vmatprep.subr.bf16.mxu0 0
    %1652 = vmatpush2.bf16.msra.mxu0 0
    %1653 = vmatprep.subr.bf16.mxu0 0
    %1654 = vmatpush2.bf16.msra.mxu0 0
    %1655 = vmatprep.subr.bf16.mxu0 0
    %1656 = vmatpush2.bf16.msra.mxu0 0
    %1657 = vmatprep.subr.bf16.mxu0 0
    %1658 = vmatpush2.bf16.msra.mxu0 0
    %1659 = vmatprep.subr.bf16.mxu0 0
    %1660 = vmatpush2.bf16.msra.mxu0 0
    %1661 = vmatprep.subr.bf16.mxu0 0
    %1662 = vmatpush2.bf16.msra.mxu0 0
    %1663 = vmatprep.subr.bf16.mxu0 0
    %1664 = vmatpush2.bf16.msra.mxu0 0
    %1665 = vmatprep.mubr.bf16.mxu0 0
    %1666 = vmatmul.mubr.bf16.gmra.mxu0 %v1628
    %v1667 = vpop.f32.mrf.mxu0
    %v1668 = vadd.f32 0.0, %v1667
    %v1669 = vpop.f32.mrf.mxu0
    %v1670 = vpop.f32.mrf.mxu0
    %v1671 = vadd.f32 0.0, %v1670
    %v1672 = vpop.f32.mrf.mxu0
    %1673 = vmatprep.mubr.bf16.mxu0 0
    %1674 = vmatmul.mubr.bf16.gmra.mxu0 %v1631
    %v1675 = vpop.f32.mrf.mxu0
    %v1676 = vadd.f32 0.0, %v1675
    %v1677 = vpop.f32.mrf.mxu0
    %v1678 = vpop.f32.mrf.mxu0
    %v1679 = vadd.f32 0.0, %v1678
    %v1680 = vpop.f32.mrf.mxu0
    %1681 = vdwg.mxu0
    %v1682 = vpack.c.bf16 %v1671, %v1668
    %v1683 = vpack.c.bf16 %v1679, %v1676
    %v1686 = vunpack.c.l.b16 %v1228
    %v1687 = vunpack.c.l.b16 %v1229
    %v1688 = vpack.c.b16 %v1687, %v1686
    %v1691 = vsel %vm409, %v1682, 0
    %v1694 = vsel %vm409, %v1683, 0
    %1696 = vmatprep.subr.bf16.mxu0 0
    %1697 = vmatpush1.bf16.msra.mxu0 0
    %1698 = vmatprep.subr.bf16.mxu0 0
    %1699 = vmatpush1.bf16.msra.mxu0 0
    %1700 = vmatprep.subr.bf16.mxu0 0
    %1701 = vmatpush1.bf16.msra.mxu0 0
    %1702 = vmatprep.subr.bf16.mxu0 0
    %1703 = vmatpush1.bf16.msra.mxu0 0
    %1704 = vmatprep.subr.bf16.mxu0 0
    %1705 = vmatpush1.bf16.msra.mxu0 0
    %1706 = vmatprep.subr.bf16.mxu0 0
    %1707 = vmatpush1.bf16.msra.mxu0 0
    %1708 = vmatprep.subr.bf16.mxu0 0
    %1709 = vmatpush1.bf16.msra.mxu0 0
    %1710 = vmatprep.subr.bf16.mxu0 0
    %1711 = vmatpush1.bf16.msra.mxu0 %v1688
    %1712 = vmatprep.subr.bf16.mxu0 0
    %1713 = vmatpush2.bf16.msra.mxu0 0
    %1714 = vmatprep.subr.bf16.mxu0 0
    %1715 = vmatpush2.bf16.msra.mxu0 0
    %1716 = vmatprep.subr.bf16.mxu0 0
    %1717 = vmatpush2.bf16.msra.mxu0 0
    %1718 = vmatprep.subr.bf16.mxu0 0
    %1719 = vmatpush2.bf16.msra.mxu0 0
    %1720 = vmatprep.subr.bf16.mxu0 0
    %1721 = vmatpush2.bf16.msra.mxu0 0
    %1722 = vmatprep.subr.bf16.mxu0 0
    %1723 = vmatpush2.bf16.msra.mxu0 0
    %1724 = vmatprep.subr.bf16.mxu0 0
    %1725 = vmatpush2.bf16.msra.mxu0 0
    %1726 = vmatprep.subr.bf16.mxu0 0
    %1727 = vmatpush2.bf16.msra.mxu0 0
    %1728 = vmatprep.mubr.bf16.mxu0 0
    %1729 = vmatmul.mubr.bf16.gmra.mxu0 %v1691
    %v1730 = vpop.f32.mrf.mxu0
    %v1731 = vadd.f32 0.0, %v1730
    %v1732 = vpop.f32.mrf.mxu0
    %v1733 = vpop.f32.mrf.mxu0
    %v1734 = vadd.f32 0.0, %v1733
    %v1735 = vpop.f32.mrf.mxu0
    %1736 = vmatprep.mubr.bf16.mxu0 0
    %1737 = vmatmul.mubr.bf16.gmra.mxu0 %v1694
    %v1738 = vpop.f32.mrf.mxu0
    %v1739 = vadd.f32 0.0, %v1738
    %v1740 = vpop.f32.mrf.mxu0
    %v1741 = vpop.f32.mrf.mxu0
    %v1742 = vadd.f32 0.0, %v1741
    %v1743 = vpop.f32.mrf.mxu0
    %1744 = vdwg.mxu0
    %v1747 = vunpack.c.l.b16 %v1226
    %v1748 = vunpack.c.l.b16 %v1227
    %v1749 = vpack.c.b16 %v1748, %v1747
    %v1752 = vsel %vm409, %v1496, 0
    %v1755 = vsel %vm409, %v1497, 0
    %1757 = vmatprep.subr.bf16.mxu0 0
    %1758 = vmatpush1.bf16.msra.mxu0 0
    %1759 = vmatprep.subr.bf16.mxu0 0
    %1760 = vmatpush1.bf16.msra.mxu0 0
    %1761 = vmatprep.subr.bf16.mxu0 0
    %1762 = vmatpush1.bf16.msra.mxu0 0
    %1763 = vmatprep.subr.bf16.mxu0 0
    %1764 = vmatpush1.bf16.msra.mxu0 0
    %1765 = vmatprep.subr.bf16.mxu0 0
    %1766 = vmatpush1.bf16.msra.mxu0 0
    %1767 = vmatprep.subr.bf16.mxu0 0
    %1768 = vmatpush1.bf16.msra.mxu0 0
    %1769 = vmatprep.subr.bf16.mxu0 0
    %1770 = vmatpush1.bf16.msra.mxu0 0
    %1771 = vmatprep.subr.bf16.mxu0 0
    %1772 = vmatpush1.bf16.msra.mxu0 %v1749
    %1773 = vmatprep.subr.bf16.mxu0 0
    %1774 = vmatpush2.bf16.msra.mxu0 0
    %1775 = vmatprep.subr.bf16.mxu0 0
    %1776 = vmatpush2.bf16.msra.mxu0 0
    %1777 = vmatprep.subr.bf16.mxu0 0
    %1778 = vmatpush2.bf16.msra.mxu0 0
    %1779 = vmatprep.subr.bf16.mxu0 0
    %1780 = vmatpush2.bf16.msra.mxu0 0
    %1781 = vmatprep.subr.bf16.mxu0 0
    %1782 = vmatpush2.bf16.msra.mxu0 0
    %1783 = vmatprep.subr.bf16.mxu0 0
    %1784 = vmatpush2.bf16.msra.mxu0 0
    %1785 = vmatprep.subr.bf16.mxu0 0
    %1786 = vmatpush2.bf16.msra.mxu0 0
    %1787 = vmatprep.subr.bf16.mxu0 0
    %1788 = vmatpush2.bf16.msra.mxu0 0
    %1789 = vmatprep.mubr.bf16.mxu0 0
    %1790 = vmatmul.mubr.bf16.gmra.mxu0 %v1752
    %v1791 = vpop.f32.mrf.mxu0
    %v1792 = vadd.f32 %v1731, %v1791
    %v1793 = vpop.f32.mrf.mxu0
    %v1794 = vpop.f32.mrf.mxu0
    %v1795 = vadd.f32 %v1734, %v1794
    %v1796 = vpop.f32.mrf.mxu0
    %1797 = vmatprep.mubr.bf16.mxu0 0
    %1798 = vmatmul.mubr.bf16.gmra.mxu0 %v1755
    %v1799 = vpop.f32.mrf.mxu0
    %v1800 = vadd.f32 %v1739, %v1799
    %v1801 = vpop.f32.mrf.mxu0
    %v1802 = vpop.f32.mrf.mxu0
    %v1803 = vadd.f32 %v1742, %v1802
    %v1804 = vpop.f32.mrf.mxu0
    %1805 = vdwg.mxu0
    %v1806 = vld [vmem:[#allocation2 + $0x4b] ss:$0 sm:$0xff]
    %v1807 = vadd.f32 %v1792, %v1806
    %v1808 = vadd.f32 %v1795, %v1806
    %v1809 = vadd.f32 %v1800, %v1806
    %v1810 = vadd.f32 %v1803, %v1806
    %v1811 = vadd.f32 %v1807, %v1218
    %v1812 = vadd.f32 %v1808, %v1219
    %v1813 = vadd.f32 %v1809, %v1220
    %v1814 = vadd.f32 %v1810, %v1221
    %v1815 = vld [vmem:[#allocation2 + $0x4c] ss:$0 sm:$0xff]
    %v1816 = vld [vmem:[#allocation2 + $0x4d] ss:$0 sm:$0xff]
    %v1817 = vsel %vm219, %v1811, 0.0
    %1818 = vadd.xlane.f32.xlu0 %v1817
    %v1819 = vpop.xlane.xlu0 %1818
    %v1820 = vsel %vm219, %v1812, 0.0
    %1821 = vadd.xlane.f32.xlu0 %v1820
    %v1822 = vpop.xlane.xlu0 %1821
    %v1823 = vsel %vm219, %v1813, 0.0
    %1824 = vadd.xlane.f32.xlu0 %v1823
    %v1825 = vpop.xlane.xlu0 %1824
    %v1826 = vsel %vm219, %v1814, 0.0
    %1827 = vadd.xlane.f32.xlu0 %v1826
    %v1828 = vpop.xlane.xlu0 %1827
    %v1829 = vmul.f32 %v1819, %v232
    %v1830 = vmul.f32 %v1822, %v232
    %v1831 = vmul.f32 %v1825, %v232
    %v1832 = vmul.f32 %v1828, %v232
    %v1833 = vsub.f32 %v1811, %v1829
    %v1834 = vsub.f32 %v1812, %v1830
    %v1835 = vsub.f32 %v1813, %v1831
    %v1836 = vsub.f32 %v1814, %v1832
    %v1837 = vmul.f32 %v1833, %v1833
    %v1838 = vmul.f32 %v1834, %v1834
    %v1839 = vmul.f32 %v1835, %v1835
    %v1840 = vmul.f32 %v1836, %v1836
    %v1841 = vsel %vm219, %v1837, 0.0
    %1842 = vadd.xlane.f32.xlu0 %v1841
    %v1843 = vpop.xlane.xlu0 %1842
    %v1844 = vsel %vm219, %v1838, 0.0
    %1845 = vadd.xlane.f32.xlu0 %v1844
    %v1846 = vpop.xlane.xlu0 %1845
    %v1847 = vsel %vm219, %v1839, 0.0
    %1848 = vadd.xlane.f32.xlu0 %v1847
    %v1849 = vpop.xlane.xlu0 %1848
    %v1850 = vsel %vm219, %v1840, 0.0
    %1851 = vadd.xlane.f32.xlu0 %v1850
    %v1852 = vpop.xlane.xlu0 %1851
    %v1853 = vmul.f32 %v1843, %v232
    %v1854 = vmul.f32 %v1846, %v232
    %v1855 = vmul.f32 %v1849, %v232
    %v1856 = vmul.f32 %v1852, %v232
    %v1857 = vadd.f32 %v1853, 1e-12
    %v1858 = vadd.f32 %v1854, 1e-12
    %v1859 = vadd.f32 %v1855, 1e-12
    %v1860 = vadd.f32 %v1856, 1e-12
    %v1861 = vrsqrt.pop %v1857
    %v1862 = vrsqrt.pop %v1858
    %v1863 = vrsqrt.pop %v1859
    %v1864 = vrsqrt.pop %v1860
    %v1865 = vmul.f32 %v1833, %v1861
    %v1866 = vmul.f32 %v1834, %v1862
    %v1867 = vmul.f32 %v1835, %v1863
    %v1868 = vmul.f32 %v1836, %v1864
    %v1869 = vmul.f32 %v1865, %v1815
    %v1870 = vmul.f32 %v1866, %v1815
    %v1871 = vmul.f32 %v1867, %v1815
    %v1872 = vmul.f32 %v1868, %v1815
    %v1873 = vadd.f32 %v1869, %v1816
    %v1874 = vadd.f32 %v1870, %v1816
    %v1875 = vadd.f32 %v1871, %v1816
    %v1876 = vadd.f32 %v1872, %v1816
    %v1877 = vpack.c.bf16 %v1874, %v1873
    %v1878 = vpack.c.bf16 %v1876, %v1875
    %v1879 = vld [vmem:[#allocation2 + $0x4e] ss:$0 sm:$0xff]
    %v1884 = vunpack.c.l.b16 %v1230
    %v1885 = vunpack.c.l.b16 %v1231
    %v1886 = vunpack.c.l.b16 %v1232
    %v1887 = vunpack.c.l.b16 %v1233
    %v1888 = vpack.c.b16 %v1885, %v1884
    %v1889 = vpack.c.b16 %v1887, %v1886
    %v1893 = vsel %vm219, %v1877, 0
    %v1896 = vsel %vm219, %v1878, 0
    %1898 = vmatprep.subr.bf16.mxu0 0
    %1899 = vmatpush1.bf16.msra.mxu0 0
    %1900 = vmatprep.subr.bf16.mxu0 0
    %1901 = vmatpush1.bf16.msra.mxu0 0
    %1902 = vmatprep.subr.bf16.mxu0 0
    %1903 = vmatpush1.bf16.msra.mxu0 0
    %1904 = vmatprep.subr.bf16.mxu0 0
    %1905 = vmatpush1.bf16.msra.mxu0 0
    %1906 = vmatprep.subr.bf16.mxu0 0
    %1907 = vmatpush1.bf16.msra.mxu0 0
    %1908 = vmatprep.subr.bf16.mxu0 0
    %1909 = vmatpush1.bf16.msra.mxu0 0
    %1910 = vmatprep.subr.bf16.mxu0 0
    %1911 = vmatpush1.bf16.msra.mxu0 %v1889
    %1912 = vmatprep.subr.bf16.mxu0 0
    %1913 = vmatpush1.bf16.msra.mxu0 %v1888
    %1914 = vmatprep.subr.bf16.mxu0 0
    %1915 = vmatpush2.bf16.msra.mxu0 0
    %1916 = vmatprep.subr.bf16.mxu0 0
    %1917 = vmatpush2.bf16.msra.mxu0 0
    %1918 = vmatprep.subr.bf16.mxu0 0
    %1919 = vmatpush2.bf16.msra.mxu0 0
    %1920 = vmatprep.subr.bf16.mxu0 0
    %1921 = vmatpush2.bf16.msra.mxu0 0
    %1922 = vmatprep.subr.bf16.mxu0 0
    %1923 = vmatpush2.bf16.msra.mxu0 0
    %1924 = vmatprep.subr.bf16.mxu0 0
    %1925 = vmatpush2.bf16.msra.mxu0 0
    %1926 = vmatprep.subr.bf16.mxu0 0
    %1927 = vmatpush2.bf16.msra.mxu0 0
    %1928 = vmatprep.subr.bf16.mxu0 0
    %1929 = vmatpush2.bf16.msra.mxu0 0
    %1930 = vmatprep.mubr.bf16.mxu0 0
    %1931 = vmatmul.mubr.bf16.gmra.mxu0 %v1893
    %v1932 = vpop.f32.mrf.mxu0
    %v1933 = vadd.f32 %v1879, %v1932
    %v1934 = vpop.f32.mrf.mxu0
    %v1935 = vpop.f32.mrf.mxu0
    %v1936 = vadd.f32 %v1879, %v1935
    %v1937 = vpop.f32.mrf.mxu0
    %1938 = vmatprep.mubr.bf16.mxu0 0
    %1939 = vmatmul.mubr.bf16.gmra.mxu0 %v1896
    %v1940 = vpop.f32.mrf.mxu0
    %v1941 = vadd.f32 %v1879, %v1940
    %v1942 = vpop.f32.mrf.mxu0
    %v1943 = vpop.f32.mrf.mxu0
    %v1944 = vadd.f32 %v1879, %v1943
    %v1945 = vpop.f32.mrf.mxu0
    %1946 = vdwg.mxu0
    %v1947 = vmul.f32 %v1933, %v1933
    %v1948 = vmul.f32 %v1936, %v1936
    %v1949 = vmul.f32 %v1941, %v1941
    %v1950 = vmul.f32 %v1944, %v1944
    %v1951 = vmul.f32 %v1933, %v1947
    %v1952 = vmul.f32 %v1936, %v1948
    %v1953 = vmul.f32 %v1941, %v1949
    %v1954 = vmul.f32 %v1944, %v1950
    %v1955 = vmul.f32 %v1951, 0.044715
    %v1956 = vmul.f32 %v1952, 0.044715
    %v1957 = vmul.f32 %v1953, 0.044715
    %v1958 = vmul.f32 %v1954, 0.044715
    %v1959 = vadd.f32 %v1933, %v1955
    %v1960 = vadd.f32 %v1936, %v1956
    %v1961 = vadd.f32 %v1941, %v1957
    %v1962 = vadd.f32 %v1944, %v1958
    %v1963 = vmul.f32 %v1959, 0.7978846
    %v1964 = vmul.f32 %v1960, 0.7978846
    %v1965 = vmul.f32 %v1961, 0.7978846
    %v1966 = vmul.f32 %v1962, 0.7978846
    %v1967 = vtanh.pop %v1963
    %v1968 = vtanh.pop %v1964
    %v1969 = vtanh.pop %v1965
    %v1970 = vtanh.pop %v1966
    %v1971 = vadd.f32 %v1967, 1.0
    %v1972 = vadd.f32 %v1968, 1.0
    %v1973 = vadd.f32 %v1969, 1.0
    %v1974 = vadd.f32 %v1970, 1.0
    %v1975 = vmul.f32 %v1971, 0.5
    %v1976 = vmul.f32 %v1972, 0.5
    %v1977 = vmul.f32 %v1973, 0.5
    %v1978 = vmul.f32 %v1974, 0.5
    %v1979 = vmul.f32 %v1933, %v1975
    %v1980 = vmul.f32 %v1936, %v1976
    %v1981 = vmul.f32 %v1941, %v1977
    %v1982 = vmul.f32 %v1944, %v1978
    %v1983 = vpack.c.bf16 %v1980, %v1979
    %v1984 = vpack.c.bf16 %v1982, %v1981
    %v1985 = vld [vmem:[#allocation2 + $0x4f] ss:$0 sm:$0xff]
    %v1994 = vunpack.c.l.b16 %v1234
    %v1995 = vunpack.c.l.b16 %v1235
    %v1996 = vunpack.c.l.b16 %v1236
    %v1997 = vunpack.c.l.b16 %v1237
    %v1998 = vunpack.c.l.b16 %v1238
    %v1999 = vunpack.c.l.b16 %v1239
    %v2000 = vunpack.c.l.b16 %v1240
    %v2001 = vunpack.c.l.b16 %v1241
    %v2002 = vpack.c.b16 %v1995, %v1994
    %v2003 = vpack.c.b16 %v1997, %v1996
    %v2004 = vpack.c.b16 %v1999, %v1998
    %v2005 = vpack.c.b16 %v2001, %v2000
    %v2011 = vsel %vm1100, %v1983, 0
    %v2014 = vsel %vm1100, %v1984, 0
    %2016 = vmatprep.subr.bf16.mxu0 0
    %2017 = vmatpush1.bf16.msra.mxu0 0
    %2018 = vmatprep.subr.bf16.mxu0 0
    %2019 = vmatpush1.bf16.msra.mxu0 0
    %2020 = vmatprep.subr.bf16.mxu0 0
    %2021 = vmatpush1.bf16.msra.mxu0 0
    %2022 = vmatprep.subr.bf16.mxu0 0
    %2023 = vmatpush1.bf16.msra.mxu0 0
    %2024 = vmatprep.subr.bf16.mxu0 0
    %2025 = vmatpush1.bf16.msra.mxu0 %v2005
    %2026 = vmatprep.subr.bf16.mxu0 0
    %2027 = vmatpush1.bf16.msra.mxu0 %v2004
    %2028 = vmatprep.subr.bf16.mxu0 0
    %2029 = vmatpush1.bf16.msra.mxu0 %v2003
    %2030 = vmatprep.subr.bf16.mxu0 0
    %2031 = vmatpush1.bf16.msra.mxu0 %v2002
    %2032 = vmatprep.subr.bf16.mxu0 0
    %2033 = vmatpush2.bf16.msra.mxu0 0
    %2034 = vmatprep.subr.bf16.mxu0 0
    %2035 = vmatpush2.bf16.msra.mxu0 0
    %2036 = vmatprep.subr.bf16.mxu0 0
    %2037 = vmatpush2.bf16.msra.mxu0 0
    %2038 = vmatprep.subr.bf16.mxu0 0
    %2039 = vmatpush2.bf16.msra.mxu0 0
    %2040 = vmatprep.subr.bf16.mxu0 0
    %2041 = vmatpush2.bf16.msra.mxu0 0
    %2042 = vmatprep.subr.bf16.mxu0 0
    %2043 = vmatpush2.bf16.msra.mxu0 0
    %2044 = vmatprep.subr.bf16.mxu0 0
    %2045 = vmatpush2.bf16.msra.mxu0 0
    %2046 = vmatprep.subr.bf16.mxu0 0
    %2047 = vmatpush2.bf16.msra.mxu0 0
    %2048 = vmatprep.mubr.bf16.mxu0 0
    %2049 = vmatmul.mubr.bf16.gmra.mxu0 %v2011
    %v2050 = vpop.f32.mrf.mxu0
    %v2051 = vadd.f32 %v1985, %v2050
    %v2052 = vpop.f32.mrf.mxu0
    %v2053 = vpop.f32.mrf.mxu0
    %v2054 = vadd.f32 %v1985, %v2053
    %v2055 = vpop.f32.mrf.mxu0
    %2056 = vmatprep.mubr.bf16.mxu0 0
    %2057 = vmatmul.mubr.bf16.gmra.mxu0 %v2014
    %v2058 = vpop.f32.mrf.mxu0
    %v2059 = vadd.f32 %v1985, %v2058
    %v2060 = vpop.f32.mrf.mxu0
    %v2061 = vpop.f32.mrf.mxu0
    %v2062 = vadd.f32 %v1985, %v2061
    %v2063 = vpop.f32.mrf.mxu0
    %2064 = vdwg.mxu0
    %v2065 = vadd.f32 %v2051, %v1873
    %v2066 = vadd.f32 %v2054, %v1874
    %v2067 = vadd.f32 %v2059, %v1875
    %v2068 = vadd.f32 %v2062, %v1876
    %v2069 = vld [vmem:[#allocation2 + $0x60] ss:$0 sm:$0xff]
    %v2070 = vld [vmem:[#allocation2 + $0x61] ss:$0 sm:$0xff]
    %v2071 = vsel %vm219, %v2065, 0.0
    %2072 = vadd.xlane.f32.xlu0 %v2071
    %v2073 = vpop.xlane.xlu0 %2072
    %v2074 = vsel %vm219, %v2066, 0.0
    %2075 = vadd.xlane.f32.xlu0 %v2074
    %v2076 = vpop.xlane.xlu0 %2075
    %v2077 = vsel %vm219, %v2067, 0.0
    %2078 = vadd.xlane.f32.xlu0 %v2077
    %v2079 = vpop.xlane.xlu0 %2078
    %v2080 = vsel %vm219, %v2068, 0.0
    %2081 = vadd.xlane.f32.xlu0 %v2080
    %v2082 = vpop.xlane.xlu0 %2081
    %v2083 = vmul.f32 %v2073, %v232
    %v2084 = vmul.f32 %v2076, %v232
    %v2085 = vmul.f32 %v2079, %v232
    %v2086 = vmul.f32 %v2082, %v232
    %v2087 = vsub.f32 %v2065, %v2083
    %v2088 = vsub.f32 %v2066, %v2084
    %v2089 = vsub.f32 %v2067, %v2085
    %v2090 = vsub.f32 %v2068, %v2086
    %v2091 = vmul.f32 %v2087, %v2087
    %v2092 = vmul.f32 %v2088, %v2088
    %v2093 = vmul.f32 %v2089, %v2089
    %v2094 = vmul.f32 %v2090, %v2090
    %v2095 = vsel %vm219, %v2091, 0.0
    %2096 = vadd.xlane.f32.xlu0 %v2095
    %v2097 = vpop.xlane.xlu0 %2096
    %v2098 = vsel %vm219, %v2092, 0.0
    %2099 = vadd.xlane.f32.xlu0 %v2098
    %v2100 = vpop.xlane.xlu0 %2099
    %v2101 = vsel %vm219, %v2093, 0.0
    %2102 = vadd.xlane.f32.xlu0 %v2101
    %v2103 = vpop.xlane.xlu0 %2102
    %v2104 = vsel %vm219, %v2094, 0.0
    %2105 = vadd.xlane.f32.xlu0 %v2104
    %v2106 = vpop.xlane.xlu0 %2105
    %v2107 = vmul.f32 %v2097, %v232
    %v2108 = vmul.f32 %v2100, %v232
    %v2109 = vmul.f32 %v2103, %v232
    %v2110 = vmul.f32 %v2106, %v232
    %v2111 = vadd.f32 %v2107, 1e-12
    %v2112 = vadd.f32 %v2108, 1e-12
    %v2113 = vadd.f32 %v2109, 1e-12
    %v2114 = vadd.f32 %v2110, 1e-12
    %v2115 = vrsqrt.pop %v2111
    %v2116 = vrsqrt.pop %v2112
    %v2117 = vrsqrt.pop %v2113
    %v2118 = vrsqrt.pop %v2114
    %v2119 = vmul.f32 %v2087, %v2115
    %v2120 = vmul.f32 %v2088, %v2116
    %v2121 = vmul.f32 %v2089, %v2117
    %v2122 = vmul.f32 %v2090, %v2118
    %v2123 = vmul.f32 %v2119, %v2069
    %v2124 = vmul.f32 %v2120, %v2069
    %v2125 = vmul.f32 %v2121, %v2069
    %v2126 = vmul.f32 %v2122, %v2069
    %v2127 = vadd.f32 %v2123, %v2070
    %v2128 = vadd.f32 %v2124, %v2070
    %v2129 = vadd.f32 %v2125, %v2070
    %v2130 = vadd.f32 %v2126, %v2070
    %v2131 = vpack.c.bf16 %v2128, %v2127
    %v2132 = vpack.c.bf16 %v2130, %v2129
    %v2133 = vld [vmem:[#allocation7] sm:$0xff]
    %v2134 = vld [vmem:[#allocation7 + $0x8] sm:$0xf]
    %v2135 = vld [vmem:[#allocation7 + $0xc] sm:$0xff]
    %v2136 = vld [vmem:[#allocation7 + $0x14] sm:$0xf]
    %v2137 = vld [vmem:[#allocation7 + $0x18] sm:$0xff]
    %v2138 = vld [vmem:[#allocation7 + $0x20] sm:$0xf]
    %v2139 = vld [vmem:[#allocation7 + $0x24] sm:$0xff]
    %v2140 = vld [vmem:[#allocation7 + $0x2c] sm:$0xf]
    %v2141 = vld [vmem:[#allocation7 + $0x30] sm:$0xff]
    %v2142 = vld [vmem:[#allocation7 + $0x38] sm:$0xf]
    %v2143 = vld [vmem:[#allocation7 + $0x3c] sm:$0xff]
    %v2144 = vld [vmem:[#allocation7 + $0x44] sm:$0xf]
    %v2145 = vld [vmem:[#allocation7 + $0x48] sm:$0xff]
    %v2146 = vld [vmem:[#allocation7 + $0x50] sm:$0xf]
    %v2147 = vld [vmem:[#allocation7 + $0x54] sm:$0xff]
    %v2148 = vld [vmem:[#allocation7 + $0x5c] sm:$0xf]
    %v2157 = vunpack.c.l.b16 %v2141
    %v2158 = vunpack.c.h.b16 %v2141
    %v2159 = vunpack.c.l.b16 %v2142
    %v2160 = vunpack.c.l.b16 %v2143
    %v2161 = vunpack.c.h.b16 %v2143
    %v2162 = vunpack.c.l.b16 %v2144
    %v2163 = vunpack.c.l.b16 %v2145
    %v2164 = vunpack.c.h.b16 %v2145
    %v2165 = vunpack.c.l.b16 %v2146
    %v2166 = vunpack.c.l.b16 %v2147
    %v2167 = vunpack.c.h.b16 %v2147
    %v2168 = vunpack.c.l.b16 %v2148
    %v2169 = vpack.c.b16 %v2160, %v2157
    %v2170 = vpack.c.b16 %v2161, %v2158
    %v2171 = vpack.c.b16 %v2162, %v2159
    %v2172 = vpack.c.b16 %v2166, %v2163
    %v2173 = vpack.c.b16 %v2167, %v2164
    %v2174 = vpack.c.b16 %v2168, %v2165
    %v2182 = vsel %vm219, %v2131, 0
    %v2185 = vsel %vm219, %v2132, 0
    %2187 = vmatprep.subr.bf16.mxu0 0
    %2188 = vmatpush1.bf16.msra.mxu0 0
    %2189 = vmatprep.subr.bf16.mxu0 0
    %2190 = vmatpush1.bf16.msra.mxu0 0
    %2191 = vmatprep.subr.bf16.mxu0 0
    %2192 = vmatpush1.bf16.msra.mxu0 0
    %2193 = vmatprep.subr.bf16.mxu0 0
    %2194 = vmatpush1.bf16.msra.mxu0 0
    %2195 = vmatprep.subr.bf16.mxu0 0
    %2196 = vmatpush1.bf16.msra.mxu0 0
    %2197 = vmatprep.subr.bf16.mxu0 0
    %2198 = vmatpush1.bf16.msra.mxu0 0
    %2199 = vmatprep.subr.bf16.mxu0 %v2173
    %2200 = vmatpush1.bf16.msra.mxu0 %v2172
    %2201 = vmatprep.subr.bf16.mxu0 %v2170
    %2202 = vmatpush1.bf16.msra.mxu0 %v2169
    %2203 = vmatprep.subr.bf16.mxu0 0
    %2204 = vmatpush2.bf16.msra.mxu0 0
    %2205 = vmatprep.subr.bf16.mxu0 0
    %2206 = vmatpush2.bf16.msra.mxu0 0
    %2207 = vmatprep.subr.bf16.mxu0 0
    %2208 = vmatpush2.bf16.msra.mxu0 0
    %2209 = vmatprep.subr.bf16.mxu0 0
    %2210 = vmatpush2.bf16.msra.mxu0 0
    %2211 = vmatprep.subr.bf16.mxu0 0
    %2212 = vmatpush2.bf16.msra.mxu0 0
    %2213 = vmatprep.subr.bf16.mxu0 0
    %2214 = vmatpush2.bf16.msra.mxu0 0
    %2215 = vmatprep.subr.bf16.mxu0 0
    %2216 = vmatpush2.bf16.msra.mxu0 0
    %2217 = vmatprep.subr.bf16.mxu0 0
    %2218 = vmatpush2.bf16.msra.mxu0 0
    %2219 = vmatprep.mubr.bf16.mxu0 0
    %2220 = vmatmul.mubr.bf16.gmra.mxu0 %v2182
    %v2221 = vpop.f32.mrf.mxu0
    %v2222 = vadd.f32 0.0, %v2221
    %v2223 = vpop.f32.mrf.mxu0
    %v2224 = vadd.f32 0.0, %v2223
    %v2225 = vpop.f32.mrf.mxu0
    %v2226 = vadd.f32 0.0, %v2225
    %v2227 = vpop.f32.mrf.mxu0
    %v2228 = vadd.f32 0.0, %v2227
    %2229 = vmatprep.mubr.bf16.mxu0 0
    %2230 = vmatmul.mubr.bf16.gmra.mxu0 %v2185
    %v2231 = vpop.f32.mrf.mxu0
    %v2232 = vadd.f32 0.0, %v2231
    %v2233 = vpop.f32.mrf.mxu0
    %v2234 = vadd.f32 0.0, %v2233
    %v2235 = vpop.f32.mrf.mxu0
    %v2236 = vadd.f32 0.0, %v2235
    %v2237 = vpop.f32.mrf.mxu0
    %v2238 = vadd.f32 0.0, %v2237
    %2239 = vdwg.mxu0
    %2240 = vmatprep.subr.bf16.mxu0 0
    %2241 = vmatpush1.bf16.msra.mxu0 0
    %2242 = vmatprep.subr.bf16.mxu0 0
    %2243 = vmatpush1.bf16.msra.mxu0 0
    %2244 = vmatprep.subr.bf16.mxu0 0
    %2245 = vmatpush1.bf16.msra.mxu0 0
    %2246 = vmatprep.subr.bf16.mxu0 0
    %2247 = vmatpush1.bf16.msra.mxu0 0
    %2248 = vmatprep.subr.bf16.mxu0 0
    %2249 = vmatpush1.bf16.msra.mxu0 0
    %2250 = vmatprep.subr.bf16.mxu0 0
    %2251 = vmatpush1.bf16.msra.mxu0 0
    %2252 = vmatprep.subr.bf16.mxu0 0
    %2253 = vmatpush1.bf16.msra.mxu0 %v2174
    %2254 = vmatprep.subr.bf16.mxu0 0
    %2255 = vmatpush1.bf16.msra.mxu0 %v2171
    %2256 = vmatprep.subr.bf16.mxu0 0
    %2257 = vmatpush2.bf16.msra.mxu0 0
    %2258 = vmatprep.subr.bf16.mxu0 0
    %2259 = vmatpush2.bf16.msra.mxu0 0
    %2260 = vmatprep.subr.bf16.mxu0 0
    %2261 = vmatpush2.bf16.msra.mxu0 0
    %2262 = vmatprep.subr.bf16.mxu0 0
    %2263 = vmatpush2.bf16.msra.mxu0 0
    %2264 = vmatprep.subr.bf16.mxu0 0
    %2265 = vmatpush2.bf16.msra.mxu0 0
    %2266 = vmatprep.subr.bf16.mxu0 0
    %2267 = vmatpush2.bf16.msra.mxu0 0
    %2268 = vmatprep.subr.bf16.mxu0 0
    %2269 = vmatpush2.bf16.msra.mxu0 0
    %2270 = vmatprep.subr.bf16.mxu0 0
    %2271 = vmatpush2.bf16.msra.mxu0 0
    %2272 = vmatprep.mubr.bf16.mxu0 0
    %2273 = vmatmul.mubr.bf16.gmra.mxu0 %v2182
    %v2274 = vpop.f32.mrf.mxu0
    %v2275 = vadd.f32 0.0, %v2274
    %v2276 = vpop.f32.mrf.mxu0
    %v2277 = vpop.f32.mrf.mxu0
    %v2278 = vadd.f32 0.0, %v2277
    %v2279 = vpop.f32.mrf.mxu0
    %2280 = vmatprep.mubr.bf16.mxu0 0
    %2281 = vmatmul.mubr.bf16.gmra.mxu0 %v2185
    %v2282 = vpop.f32.mrf.mxu0
    %v2283 = vadd.f32 0.0, %v2282
    %v2284 = vpop.f32.mrf.mxu0
    %v2285 = vpop.f32.mrf.mxu0
    %v2286 = vadd.f32 0.0, %v2285
    %v2287 = vpop.f32.mrf.mxu0
    %2288 = vdwg.mxu0
    %vm2301 = vcmask 1046528
    %v2302 = vrot.slane %v2222, 1
    %v2303 = vrot.slane %v2226, 1
    %v2304 = vsel %vm2301, %v2302, %v2303
    %v2305 = vrot.slane %v2224, 1
    %v2306 = vrot.slane %v2228, 1
    %v2307 = vsel %vm2301, %v2305, %v2306
    %v2308 = vrot.slane %v2275, 1
    %v2309 = vrot.slane %v2278, 1
    %v2310 = vsel %vm2301, %v2308, %v2309
    %v2311 = vrot.slane %v2232, 1
    %v2312 = vsel %vm2301, %v2303, %v2311
    %v2313 = vrot.slane %v2234, 1
    %v2314 = vsel %vm2301, %v2306, %v2313
    %v2315 = vrot.slane %v2283, 1
    %v2316 = vsel %vm2301, %v2309, %v2315
    %v2317 = vrot.slane %v2236, 1
    %v2318 = vsel %vm2301, %v2311, %v2317
    %v2319 = vrot.slane %v2238, 1
    %v2320 = vsel %vm2301, %v2313, %v2319
    %v2321 = vrot.slane %v2286, 1
    %v2322 = vsel %vm2301, %v2315, %v2321
    %v2335 = vsel %vm2301, %v2317, 0.0
    %v2336 = vsel %vm2301, %v2319, 0.0
    %v2337 = vsel %vm2301, %v2321, 0.0
    %v2346 = vunpack.c.l.b16 %v2133
    %v2347 = vunpack.c.h.b16 %v2133
    %v2348 = vunpack.c.l.b16 %v2134
    %v2349 = vunpack.c.l.b16 %v2135
    %v2350 = vunpack.c.h.b16 %v2135
    %v2351 = vunpack.c.l.b16 %v2136
    %v2352 = vunpack.c.l.b16 %v2137
    %v2353 = vunpack.c.h.b16 %v2137
    %v2354 = vunpack.c.l.b16 %v2138
    %v2355 = vunpack.c.l.b16 %v2139
    %v2356 = vunpack.c.h.b16 %v2139
    %v2357 = vunpack.c.l.b16 %v2140
    %v2358 = vpack.c.b16 %v2349, %v2346
    %v2359 = vpack.c.b16 %v2350, %v2347
    %v2360 = vpack.c.b16 %v2351, %v2348
    %v2361 = vpack.c.b16 %v2355, %v2352
    %v2362 = vpack.c.b16 %v2356, %v2353
    %v2363 = vpack.c.b16 %v2357, %v2354
    %2370 = vmatprep.subr.bf16.mxu0 0
    %2371 = vmatpush1.bf16.msra.mxu0 0
    %2372 = vmatprep.subr.bf16.mxu0 0
    %2373 = vmatpush1.bf16.msra.mxu0 0
    %2374 = vmatprep.subr.bf16.mxu0 0
    %2375 = vmatpush1.bf16.msra.mxu0 0
    %2376 = vmatprep.subr.bf16.mxu0 0
    %2377 = vmatpush1.bf16.msra.mxu0 0
    %2378 = vmatprep.subr.bf16.mxu0 0
    %2379 = vmatpush1.bf16.msra.mxu0 0
    %2380 = vmatprep.subr.bf16.mxu0 0
    %2381 = vmatpush1.bf16.msra.mxu0 0
    %2382 = vmatprep.subr.bf16.mxu0 %v2362
    %2383 = vmatpush1.bf16.msra.mxu0 %v2361
    %2384 = vmatprep.subr.bf16.mxu0 %v2359
    %2385 = vmatpush1.bf16.msra.mxu0 %v2358
    %2386 = vmatprep.subr.bf16.mxu0 0
    %2387 = vmatpush2.bf16.msra.mxu0 0
    %2388 = vmatprep.subr.bf16.mxu0 0
    %2389 = vmatpush2.bf16.msra.mxu0 0
    %2390 = vmatprep.subr.bf16.mxu0 0
    %2391 = vmatpush2.bf16.msra.mxu0 0
    %2392 = vmatprep.subr.bf16.mxu0 0
    %2393 = vmatpush2.bf16.msra.mxu0 0
    %2394 = vmatprep.subr.bf16.mxu0 0
    %2395 = vmatpush2.bf16.msra.mxu0 0
    %2396 = vmatprep.subr.bf16.mxu0 0
    %2397 = vmatpush2.bf16.msra.mxu0 0
    %2398 = vmatprep.subr.bf16.mxu0 0
    %2399 = vmatpush2.bf16.msra.mxu0 0
    %2400 = vmatprep.subr.bf16.mxu0 0
    %2401 = vmatpush2.bf16.msra.mxu0 0
    %2402 = vmatprep.mubr.bf16.mxu0 0
    %2403 = vmatmul.mubr.bf16.gmra.mxu0 %v2182
    %v2404 = vpop.f32.mrf.mxu0
    %v2405 = vadd.f32 %v2304, %v2404
    %v2406 = vpop.f32.mrf.mxu0
    %v2407 = vadd.f32 %v2307, %v2406
    %v2408 = vpop.f32.mrf.mxu0
    %v2409 = vadd.f32 %v2312, %v2408
    %v2410 = vpop.f32.mrf.mxu0
    %v2411 = vadd.f32 %v2314, %v2410
    %2412 = vmatprep.mubr.bf16.mxu0 0
    %2413 = vmatmul.mubr.bf16.gmra.mxu0 %v2185
    %v2414 = vpop.f32.mrf.mxu0
    %v2415 = vadd.f32 %v2318, %v2414
    %v2416 = vpop.f32.mrf.mxu0
    %v2417 = vadd.f32 %v2320, %v2416
    %v2418 = vpop.f32.mrf.mxu0
    %v2419 = vadd.f32 %v2335, %v2418
    %v2420 = vpop.f32.mrf.mxu0
    %v2421 = vadd.f32 %v2336, %v2420
    %2422 = vdwg.mxu0
    %2423 = vmatprep.subr.bf16.mxu0 0
    %2424 = vmatpush1.bf16.msra.mxu0 0
    %2425 = vmatprep.subr.bf16.mxu0 0
    %2426 = vmatpush1.bf16.msra.mxu0 0
    %2427 = vmatprep.subr.bf16.mxu0 0
    %2428 = vmatpush1.bf16.msra.mxu0 0
    %2429 = vmatprep.subr.bf16.mxu0 0
    %2430 = vmatpush1.bf16.msra.mxu0 0
    %2431 = vmatprep.subr.bf16.mxu0 0
    %2432 = vmatpush1.bf16.msra.mxu0 0
    %2433 = vmatprep.subr.bf16.mxu0 0
    %2434 = vmatpush1.bf16.msra.mxu0 0
    %2435 = vmatprep.subr.bf16.mxu0 0
    %2436 = vmatpush1.bf16.msra.mxu0 %v2363
    %2437 = vmatprep.subr.bf16.mxu0 0
    %2438 = vmatpush1.bf16.msra.mxu0 %v2360
    %2439 = vmatprep.subr.bf16.mxu0 0
    %2440 = vmatpush2.bf16.msra.mxu0 0
    %2441 = vmatprep.subr.bf16.mxu0 0
    %2442 = vmatpush2.bf16.msra.mxu0 0
    %2443 = vmatprep.subr.bf16.mxu0 0
    %2444 = vmatpush2.bf16.msra.mxu0 0
    %2445 = vmatprep.subr.bf16.mxu0 0
    %2446 = vmatpush2.bf16.msra.mxu0 0
    %2447 = vmatprep.subr.bf16.mxu0 0
    %2448 = vmatpush2.bf16.msra.mxu0 0
    %2449 = vmatprep.subr.bf16.mxu0 0
    %2450 = vmatpush2.bf16.msra.mxu0 0
    %2451 = vmatprep.subr.bf16.mxu0 0
    %2452 = vmatpush2.bf16.msra.mxu0 0
    %2453 = vmatprep.subr.bf16.mxu0 0
    %2454 = vmatpush2.bf16.msra.mxu0 0
    %2455 = vmatprep.mubr.bf16.mxu0 0
    %2456 = vmatmul.mubr.bf16.gmra.mxu0 %v2182
    %v2457 = vpop.f32.mrf.mxu0
    %v2458 = vadd.f32 %v2310, %v2457
    %v2459 = vpop.f32.mrf.mxu0
    %v2460 = vpop.f32.mrf.mxu0
    %v2461 = vadd.f32 %v2316, %v2460
    %v2462 = vpop.f32.mrf.mxu0
    %2463 = vmatprep.mubr.bf16.mxu0 0
    %2464 = vmatmul.mubr.bf16.gmra.mxu0 %v2185
    %v2465 = vpop.f32.mrf.mxu0
    %v2466 = vadd.f32 %v2322, %v2465
    %v2467 = vpop.f32.mrf.mxu0
    %v2468 = vpop.f32.mrf.mxu0
    %v2469 = vadd.f32 %v2337, %v2468
    %v2470 = vpop.f32.mrf.mxu0
    %2471 = vdwg.mxu0
    %v2472 = vld [vmem:[#allocation7 + $0x60] sm:$0xff]
    %v2473 = vld [vmem:[#allocation7 + $0x68] sm:$0xf]
    %v2474 = vld [vmem:[#allocation7 + $0x6c] sm:$0xff]
    %v2475 = vld [vmem:[#allocation7 + $0x74] sm:$0xf]
    %v2476 = vld [vmem:[#allocation7 + $0x78] sm:$0xff]
    %v2477 = vld [vmem:[#allocation7 + $0x80] sm:$0xf]
    %v2478 = vld [vmem:[#allocation7 + $0x84] sm:$0xff]
    %v2479 = vld [vmem:[#allocation7 + $0x8c] sm:$0xf]
    %v2488 = vunpack.c.l.b16 %v2472
    %v2489 = vunpack.c.h.b16 %v2472
    %v2490 = vunpack.c.l.b16 %v2473
    %v2491 = vunpack.c.l.b16 %v2474
    %v2492 = vunpack.c.h.b16 %v2474
    %v2493 = vunpack.c.l.b16 %v2475
    %v2494 = vunpack.c.l.b16 %v2476
    %v2495 = vunpack.c.h.b16 %v2476
    %v2496 = vunpack.c.l.b16 %v2477
    %v2497 = vunpack.c.l.b16 %v2478
    %v2498 = vunpack.c.h.b16 %v2478
    %v2499 = vunpack.c.l.b16 %v2479
    %v2500 = vpack.c.b16 %v2491, %v2488
    %v2501 = vpack.c.b16 %v2492, %v2489
    %v2502 = vpack.c.b16 %v2493, %v2490
    %v2503 = vpack.c.b16 %v2497, %v2494
    %v2504 = vpack.c.b16 %v2498, %v2495
    %v2505 = vpack.c.b16 %v2499, %v2496
    %2512 = vmatprep.subr.bf16.mxu0 0
    %2513 = vmatpush1.bf16.msra.mxu0 0
    %2514 = vmatprep.subr.bf16.mxu0 0
    %2515 = vmatpush1.bf16.msra.mxu0 0
    %2516 = vmatprep.subr.bf16.mxu0 0
    %2517 = vmatpush1.bf16.msra.mxu0 0
    %2518 = vmatprep.subr.bf16.mxu0 0
    %2519 = vmatpush1.bf16.msra.mxu0 0
    %2520 = vmatprep.subr.bf16.mxu0 0
    %2521 = vmatpush1.bf16.msra.mxu0 0
    %2522 = vmatprep.subr.bf16.mxu0 0
    %2523 = vmatpush1.bf16.msra.mxu0 0
    %2524 = vmatprep.subr.bf16.mxu0 %v2504
    %2525 = vmatpush1.bf16.msra.mxu0 %v2503
    %2526 = vmatprep.subr.bf16.mxu0 %v2501
    %2527 = vmatpush1.bf16.msra.mxu0 %v2500
    %2528 = vmatprep.subr.bf16.mxu0 0
    %2529 = vmatpush2.bf16.msra.mxu0 0
    %2530 = vmatprep.subr.bf16.mxu0 0
    %2531 = vmatpush2.bf16.msra.mxu0 0
    %2532 = vmatprep.subr.bf16.mxu0 0
    %2533 = vmatpush2.bf16.msra.mxu0 0
    %2534 = vmatprep.subr.bf16.mxu0 0
    %2535 = vmatpush2.bf16.msra.mxu0 0
    %2536 = vmatprep.subr.bf16.mxu0 0
    %2537 = vmatpush2.bf16.msra.mxu0 0
    %2538 = vmatprep.subr.bf16.mxu0 0
    %2539 = vmatpush2.bf16.msra.mxu0 0
    %2540 = vmatprep.subr.bf16.mxu0 0
    %2541 = vmatpush2.bf16.msra.mxu0 0
    %2542 = vmatprep.subr.bf16.mxu0 0
    %2543 = vmatpush2.bf16.msra.mxu0 0
    %2544 = vmatprep.mubr.bf16.mxu0 0
    %2545 = vmatmul.mubr.bf16.gmra.mxu0 %v2182
    %v2546 = vpop.f32.mrf.mxu0
    %v2547 = vadd.f32 0.0, %v2546
    %v2548 = vpop.f32.mrf.mxu0
    %v2549 = vadd.f32 0.0, %v2548
    %v2550 = vpop.f32.mrf.mxu0
    %v2551 = vadd.f32 0.0, %v2550
    %v2552 = vpop.f32.mrf.mxu0
    %v2553 = vadd.f32 0.0, %v2552
    %2554 = vmatprep.mubr.bf16.mxu0 0
    %2555 = vmatmul.mubr.bf16.gmra.mxu0 %v2185
    %v2556 = vpop.f32.mrf.mxu0
    %v2557 = vadd.f32 0.0, %v2556
    %v2558 = vpop.f32.mrf.mxu0
    %v2559 = vadd.f32 0.0, %v2558
    %v2560 = vpop.f32.mrf.mxu0
    %v2561 = vadd.f32 0.0, %v2560
    %v2562 = vpop.f32.mrf.mxu0
    %v2563 = vadd.f32 0.0, %v2562
    %2564 = vdwg.mxu0
    %2565 = vmatprep.subr.bf16.mxu0 0
    %2566 = vmatpush1.bf16.msra.mxu0 0
    %2567 = vmatprep.subr.bf16.mxu0 0
    %2568 = vmatpush1.bf16.msra.mxu0 0
    %2569 = vmatprep.subr.bf16.mxu0 0
    %2570 = vmatpush1.bf16.msra.mxu0 0
    %2571 = vmatprep.subr.bf16.mxu0 0
    %2572 = vmatpush1.bf16.msra.mxu0 0
    %2573 = vmatprep.subr.bf16.mxu0 0
    %2574 = vmatpush1.bf16.msra.mxu0 0
    %2575 = vmatprep.subr.bf16.mxu0 0
    %2576 = vmatpush1.bf16.msra.mxu0 0
    %2577 = vmatprep.subr.bf16.mxu0 0
    %2578 = vmatpush1.bf16.msra.mxu0 %v2505
    %2579 = vmatprep.subr.bf16.mxu0 0
    %2580 = vmatpush1.bf16.msra.mxu0 %v2502
    %2581 = vmatprep.subr.bf16.mxu0 0
    %2582 = vmatpush2.bf16.msra.mxu0 0
    %2583 = vmatprep.subr.bf16.mxu0 0
    %2584 = vmatpush2.bf16.msra.mxu0 0
    %2585 = vmatprep.subr.bf16.mxu0 0
    %2586 = vmatpush2.bf16.msra.mxu0 0
    %2587 = vmatprep.subr.bf16.mxu0 0
    %2588 = vmatpush2.bf16.msra.mxu0 0
    %2589 = vmatprep.subr.bf16.mxu0 0
    %2590 = vmatpush2.bf16.msra.mxu0 0
    %2591 = vmatprep.subr.bf16.mxu0 0
    %2592 = vmatpush2.bf16.msra.mxu0 0
    %2593 = vmatprep.subr.bf16.mxu0 0
    %2594 = vmatpush2.bf16.msra.mxu0 0
    %2595 = vmatprep.subr.bf16.mxu0 0
    %2596 = vmatpush2.bf16.msra.mxu0 0
    %2597 = vmatprep.mubr.bf16.mxu0 0
    %2598 = vmatmul.mubr.bf16.gmra.mxu0 %v2182
    %v2599 = vpop.f32.mrf.mxu0
    %v2600 = vadd.f32 0.0, %v2599
    %v2601 = vpop.f32.mrf.mxu0
    %v2602 = vpop.f32.mrf.mxu0
    %v2603 = vadd.f32 0.0, %v2602
    %v2604 = vpop.f32.mrf.mxu0
    %2605 = vmatprep.mubr.bf16.mxu0 0
    %2606 = vmatmul.mubr.bf16.gmra.mxu0 %v2185
    %v2607 = vpop.f32.mrf.mxu0
    %v2608 = vadd.f32 0.0, %v2607
    %v2609 = vpop.f32.mrf.mxu0
    %v2610 = vpop.f32.mrf.mxu0
    %v2611 = vadd.f32 0.0, %v2610
    %v2612 = vpop.f32.mrf.mxu0
    %2613 = vdwg.mxu0
    %v2626 = vrot.slane %v2547, 2
    %v2627 = vrot.slane %v2551, 2
    %v2628 = vsel %vm111, %v2626, %v2627
    %v2629 = vrot.slane %v2549, 2
    %v2630 = vrot.slane %v2553, 2
    %v2631 = vsel %vm111, %v2629, %v2630
    %v2632 = vrot.slane %v2600, 2
    %v2633 = vrot.slane %v2603, 2
    %v2634 = vsel %vm111, %v2632, %v2633
    %v2635 = vrot.slane %v2557, 2
    %v2636 = vsel %vm111, %v2627, %v2635
    %v2637 = vrot.slane %v2559, 2
    %v2638 = vsel %vm111, %v2630, %v2637
    %v2639 = vrot.slane %v2608, 2
    %v2640 = vsel %vm111, %v2633, %v2639
    %v2641 = vrot.slane %v2561, 2
    %v2642 = vsel %vm111, %v2635, %v2641
    %v2643 = vrot.slane %v2563, 2
    %v2644 = vsel %vm111, %v2637, %v2643
    %v2645 = vrot.slane %v2611, 2
    %v2646 = vsel %vm111, %v2639, %v2645
    %v2659 = vsel %vm111, %v2641, 0.0
    %v2660 = vsel %vm111, %v2643, 0.0
    %v2661 = vsel %vm111, %v2645, 0.0
    %v2662 = vadd.f32 %v2405, %v2628
    %v2663 = vadd.f32 %v2407, %v2631
    %v2664 = vadd.f32 %v2458, %v2634
    %v2665 = vadd.f32 %v2409, %v2636
    %v2666 = vadd.f32 %v2411, %v2638
    %v2667 = vadd.f32 %v2461, %v2640
    %v2668 = vadd.f32 %v2415, %v2642
    %v2669 = vadd.f32 %v2417, %v2644
    %v2670 = vadd.f32 %v2466, %v2646
    %v2671 = vadd.f32 %v2419, %v2659
    %v2672 = vadd.f32 %v2421, %v2660
    %v2673 = vadd.f32 %v2469, %v2661
    %v2674 = vld [vmem:[#allocation7 + $0x90] sm:$0xff]
    %v2675 = vld [vmem:[#allocation7 + $0x98] sm:$0xf]
    %v2676 = vld [vmem:[#allocation7 + $0x9c] sm:$0xff]
    %v2677 = vld [vmem:[#allocation7 + $0xa4] sm:$0xf]
    %v2678 = vld [vmem:[#allocation7 + $0xa8] sm:$0xff]
    %v2679 = vld [vmem:[#allocation7 + $0xb0] sm:$0xf]
    %v2680 = vld [vmem:[#allocation7 + $0xb4] sm:$0xff]
    %v2681 = vld [vmem:[#allocation7 + $0xbc] sm:$0xf]
    %v2690 = vunpack.c.l.b16 %v2674
    %v2691 = vunpack.c.h.b16 %v2674
    %v2692 = vunpack.c.l.b16 %v2675
    %v2693 = vunpack.c.l.b16 %v2676
    %v2694 = vunpack.c.h.b16 %v2676
    %v2695 = vunpack.c.l.b16 %v2677
    %v2696 = vunpack.c.l.b16 %v2678
    %v2697 = vunpack.c.h.b16 %v2678
    %v2698 = vunpack.c.l.b16 %v2679
    %v2699 = vunpack.c.l.b16 %v2680
    %v2700 = vunpack.c.h.b16 %v2680
    %v2701 = vunpack.c.l.b16 %v2681
    %v2702 = vpack.c.b16 %v2693, %v2690
    %v2703 = vpack.c.b16 %v2694, %v2691
    %v2704 = vpack.c.b16 %v2695, %v2692
    %v2705 = vpack.c.b16 %v2699, %v2696
    %v2706 = vpack.c.b16 %v2700, %v2697
    %v2707 = vpack.c.b16 %v2701, %v2698
    %2714 = vmatprep.subr.bf16.mxu0 0
    %2715 = vmatpush1.bf16.msra.mxu0 0
    %2716 = vmatprep.subr.bf16.mxu0 0
    %2717 = vmatpush1.bf16.msra.mxu0 0
    %2718 = vmatprep.subr.bf16.mxu0 0
    %2719 = vmatpush1.bf16.msra.mxu0 0
    %2720 = vmatprep.subr.bf16.mxu0 0
    %2721 = vmatpush1.bf16.msra.mxu0 0
    %2722 = vmatprep.subr.bf16.mxu0 0
    %2723 = vmatpush1.bf16.msra.mxu0 0
    %2724 = vmatprep.subr.bf16.mxu0 0
    %2725 = vmatpush1.bf16.msra.mxu0 0
    %2726 = vmatprep.subr.bf16.mxu0 %v2706
    %2727 = vmatpush1.bf16.msra.mxu0 %v2705
    %2728 = vmatprep.subr.bf16.mxu0 %v2703
    %2729 = vmatpush1.bf16.msra.mxu0 %v2702
    %2730 = vmatprep.subr.bf16.mxu0 0
    %2731 = vmatpush2.bf16.msra.mxu0 0
    %2732 = vmatprep.subr.bf16.mxu0 0
    %2733 = vmatpush2.bf16.msra.mxu0 0
    %2734 = vmatprep.subr.bf16.mxu0 0
    %2735 = vmatpush2.bf16.msra.mxu0 0
    %2736 = vmatprep.subr.bf16.mxu0 0
    %2737 = vmatpush2.bf16.msra.mxu0 0
    %2738 = vmatprep.subr.bf16.mxu0 0
    %2739 = vmatpush2.bf16.msra.mxu0 0
    %2740 = vmatprep.subr.bf16.mxu0 0
    %2741 = vmatpush2.bf16.msra.mxu0 0
    %2742 = vmatprep.subr.bf16.mxu0 0
    %2743 = vmatpush2.bf16.msra.mxu0 0
    %2744 = vmatprep.subr.bf16.mxu0 0
    %2745 = vmatpush2.bf16.msra.mxu0 0
    %2746 = vmatprep.mubr.bf16.mxu0 0
    %2747 = vmatmul.mubr.bf16.gmra.mxu0 %v2182
    %v2748 = vpop.f32.mrf.mxu0
    %v2749 = vadd.f32 0.0, %v2748
    %v2750 = vpop.f32.mrf.mxu0
    %v2751 = vadd.f32 0.0, %v2750
    %v2752 = vpop.f32.mrf.mxu0
    %v2753 = vadd.f32 0.0, %v2752
    %v2754 = vpop.f32.mrf.mxu0
    %v2755 = vadd.f32 0.0, %v2754
    %2756 = vmatprep.mubr.bf16.mxu0 0
    %2757 = vmatmul.mubr.bf16.gmra.mxu0 %v2185
    %v2758 = vpop.f32.mrf.mxu0
    %v2759 = vadd.f32 0.0, %v2758
    %v2760 = vpop.f32.mrf.mxu0
    %v2761 = vadd.f32 0.0, %v2760
    %v2762 = vpop.f32.mrf.mxu0
    %v2763 = vadd.f32 0.0, %v2762
    %v2764 = vpop.f32.mrf.mxu0
    %v2765 = vadd.f32 0.0, %v2764
    %2766 = vdwg.mxu0
    %2767 = vmatprep.subr.bf16.mxu0 0
    %2768 = vmatpush1.bf16.msra.mxu0 0
    %2769 = vmatprep.subr.bf16.mxu0 0
    %2770 = vmatpush1.bf16.msra.mxu0 0
    %2771 = vmatprep.subr.bf16.mxu0 0
    %2772 = vmatpush1.bf16.msra.mxu0 0
    %2773 = vmatprep.subr.bf16.mxu0 0
    %2774 = vmatpush1.bf16.msra.mxu0 0
    %2775 = vmatprep.subr.bf16.mxu0 0
    %2776 = vmatpush1.bf16.msra.mxu0 0
    %2777 = vmatprep.subr.bf16.mxu0 0
    %2778 = vmatpush1.bf16.msra.mxu0 0
    %2779 = vmatprep.subr.bf16.mxu0 0
    %2780 = vmatpush1.bf16.msra.mxu0 %v2707
    %2781 = vmatprep.subr.bf16.mxu0 0
    %2782 = vmatpush1.bf16.msra.mxu0 %v2704
    %2783 = vmatprep.subr.bf16.mxu0 0
    %2784 = vmatpush2.bf16.msra.mxu0 0
    %2785 = vmatprep.subr.bf16.mxu0 0
    %2786 = vmatpush2.bf16.msra.mxu0 0
    %2787 = vmatprep.subr.bf16.mxu0 0
    %2788 = vmatpush2.bf16.msra.mxu0 0
    %2789 = vmatprep.subr.bf16.mxu0 0
    %2790 = vmatpush2.bf16.msra.mxu0 0
    %2791 = vmatprep.subr.bf16.mxu0 0
    %2792 = vmatpush2.bf16.msra.mxu0 0
    %2793 = vmatprep.subr.bf16.mxu0 0
    %2794 = vmatpush2.bf16.msra.mxu0 0
    %2795 = vmatprep.subr.bf16.mxu0 0
    %2796 = vmatpush2.bf16.msra.mxu0 0
    %2797 = vmatprep.subr.bf16.mxu0 0
    %2798 = vmatpush2.bf16.msra.mxu0 0
    %2799 = vmatprep.mubr.bf16.mxu0 0
    %2800 = vmatmul.mubr.bf16.gmra.mxu0 %v2182
    %v2801 = vpop.f32.mrf.mxu0
    %v2802 = vadd.f32 0.0, %v2801
    %v2803 = vpop.f32.mrf.mxu0
    %v2804 = vpop.f32.mrf.mxu0
    %v2805 = vadd.f32 0.0, %v2804
    %v2806 = vpop.f32.mrf.mxu0
    %2807 = vmatprep.mubr.bf16.mxu0 0
    %2808 = vmatmul.mubr.bf16.gmra.mxu0 %v2185
    %v2809 = vpop.f32.mrf.mxu0
    %v2810 = vadd.f32 0.0, %v2809
    %v2811 = vpop.f32.mrf.mxu0
    %v2812 = vpop.f32.mrf.mxu0
    %v2813 = vadd.f32 0.0, %v2812
    %v2814 = vpop.f32.mrf.mxu0
    %2815 = vdwg.mxu0
    %vm2828 = vcmask 1044480
    %v2829 = vrot.slane %v2749, 3
    %v2830 = vrot.slane %v2753, 3
    %v2831 = vsel %vm2828, %v2829, %v2830
    %v2832 = vrot.slane %v2751, 3
    %v2833 = vrot.slane %v2755, 3
    %v2834 = vsel %vm2828, %v2832, %v2833
    %v2835 = vrot.slane %v2802, 3
    %v2836 = vrot.slane %v2805, 3
    %v2837 = vsel %vm2828, %v2835, %v2836
    %v2838 = vrot.slane %v2759, 3
    %v2839 = vsel %vm2828, %v2830, %v2838
    %v2840 = vrot.slane %v2761, 3
    %v2841 = vsel %vm2828, %v2833, %v2840
    %v2842 = vrot.slane %v2810, 3
    %v2843 = vsel %vm2828, %v2836, %v2842
    %v2844 = vrot.slane %v2763, 3
    %v2845 = vsel %vm2828, %v2838, %v2844
    %v2846 = vrot.slane %v2765, 3
    %v2847 = vsel %vm2828, %v2840, %v2846
    %v2848 = vrot.slane %v2813, 3
    %v2849 = vsel %vm2828, %v2842, %v2848
    %v2862 = vsel %vm2828, %v2844, 0.0
    %v2863 = vsel %vm2828, %v2846, 0.0
    %v2864 = vsel %vm2828, %v2848, 0.0
    %v2865 = vadd.f32 %v2662, %v2831
    %v2866 = vadd.f32 %v2663, %v2834
    %v2867 = vadd.f32 %v2664, %v2837
    %v2868 = vadd.f32 %v2665, %v2839
    %v2869 = vadd.f32 %v2666, %v2841
    %v2870 = vadd.f32 %v2667, %v2843
    %v2871 = vadd.f32 %v2668, %v2845
    %v2872 = vadd.f32 %v2669, %v2847
    %v2873 = vadd.f32 %v2670, %v2849
    %v2874 = vadd.f32 %v2671, %v2862
    %v2875 = vadd.f32 %v2672, %v2863
    %v2876 = vadd.f32 %v2673, %v2864
    %s2877 = scalar_lea.vmem [#allocation2], 98
    %v2878 = vld [vmem:[%s2877] ss:$8 sm:$0x7]
    %v2880 = vlaneseq
    %v2881 = vshrl.u32 %v2880, 7
    %v2882 = vsub.s32 0, %v2881
    %v2883 = vrot.slane %v2878, %v2882
    %v2884 = vlaneseq
    %v2885 = vshrl.u32 %v2884, 7
    %v2886 = vsub.s32 1, %v2885
    %v2887 = vrot.slane %v2878, %v2886
    %v2888 = vlaneseq
    %v2889 = vshrl.u32 %v2888, 7
    %v2890 = vsub.s32 2, %v2889
    %v2891 = vrot.slane %v2878, %v2890
    %v2895 = vadd.f32 %v2865, %v2883
    %v2896 = vadd.f32 %v2866, %v2887
    %v2897 = vadd.f32 %v2867, %v2891
    %v2898 = vadd.f32 %v2868, %v2883
    %v2899 = vadd.f32 %v2869, %v2887
    %v2900 = vadd.f32 %v2870, %v2891
    %v2901 = vadd.f32 %v2871, %v2883
    %v2902 = vadd.f32 %v2872, %v2887
    %v2903 = vadd.f32 %v2873, %v2891
    %v2904 = vadd.f32 %v2874, %v2883
    %v2905 = vadd.f32 %v2875, %v2887
    %v2906 = vadd.f32 %v2876, %v2891
    %v2907 = vmax.f32 %v2895, 0.0
    %v2908 = vmax.f32 %v2896, 0.0
    %v2909 = vmax.f32 %v2897, 0.0
    %v2910 = vmax.f32 %v2898, 0.0
    %v2911 = vmax.f32 %v2899, 0.0
    %v2912 = vmax.f32 %v2900, 0.0
    %v2913 = vmax.f32 %v2901, 0.0
    %v2914 = vmax.f32 %v2902, 0.0
    %v2915 = vmax.f32 %v2903, 0.0
    %v2916 = vmax.f32 %v2904, 0.0
    %v2917 = vmax.f32 %v2905, 0.0
    %v2918 = vmax.f32 %v2906, 0.0
    %v2919 = vsel %vm2301, %v2910, -inf
    %v2920 = vmax.f32 %v2907, %v2919
    %v2921 = vrot.slane %v2920, 4
    %v2922 = vmax.f32 %v2920, %v2921
    %v2923 = vrot.slane %v2922, 2
    %v2924 = vmax.f32 %v2922, %v2923
    %v2925 = vrot.slane %v2924, 1
    %v2926 = vmax.f32 %v2924, %v2925
    %v2927 = vsel %vm111, %v2911, -inf
    %v2928 = vmax.f32 %v2908, %v2927
    %v2929 = vrot.slane %v2928, 4
    %v2930 = vmax.f32 %v2928, %v2929
    %v2931 = vrot.slane %v2930, 2
    %v2932 = vmax.f32 %v2930, %v2931
    %v2933 = vrot.slane %v2932, 1
    %v2934 = vmax.f32 %v2932, %v2933
    %v2935 = vsel %vm2828, %v2912, -inf
    %v2936 = vmax.f32 %v2909, %v2935
    %v2937 = vrot.slane %v2936, 4
    %v2938 = vmax.f32 %v2936, %v2937
    %v2939 = vrot.slane %v2938, 2
    %v2940 = vmax.f32 %v2938, %v2939
    %v2941 = vrot.slane %v2940, 1
    %v2942 = vmax.f32 %v2940, %v2941
    %v2943 = vsel %vm2301, %v2916, -inf
    %v2944 = vmax.f32 %v2913, %v2943
    %v2945 = vrot.slane %v2944, 4
    %v2946 = vmax.f32 %v2944, %v2945
    %v2947 = vrot.slane %v2946, 2
    %v2948 = vmax.f32 %v2946, %v2947
    %v2949 = vrot.slane %v2948, 1
    %v2950 = vmax.f32 %v2948, %v2949
    %v2951 = vsel %vm111, %v2917, -inf
    %v2952 = vmax.f32 %v2914, %v2951
    %v2953 = vrot.slane %v2952, 4
    %v2954 = vmax.f32 %v2952, %v2953
    %v2955 = vrot.slane %v2954, 2
    %v2956 = vmax.f32 %v2954, %v2955
    %v2957 = vrot.slane %v2956, 1
    %v2958 = vmax.f32 %v2956, %v2957
    %v2959 = vsel %vm2828, %v2918, -inf
    %v2960 = vmax.f32 %v2915, %v2959
    %v2961 = vrot.slane %v2960, 4
    %v2962 = vmax.f32 %v2960, %v2961
    %v2963 = vrot.slane %v2962, 2
    %v2964 = vmax.f32 %v2962, %v2963
    %v2965 = vrot.slane %v2964, 1
    %v2966 = vmax.f32 %v2964, %v2965
    %v2970 = vrot.slane %v2950, 7
    %v2971 = vrot.slane %v2958, 7
    %v2972 = vrot.slane %v2966, 7
    %vm2976 = vcmask 1040384
    %v2977 = vsel %vm2976, %v2926, %v2970
    %v2978 = vsel %vm2976, %v2934, %v2971
    %v2979 = vsel %vm2976, %v2942, %v2972
    %v2980 = vld [vmem:[#allocation7 + $0xc0] sm:$0xff]
    %v2981 = vld [vmem:[#allocation7 + $0xcc] sm:$0xff]
    %v2982 = vld [vmem:[#allocation7 + $0xd8] sm:$0xff]
    %v2983 = vld [vmem:[#allocation7 + $0xe4] sm:$0xff]
    %v2984 = vld [vmem:[#allocation7 + $0xf0] sm:$0xff]
    %v2985 = vld [vmem:[#allocation7 + $0xfc] sm:$0xff]
    %v2986 = vld [vmem:[#allocation7 + $0x108] sm:$0xff]
    %v2987 = vld [vmem:[#allocation7 + $0x114] sm:$0xff]
    %v2988 = vld [vmem:[#allocation7 + $0x120] sm:$0xff]
    %v2989 = vld [vmem:[#allocation7 + $0x12c] sm:$0xff]
    %v2990 = vld [vmem:[#allocation7 + $0x138] sm:$0xff]
    %v2991 = vld [vmem:[#allocation7 + $0x144] sm:$0xff]
    %v2992 = vld [vmem:[#allocation7 + $0x150] sm:$0xff]
    %v2993 = vld [vmem:[#allocation7 + $0x15c] sm:$0xff]
    %v2994 = vld [vmem:[#allocation7 + $0x168] sm:$0xff]
    %v2995 = vld [vmem:[#allocation7 + $0x174] sm:$0xff]
    %v2996 = vld [vmem:[#allocation7 + $0x180] sm:$0xff]
    %v2997 = vld [vmem:[#allocation7 + $0x18c] sm:$0xff]
    %v2998 = vld [vmem:[#allocation7 + $0x198] sm:$0xff]
    %v2999 = vld [vmem:[#allocation7 + $0x1a4] sm:$0xff]
    %v3000 = vld [vmem:[#allocation7 + $0x1b0] sm:$0xff]
    %v3001 = vld [vmem:[#allocation7 + $0x1bc] sm:$0xff]
    %v3002 = vld [vmem:[#allocation7 + $0x1c8] sm:$0xff]
    %v3003 = vld [vmem:[#allocation7 + $0x1d4] sm:$0xff]
    %v3004 = vld [vmem:[#allocation7 + $0x1e0] sm:$0xff]
    %v3005 = vld [vmem:[#allocation7 + $0x1ec] sm:$0xff]
    %v3006 = vld [vmem:[#allocation7 + $0x1f8] sm:$0xff]
    %v3007 = vld [vmem:[#allocation7 + $0x204] sm:$0xff]
    %v3008 = vld [vmem:[#allocation7 + $0x210] sm:$0xff]
    %v3009 = vld [vmem:[#allocation7 + $0x21c] sm:$0xff]
    %v3010 = vld [vmem:[#allocation7 + $0x228] sm:$0xff]
    %v3011 = vld [vmem:[#allocation7 + $0x234] sm:$0xff]
    %v3012 = vld [vmem:[#allocation7 + $0x240] sm:$0xff]
    %v3013 = vld [vmem:[#allocation7 + $0x24c] sm:$0xff]
    %v3014 = vld [vmem:[#allocation7 + $0x258] sm:$0xff]
    %v3015 = vld [vmem:[#allocation7 + $0x264] sm:$0xff]
    %v3016 = vld [vmem:[#allocation7 + $0x270] sm:$0xff]
    %v3017 = vld [vmem:[#allocation7 + $0x27c] sm:$0xff]
    %v3018 = vld [vmem:[#allocation7 + $0x288] sm:$0xff]
    %v3019 = vld [vmem:[#allocation7 + $0x294] sm:$0xff]
    %v3020 = vld [vmem:[#allocation7 + $0x2a0] sm:$0xff]
    %v3021 = vld [vmem:[#allocation7 + $0x2ac] sm:$0xff]
    %v3022 = vld [vmem:[#allocation7 + $0x2b8] sm:$0xff]
    %v3023 = vld [vmem:[#allocation7 + $0x2c4] sm:$0xff]
    %v3024 = vld [vmem:[#allocation7 + $0x2d0] sm:$0xff]
    %v3025 = vld [vmem:[#allocation7 + $0x2dc] sm:$0xff]
    %v3026 = vld [vmem:[#allocation7 + $0x2e8] sm:$0xff]
    %v3027 = vld [vmem:[#allocation7 + $0x2f4] sm:$0xff]
    %v3028 = vpack.c.bf16 %v2977, %v2977
    %v3029 = vpack.c.bf16 %v2978, %v2978
    %v3030 = vpack.c.bf16 %v2979, %v2979
    %s3031 = scalar_lea.vmem [#allocation2], 99
    %v3032 = vld [vmem:[%s3031] ss:$8 sm:$0x3]
    %v3034 = vlaneseq
    %v3035 = vshrl.u32 %v3034, 7
    %v3036 = vsub.s32 0, %v3035
    %v3037 = vrot.slane %v3032, %v3036
    %v3038 = vlaneseq
    %v3039 = vshrl.u32 %v3038, 7
    %v3040 = vsub.s32 1, %v3039
    %v3041 = vrot.slane %v3032, %v3040
    %v3092 = vunpack.c.l.b16 %v2980
    %v3093 = vunpack.c.h.b16 %v2980
    %v3094 = vunpack.c.l.b16 %v2981
    %v3095 = vunpack.c.h.b16 %v2981
    %v3096 = vunpack.c.l.b16 %v2982
    %v3097 = vunpack.c.h.b16 %v2982
    %v3098 = vunpack.c.l.b16 %v2983
    %v3099 = vunpack.c.h.b16 %v2983
    %v3100 = vunpack.c.l.b16 %v2984
    %v3101 = vunpack.c.h.b16 %v2984
    %v3102 = vunpack.c.l.b16 %v2985
    %v3103 = vunpack.c.h.b16 %v2985
    %v3104 = vunpack.c.l.b16 %v2986
    %v3105 = vunpack.c.h.b16 %v2986
    %v3106 = vunpack.c.l.b16 %v2987
    %v3107 = vunpack.c.h.b16 %v2987
    %v3108 = vunpack.c.l.b16 %v2988
    %v3109 = vunpack.c.h.b16 %v2988
    %v3110 = vunpack.c.l.b16 %v2989
    %v3111 = vunpack.c.h.b16 %v2989
    %v3112 = vunpack.c.l.b16 %v2990
    %v3113 = vunpack.c.h.b16 %v2990
    %v3114 = vunpack.c.l.b16 %v2991
    %v3115 = vunpack.c.h.b16 %v2991
    %v3116 = vunpack.c.l.b16 %v2992
    %v3117 = vunpack.c.h.b16 %v2992
    %v3118 = vunpack.c.l.b16 %v2993
    %v3119 = vunpack.c.h.b16 %v2993
    %v3120 = vunpack.c.l.b16 %v2994
    %v3121 = vunpack.c.h.b16 %v2994
    %v3122 = vunpack.c.l.b16 %v2995
    %v3123 = vunpack.c.h.b16 %v2995
    %v3124 = vunpack.c.l.b16 %v2996
    %v3125 = vunpack.c.h.b16 %v2996
    %v3126 = vunpack.c.l.b16 %v2997
    %v3127 = vunpack.c.h.b16 %v2997
    %v3128 = vunpack.c.l.b16 %v2998
    %v3129 = vunpack.c.h.b16 %v2998
    %v3130 = vunpack.c.l.b16 %v2999
    %v3131 = vunpack.c.h.b16 %v2999
    %v3132 = vunpack.c.l.b16 %v3000
    %v3133 = vunpack.c.h.b16 %v3000
    %v3134 = vunpack.c.l.b16 %v3001
    %v3135 = vunpack.c.h.b16 %v3001
    %v3136 = vunpack.c.l.b16 %v3002
    %v3137 = vunpack.c.h.b16 %v3002
    %v3138 = vunpack.c.l.b16 %v3003
    %v3139 = vunpack.c.h.b16 %v3003
    %v3140 = vunpack.c.l.b16 %v3004
    %v3141 = vunpack.c.h.b16 %v3004
    %v3142 = vunpack.c.l.b16 %v3005
    %v3143 = vunpack.c.h.b16 %v3005
    %v3144 = vunpack.c.l.b16 %v3006
    %v3145 = vunpack.c.h.b16 %v3006
    %v3146 = vunpack.c.l.b16 %v3007
    %v3147 = vunpack.c.h.b16 %v3007
    %v3148 = vunpack.c.l.b16 %v3008
    %v3149 = vunpack.c.h.b16 %v3008
    %v3150 = vunpack.c.l.b16 %v3009
    %v3151 = vunpack.c.h.b16 %v3009
    %v3152 = vunpack.c.l.b16 %v3010
    %v3153 = vunpack.c.h.b16 %v3010
    %v3154 = vunpack.c.l.b16 %v3011
    %v3155 = vunpack.c.h.b16 %v3011
    %v3156 = vunpack.c.l.b16 %v3012
    %v3157 = vunpack.c.h.b16 %v3012
    %v3158 = vunpack.c.l.b16 %v3013
    %v3159 = vunpack.c.h.b16 %v3013
    %v3160 = vunpack.c.l.b16 %v3014
    %v3161 = vunpack.c.h.b16 %v3014
    %v3162 = vunpack.c.l.b16 %v3015
    %v3163 = vunpack.c.h.b16 %v3015
    %v3164 = vunpack.c.l.b16 %v3016
    %v3165 = vunpack.c.h.b16 %v3016
    %v3166 = vunpack.c.l.b16 %v3017
    %v3167 = vunpack.c.h.b16 %v3017
    %v3168 = vunpack.c.l.b16 %v3018
    %v3169 = vunpack.c.h.b16 %v3018
    %v3170 = vunpack.c.l.b16 %v3019
    %v3171 = vunpack.c.h.b16 %v3019
    %v3172 = vunpack.c.l.b16 %v3020
    %v3173 = vunpack.c.h.b16 %v3020
    %v3174 = vunpack.c.l.b16 %v3021
    %v3175 = vunpack.c.h.b16 %v3021
    %v3176 = vunpack.c.l.b16 %v3022
    %v3177 = vunpack.c.h.b16 %v3022
    %v3178 = vunpack.c.l.b16 %v3023
    %v3179 = vunpack.c.h.b16 %v3023
    %v3180 = vunpack.c.l.b16 %v3024
    %v3181 = vunpack.c.h.b16 %v3024
    %v3182 = vunpack.c.l.b16 %v3025
    %v3183 = vunpack.c.h.b16 %v3025
    %v3184 = vunpack.c.l.b16 %v3026
    %v3185 = vunpack.c.h.b16 %v3026
    %v3186 = vunpack.c.l.b16 %v3027
    %v3187 = vunpack.c.h.b16 %v3027
    %v3188 = vpack.c.b16 %v3094, %v3092
    %v3189 = vpack.c.b16 %v3095, %v3093
    %v3190 = vpack.c.b16 %v3098, %v3096
    %v3191 = vpack.c.b16 %v3099, %v3097
    %v3192 = vpack.c.b16 %v3102, %v3100
    %v3193 = vpack.c.b16 %v3103, %v3101
    %v3194 = vpack.c.b16 %v3106, %v3104
    %v3195 = vpack.c.b16 %v3107, %v3105
    %v3196 = vpack.c.b16 %v3110, %v3108
    %v3197 = vpack.c.b16 %v3111, %v3109
    %v3198 = vpack.c.b16 %v3114, %v3112
    %v3199 = vpack.c.b16 %v3115, %v3113
    %v3200 = vpack.c.b16 %v3118, %v3116
    %v3201 = vpack.c.b16 %v3119, %v3117
    %v3202 = vpack.c.b16 %v3122, %v3120
    %v3203 = vpack.c.b16 %v3123, %v3121
    %v3204 = vpack.c.b16 %v3126, %v3124
    %v3205 = vpack.c.b16 %v3127, %v3125
    %v3206 = vpack.c.b16 %v3130, %v3128
    %v3207 = vpack.c.b16 %v3131, %v3129
    %v3208 = vpack.c.b16 %v3134, %v3132
    %v3209 = vpack.c.b16 %v3135, %v3133
    %v3210 = vpack.c.b16 %v3138, %v3136
    %v3211 = vpack.c.b16 %v3139, %v3137
    %v3212 = vpack.c.b16 %v3142, %v3140
    %v3213 = vpack.c.b16 %v3143, %v3141
    %v3214 = vpack.c.b16 %v3146, %v3144
    %v3215 = vpack.c.b16 %v3147, %v3145
    %v3216 = vpack.c.b16 %v3150, %v3148
    %v3217 = vpack.c.b16 %v3151, %v3149
    %v3218 = vpack.c.b16 %v3154, %v3152
    %v3219 = vpack.c.b16 %v3155, %v3153
    %v3220 = vpack.c.b16 %v3158, %v3156
    %v3221 = vpack.c.b16 %v3159, %v3157
    %v3222 = vpack.c.b16 %v3162, %v3160
    %v3223 = vpack.c.b16 %v3163, %v3161
    %v3224 = vpack.c.b16 %v3166, %v3164
    %v3225 = vpack.c.b16 %v3167, %v3165
    %v3226 = vpack.c.b16 %v3170, %v3168
    %v3227 = vpack.c.b16 %v3171, %v3169
    %v3228 = vpack.c.b16 %v3174, %v3172
    %v3229 = vpack.c.b16 %v3175, %v3173
    %v3230 = vpack.c.b16 %v3178, %v3176
    %v3231 = vpack.c.b16 %v3179, %v3177
    %v3232 = vpack.c.b16 %v3182, %v3180
    %v3233 = vpack.c.b16 %v3183, %v3181
    %v3234 = vpack.c.b16 %v3186, %v3184
    %v3235 = vpack.c.b16 %v3187, %v3185
    %3284 = vmatprep.subr.bf16.mxu0 %v3203
    %3285 = vmatpush1.bf16.msra.mxu0 %v3202
    %3286 = vmatprep.subr.bf16.mxu0 %v3201
    %3287 = vmatpush1.bf16.msra.mxu0 %v3200
    %3288 = vmatprep.subr.bf16.mxu0 %v3199
    %3289 = vmatpush1.bf16.msra.mxu0 %v3198
    %3290 = vmatprep.subr.bf16.mxu0 %v3197
    %3291 = vmatpush1.bf16.msra.mxu0 %v3196
    %3292 = vmatprep.subr.bf16.mxu0 %v3195
    %3293 = vmatpush1.bf16.msra.mxu0 %v3194
    %3294 = vmatprep.subr.bf16.mxu0 %v3193
    %3295 = vmatpush1.bf16.msra.mxu0 %v3192
    %3296 = vmatprep.subr.bf16.mxu0 %v3191
    %3297 = vmatpush1.bf16.msra.mxu0 %v3190
    %3298 = vmatprep.subr.bf16.mxu0 %v3189
    %3299 = vmatpush1.bf16.msra.mxu0 %v3188
    %3300 = vmatprep.subr.bf16.mxu0 %v3219
    %3301 = vmatpush2.bf16.msra.mxu0 %v3218
    %3302 = vmatprep.subr.bf16.mxu0 %v3217
    %3303 = vmatpush2.bf16.msra.mxu0 %v3216
    %3304 = vmatprep.subr.bf16.mxu0 %v3215
    %3305 = vmatpush2.bf16.msra.mxu0 %v3214
    %3306 = vmatprep.subr.bf16.mxu0 %v3213
    %3307 = vmatpush2.bf16.msra.mxu0 %v3212
    %3308 = vmatprep.subr.bf16.mxu0 %v3211
    %3309 = vmatpush2.bf16.msra.mxu0 %v3210
    %3310 = vmatprep.subr.bf16.mxu0 %v3209
    %3311 = vmatpush2.bf16.msra.mxu0 %v3208
    %3312 = vmatprep.subr.bf16.mxu0 %v3207
    %3313 = vmatpush2.bf16.msra.mxu0 %v3206
    %3314 = vmatprep.subr.bf16.mxu0 %v3205
    %3315 = vmatpush2.bf16.msra.mxu0 %v3204
    %3316 = vmatprep.mubr.bf16.mxu0 %v3029
    %3317 = vmatmul.mubr.bf16.gmra.mxu0 %v3028
    %v3318 = vpop.f32.mrf.mxu0
    %v3319 = vadd.f32 %v3037, %v3318
    %v3320 = vpop.f32.mrf.mxu0
    %v3321 = vadd.f32 %v3041, %v3320
    %v3322 = vpop.f32.mrf.mxu0
    %v3323 = vpop.f32.mrf.mxu0
    %3324 = vdwg.mxu0
    %3325 = vmatprep.subr.bf16.mxu0 %v3235
    %3326 = vmatpush1.bf16.msra.mxu0 %v3234
    %3327 = vmatprep.subr.bf16.mxu0 %v3233
    %3328 = vmatpush1.bf16.msra.mxu0 %v3232
    %3329 = vmatprep.subr.bf16.mxu0 %v3231
    %3330 = vmatpush1.bf16.msra.mxu0 %v3230
    %3331 = vmatprep.subr.bf16.mxu0 %v3229
    %3332 = vmatpush1.bf16.msra.mxu0 %v3228
    %3333 = vmatprep.subr.bf16.mxu0 %v3227
    %3334 = vmatpush1.bf16.msra.mxu0 %v3226
    %3335 = vmatprep.subr.bf16.mxu0 %v3225
    %3336 = vmatpush1.bf16.msra.mxu0 %v3224
    %3337 = vmatprep.subr.bf16.mxu0 %v3223
    %3338 = vmatpush1.bf16.msra.mxu0 %v3222
    %3339 = vmatprep.subr.bf16.mxu0 %v3221
    %3340 = vmatpush1.bf16.msra.mxu0 %v3220
    %3341 = vmatprep.subr.bf16.mxu0 0
    %3342 = vmatpush2.bf16.msra.mxu0 0
    %3343 = vmatprep.subr.bf16.mxu0 0
    %3344 = vmatpush2.bf16.msra.mxu0 0
    %3345 = vmatprep.subr.bf16.mxu0 0
    %3346 = vmatpush2.bf16.msra.mxu0 0
    %3347 = vmatprep.subr.bf16.mxu0 0
    %3348 = vmatpush2.bf16.msra.mxu0 0
    %3349 = vmatprep.subr.bf16.mxu0 0
    %3350 = vmatpush2.bf16.msra.mxu0 0
    %3351 = vmatprep.subr.bf16.mxu0 0
    %3352 = vmatpush2.bf16.msra.mxu0 0
    %3353 = vmatprep.subr.bf16.mxu0 0
    %3354 = vmatpush2.bf16.msra.mxu0 0
    %3355 = vmatprep.subr.bf16.mxu0 0
    %3356 = vmatpush2.bf16.msra.mxu0 0
    %3357 = vmatprep.mubr.bf16.mxu0 0
    %3358 = vmatmul.mubr.bf16.gmra.mxu0 %v3030
    %v3359 = vpop.f32.mrf.mxu0
    %v3360 = vadd.f32 %v3319, %v3359
    %v3361 = vpop.f32.mrf.mxu0
    %v3362 = vadd.f32 %v3321, %v3361
    %v3363 = vpop.f32.mrf.mxu0
    %v3364 = vpop.f32.mrf.mxu0
    %3365 = vdwg.mxu0
    %s3366 = scalar_lea.vmem [#allocation2], 100
    %v3367 = vld [vmem:[%s3366] ss:$8 sm:$0x3]
    %v3369 = vlaneseq
    %v3370 = vshrl.u32 %v3369, 7
    %v3371 = vsub.s32 0, %v3370
    %v3372 = vrot.slane %v3367, %v3371
    %v3373 = vlaneseq
    %v3374 = vshrl.u32 %v3373, 7
    %v3375 = vsub.s32 1, %v3374
    %v3376 = vrot.slane %v3367, %v3375
    %v3379 = vmul.f32 %v3360, %v3372
    %v3380 = vmul.f32 %v3362, %v3376
    %s3381 = scalar_lea.vmem [#allocation2], 101
    %v3382 = vld [vmem:[%s3381] ss:$8 sm:$0x3]
    %v3384 = vlaneseq
    %v3385 = vshrl.u32 %v3384, 7
    %v3386 = vsub.s32 0, %v3385
    %v3387 = vrot.slane %v3382, %v3386
    %v3388 = vlaneseq
    %v3389 = vshrl.u32 %v3388, 7
    %v3390 = vsub.s32 1, %v3389
    %v3391 = vrot.slane %v3382, %v3390
    %v3394 = vadd.f32 %v3379, %v3387
    %v3395 = vadd.f32 %v3380, %v3391
    %v3396 = vmax.f32 %v3394, 0.0
    %v3397 = vmax.f32 %v3395, 0.0
    %v3398 = vld [vmem:[#allocation5 + $0xd8] sm:$0xf]
    %v3399 = vld [vmem:[#allocation5 + $0xdc] sm:$0xf]
    %v3400 = vld [vmem:[#allocation5 + $0xe0] sm:$0xf]
    %v3401 = vld [vmem:[#allocation5 + $0xe4] sm:$0xf]
    %v3402 = vld [vmem:[#allocation5 + $0xe8] sm:$0xf]
    %v3403 = vld [vmem:[#allocation5 + $0xec] sm:$0xf]
    %v3404 = vld [vmem:[#allocation5 + $0xf0] sm:$0xf]
    %v3405 = vld [vmem:[#allocation5 + $0xf4] sm:$0xf]
    %v3406 = vld [vmem:[#allocation5 + $0xf8] sm:$0xf]
    %v3407 = vld [vmem:[#allocation5 + $0xfc] sm:$0xf]
    %v3408 = vld [vmem:[#allocation5 + $0x100] sm:$0xf]
    %v3409 = vld [vmem:[#allocation5 + $0x104] sm:$0xf]
    %v3410 = vld [vmem:[#allocation5 + $0x108] sm:$0xf]
    %v3411 = vld [vmem:[#allocation5 + $0x10c] sm:$0xf]
    %v3412 = vld [vmem:[#allocation5 + $0x110] sm:$0xf]
    %v3413 = vld [vmem:[#allocation5 + $0x114] sm:$0xf]
    %v3414 = vld [vmem:[#allocation5 + $0x118] sm:$0xf]
    %v3415 = vld [vmem:[#allocation5 + $0x11c] sm:$0xf]
    %v3416 = vld [vmem:[#allocation5 + $0x120] sm:$0xf]
    %v3417 = vld [vmem:[#allocation5 + $0x124] sm:$0xf]
    %v3418 = vld [vmem:[#allocation5 + $0x128] sm:$0xf]
    %v3419 = vld [vmem:[#allocation5 + $0x12c] sm:$0xf]
    %v3420 = vld [vmem:[#allocation5 + $0x130] sm:$0xf]
    %v3421 = vld [vmem:[#allocation5 + $0x134] sm:$0xf]
    %v3422 = vld [vmem:[#allocation5 + $0x138] sm:$0xf]
    %v3423 = vld [vmem:[#allocation5 + $0x13c] sm:$0xf]
    %v3424 = vld [vmem:[#allocation5 + $0x140] sm:$0xf]
    %v3425 = vld [vmem:[#allocation5 + $0x144] sm:$0xf]
    %v3426 = vld [vmem:[#allocation5 + $0x148] sm:$0xf]
    %v3427 = vld [vmem:[#allocation5 + $0x14c] sm:$0xf]
    %v3428 = vld [vmem:[#allocation5 + $0x150] sm:$0xf]
    %v3429 = vld [vmem:[#allocation5 + $0x154] sm:$0xf]
    %v3430 = vpack.c.bf16 %v3396, %v3396
    %v3431 = vpack.c.bf16 %v3397, %v3397
    %v3432 = vld [vmem:[#allocation2 + $0x66] ss:$0 sm:$0xff]
    %v3465 = vunpack.c.l.b16 %v3398
    %v3466 = vunpack.c.l.b16 %v3399
    %v3467 = vunpack.c.l.b16 %v3400
    %v3468 = vunpack.c.l.b16 %v3401
    %v3469 = vunpack.c.l.b16 %v3402
    %v3470 = vunpack.c.l.b16 %v3403
    %v3471 = vunpack.c.l.b16 %v3404
    %v3472 = vunpack.c.l.b16 %v3405
    %v3473 = vunpack.c.l.b16 %v3406
    %v3474 = vunpack.c.l.b16 %v3407
    %v3475 = vunpack.c.l.b16 %v3408
    %v3476 = vunpack.c.l.b16 %v3409
    %v3477 = vunpack.c.l.b16 %v3410
    %v3478 = vunpack.c.l.b16 %v3411
    %v3479 = vunpack.c.l.b16 %v3412
    %v3480 = vunpack.c.l.b16 %v3413
    %v3481 = vunpack.c.l.b16 %v3414
    %v3482 = vunpack.c.l.b16 %v3415
    %v3483 = vunpack.c.l.b16 %v3416
    %v3484 = vunpack.c.l.b16 %v3417
    %v3485 = vunpack.c.l.b16 %v3418
    %v3486 = vunpack.c.l.b16 %v3419
    %v3487 = vunpack.c.l.b16 %v3420
    %v3488 = vunpack.c.l.b16 %v3421
    %v3489 = vunpack.c.l.b16 %v3422
    %v3490 = vunpack.c.l.b16 %v3423
    %v3491 = vunpack.c.l.b16 %v3424
    %v3492 = vunpack.c.l.b16 %v3425
    %v3493 = vunpack.c.l.b16 %v3426
    %v3494 = vunpack.c.l.b16 %v3427
    %v3495 = vunpack.c.l.b16 %v3428
    %v3496 = vunpack.c.l.b16 %v3429
    %v3497 = vpack.c.b16 %v3466, %v3465
    %v3498 = vpack.c.b16 %v3468, %v3467
    %v3499 = vpack.c.b16 %v3470, %v3469
    %v3500 = vpack.c.b16 %v3472, %v3471
    %v3501 = vpack.c.b16 %v3474, %v3473
    %v3502 = vpack.c.b16 %v3476, %v3475
    %v3503 = vpack.c.b16 %v3478, %v3477
    %v3504 = vpack.c.b16 %v3480, %v3479
    %v3505 = vpack.c.b16 %v3482, %v3481
    %v3506 = vpack.c.b16 %v3484, %v3483
    %v3507 = vpack.c.b16 %v3486, %v3485
    %v3508 = vpack.c.b16 %v3488, %v3487
    %v3509 = vpack.c.b16 %v3490, %v3489
    %v3510 = vpack.c.b16 %v3492, %v3491
    %v3511 = vpack.c.b16 %v3494, %v3493
    %v3512 = vpack.c.b16 %v3496, %v3495
    %3529 = vmatprep.subr.bf16.mxu0 0
    %3530 = vmatpush1.bf16.msra.mxu0 %v3504
    %3531 = vmatprep.subr.bf16.mxu0 0
    %3532 = vmatpush1.bf16.msra.mxu0 %v3503
    %3533 = vmatprep.subr.bf16.mxu0 0
    %3534 = vmatpush1.bf16.msra.mxu0 %v3502
    %3535 = vmatprep.subr.bf16.mxu0 0
    %3536 = vmatpush1.bf16.msra.mxu0 %v3501
    %3537 = vmatprep.subr.bf16.mxu0 0
    %3538 = vmatpush1.bf16.msra.mxu0 %v3500
    %3539 = vmatprep.subr.bf16.mxu0 0
    %3540 = vmatpush1.bf16.msra.mxu0 %v3499
    %3541 = vmatprep.subr.bf16.mxu0 0
    %3542 = vmatpush1.bf16.msra.mxu0 %v3498
    %3543 = vmatprep.subr.bf16.mxu0 0
    %3544 = vmatpush1.bf16.msra.mxu0 %v3497
    %3545 = vmatprep.subr.bf16.mxu0 0
    %3546 = vmatpush2.bf16.msra.mxu0 %v3512
    %3547 = vmatprep.subr.bf16.mxu0 0
    %3548 = vmatpush2.bf16.msra.mxu0 %v3511
    %3549 = vmatprep.subr.bf16.mxu0 0
    %3550 = vmatpush2.bf16.msra.mxu0 %v3510
    %3551 = vmatprep.subr.bf16.mxu0 0
    %3552 = vmatpush2.bf16.msra.mxu0 %v3509
    %3553 = vmatprep.subr.bf16.mxu0 0
    %3554 = vmatpush2.bf16.msra.mxu0 %v3508
    %3555 = vmatprep.subr.bf16.mxu0 0
    %3556 = vmatpush2.bf16.msra.mxu0 %v3507
    %3557 = vmatprep.subr.bf16.mxu0 0
    %3558 = vmatpush2.bf16.msra.mxu0 %v3506
    %3559 = vmatprep.subr.bf16.mxu0 0
    %3560 = vmatpush2.bf16.msra.mxu0 %v3505
    %3561 = vmatprep.mubr.bf16.mxu0 %v3431
    %3562 = vmatmul.mubr.bf16.gmra.mxu0 %v3430
    %v3563 = vpop.f32.mrf.mxu0
    %v3564 = vadd.f32 %v3432, %v3563
    %v3565 = vpop.f32.mrf.mxu0
    %v3566 = vpop.f32.mrf.mxu0
    %v3567 = vpop.f32.mrf.mxu0
    %3568 = vdwg.mxu0
    %v3569 = vxor.u32 %v3564, 2147483648
    %v3570 = vmul.f32 %v3569, 1.442695
    %v3571 = vpow.pop %v3570
    %v3572 = vadd.f32 %v3571, 1.0
    %v3573 = vrcp.pop %v3572
    %v3574 = vmul.f32 1.0, %v3573
    %vm3575 = vcmask 58368
    %3576 = vst.msk [vmem:[#allocation8] sm:$0x3] %vm3575, %v3574
    // Predicated region
    $region34: #{model_forward.1} parent=1 // pred_check
      _
    $region35: #{model_forward.1} parent=1 // pred_check_branch
      %3578 = sbr.rel (0) target = $region37
    $region36: #{model_forward.1} parent=1 // pred_region
      %s3580 = ssub.s32 32, 32
      %3581 = vsyncadd [#allocation4], %s3580
      %s3583 = sshll.u32 [#allocation8], 4
      %s3584 = int_to_ptr.vmem [resolvable:$true] %s3583
      %3586 = dma.vmem_to_hbm [thread:$0]  %s3584, 32, %s5, [#allocation4]
    $region37: #{model_forward.1} parent=1 // pred_fallthru
      _
    // Predicated region
    $region38: #{model_forward.1} parent=1 // pred_check
      _
    $region39: #{model_forward.1} parent=1 // pred_check_branch
      %3588 = sbr.rel (0) target = $region41
    $region40: #{model_forward.1} parent=1 // pred_region
      %3589 = dma.done [#allocation4], 32
    $region41: #{model_forward.1} parent=1 // pred_fallthru
      _
    %3590 = vsyncpa [#allocation3], 1
    %3591 = vsyncpa [#allocation6], 1
    %3592 = vsyncpa [#allocation4], 1

</llo_original>
